<compile_context>
chip_gen: v5e
topology: v5e:2x2
jax: 0.10.0
libtpu: 0.0.40
codegen_flags: <defaults>
</compile_context>

<pallas_src>
import functools
import math

import jax
import jax.numpy as jnp
import numpy as np
from jax.experimental import pallas as pl
from jax.experimental.pallas import tpu as pltpu

BF16 = jnp.bfloat16
LN_EPS = 1e-5
NEG = -1e9


# ------------------------------ in-kernel helpers ----------------------------
def _ln(x, g, b):
    mu = jnp.mean(x, axis=-1, keepdims=True)
    var = jnp.mean((x - mu) ** 2, axis=-1, keepdims=True)
    return (x - mu) * jax.lax.rsqrt(var + LN_EPS) * g + b


# ------------------------------ fused forward kernel -------------------------
def _fused_kernel(doc_ids_ref, sum_ids_ref, sbias_ref, cbias_ref,
                  enc_word_ref, enc_pt_ref, dec_word_ref, dec_pt_ref,
                  cs_ref, ss_ref, cd_ref, sd_ref,
                  enc_w1_ref, enc_w2_ref,
                  sa_wq_ref, sa_wk_ref, sa_wv_ref, sa_wo_ref,
                  ca_wq_ref, ca_wk_ref, ca_wv_ref, ca_wo_ref,
                  dec_w1_ref, dec_w2_ref,
                  vecd_ref, vecf_ref, w_out_ref, b_out_ref,
                  o_ref, *, n_head):
    D = cd_ref.shape[0]
    Md = enc_pt_ref.shape[0]          # B * doc_len
    Ms = dec_pt_ref.shape[0]          # B * sum_len
    src_vs = enc_word_ref.shape[0]
    tgt_vs = dec_word_ref.shape[0]
    n_layers = enc_w1_ref.shape[0]
    dh = D // n_head
    scale = 1.0 / math.sqrt(dh)

    # sequential consumers of the packed bias / LayerNorm vectors (trace-time ptrs)
    dptr, fptr = [0], [0]

    def drow():
        r = vecd_ref[dptr[0]:dptr[0] + 1, :]
        dptr[0] += 1
        return r

    def frow():
        r = vecf_ref[fptr[0]:fptr[0] + 1, :]
        fptr[0] += 1
        return r

    # per-head lane masks, hoisted (loop invariant)
    lane = jax.lax.broadcasted_iota(jnp.int32, (1, D), 1)
    head_mask = [(lane >= h * dh) & (lane < (h + 1) * dh) for h in range(n_head)]

    def mha(q, k, v, bias_stack):
        # q (Mq, D); k, v (Mk, D); bias_stack (n_head*Mq, Mk) already contains
        # causal / key-padding / cross-batch -1e9 terms (same bias per head block).
        Mq = q.shape[0]
        kb = k.astype(BF16)
        q_stack = jnp.concatenate(
            [jnp.where(head_mask[h], q, 0.0) for h in range(n_head)],
            axis=0).astype(BF16)                                     # (nh*Mq, D)
        s = jax.lax.dot_general(q_stack, kb, (((1,), (1,)), ((), ())),
                                preferred_element_type=jnp.float32)  # (nh*Mq, Mk)
        s = s * scale + bias_stack
        e = jnp.exp(s - jnp.max(s, axis=-1, keepdims=True))
        p = e * pl.reciprocal(jnp.sum(e, axis=-1, keepdims=True), approx=True)
        pv = jnp.dot(p.astype(BF16), v.astype(BF16),
                     preferred_element_type=jnp.float32)             # (nh*Mq, D)
        out = jnp.zeros((Mq, D), jnp.float32)
        for h in range(n_head):
            out = out + jnp.where(head_mask[h], pv[h * Mq:(h + 1) * Mq, :], 0.0)
        return out

    # ---------------- encoder embedding (+LN); in-kernel gather via one-hot ----
    # TODO(synk): TripleEmbeddingBlock source was not provided; implemented as
    # word + learned-position + token-type embeddings followed by LayerNorm.
    doc = doc_ids_ref[...]                                            # (Md, 1) i32
    onehot_d = (jax.lax.broadcasted_iota(jnp.int32, (Md, src_vs), 1)
                == doc).astype(jnp.float32)
    x = jnp.dot(onehot_d, enc_word_ref[...], preferred_element_type=jnp.float32)
    x = x + enc_pt_ref[...]
    x = _ln(x, drow(), drow())

    # ---------------- FNet encoder layers -------------------------------------
    # TODO(synk): FnetEncoderLayer source was not provided; implemented as the FNet
    # paper layer: Re(2D DFT) token mixing -> add&norm -> GELU MLP -> add&norm.
    cs = cs_ref[...]
    ssm = ss_ref[...]
    cdm = cd_ref[...]
    sdm = sd_ref[...]
    for l in range(n_layers):
        xb = x.astype(BF16)
        xcd = jnp.dot(xb, cdm, preferred_element_type=jnp.float32)
        xsd = jnp.dot(xb, sdm, preferred_element_type=jnp.float32)
        mixed = (jnp.dot(cs, xcd.astype(BF16), preferred_element_type=jnp.float32)
                 - jnp.dot(ssm, xsd.astype(BF16), preferred_element_type=jnp.float32))
        h = _ln(x + mixed, drow(), drow())
        f = jnp.dot(h.astype(BF16), enc_w1_ref[l],
                    preferred_element_type=jnp.float32) + frow()
        f = jax.nn.gelu(f)
        f = jnp.dot(f.astype(BF16), enc_w2_ref[l],
                    preferred_element_type=jnp.float32) + drow()
        x = _ln(h + f, drow(), drow())
    mem = x
    memb = mem.astype(BF16)

    # ---------------- decoder embedding (+LN) ----------------------------------
    sids = sum_ids_ref[...]                                           # (Ms, 1) i32
    onehot_s = (jax.lax.broadcasted_iota(jnp.int32, (Ms, tgt_vs), 1)
                == sids).astype(jnp.float32)
    y = jnp.dot(onehot_s, dec_word_ref[...], preferred_element_type=jnp.float32)
    y = y + dec_pt_ref[...]
    y = _ln(y, drow(), drow())

    # head-tiled biases (identical for every layer) hoisted out of the layer loop
    sbias = jnp.concatenate([sbias_ref[...]] * n_head, axis=0)        # (nh*Ms, Ms)
    cbias = jnp.concatenate([cbias_ref[...]] * n_head, axis=0)        # (nh*Ms, Md)

    # ---------------- transformer decoder layers (post-norm, ReLU FF) ----------
    for l in range(n_layers):
        # self attention
        yb = y.astype(BF16)
        q = jnp.dot(yb, sa_wq_ref[l], preferred_element_type=jnp.float32) + drow()
        k = jnp.dot(yb, sa_wk_ref[l], preferred_element_type=jnp.float32) + drow()
        v = jnp.dot(yb, sa_wv_ref[l], preferred_element_type=jnp.float32) + drow()
        sa = mha(q, k, v, sbias)
        sa = jnp.dot(sa.astype(BF16), sa_wo_ref[l],
                     preferred_element_type=jnp.float32) + drow()
        y = _ln(y + sa, drow(), drow())

        # cross attention against the encoder memory
        yb = y.astype(BF16)
        q2 = jnp.dot(yb, ca_wq_ref[l], preferred_element_type=jnp.float32) + drow()
        k2 = jnp.dot(memb, ca_wk_ref[l], preferred_element_type=jnp.float32) + drow()
        v2 = jnp.dot(memb, ca_wv_ref[l], preferred_element_type=jnp.float32) + drow()
        ca = mha(q2, k2, v2, cbias)
        ca = jnp.dot(ca.astype(BF16), ca_wo_ref[l],
                     preferred_element_type=jnp.float32) + drow()
        y = _ln(y + ca, drow(), drow())

        # feed forward (ReLU, matches nn.TransformerDecoderLayer default)
        f = jnp.dot(y.astype(BF16), dec_w1_ref[l],
                    preferred_element_type=jnp.float32) + frow()
        f = jnp.maximum(f, 0.0)
        f = jnp.dot(f.astype(BF16), dec_w2_ref[l],
                    preferred_element_type=jnp.float32) + drow()
        y = _ln(y + f, drow(), drow())

    # all packed vectors must have been consumed exactly once (trace-time check)
    assert dptr[0] == vecd_ref.shape[0]
    assert fptr[0] == vecf_ref.shape[0]

    # ---------------- output projection (lane-dense, 128-padded N) -------------
    o_ref[...] = (jnp.dot(y.astype(BF16), w_out_ref[...],
                          preferred_element_type=jnp.float32) + b_out_ref[...])


# ------------------------------- forward wrapper ------------------------------
def fnet_forward(packed, doc_tokens, sum_tokens, *, n_head, src_pad, tgt_pad, tgt_vs):
    B, Sd = doc_tokens.shape
    Ss = sum_tokens.shape[-1]
    Md, Ms = B * Sd, B * Ss
    NOUT = packed["w_out"].shape[1]

    # masks -- reproduces the reference exactly, including its swapped pad-index usage.
    mem_pad = (doc_tokens == tgt_pad).reshape(-1)        # (Md,) memory key padding
    tgt_pad_m = (sum_tokens == src_pad).reshape(-1)      # (Ms,) tgt key padding

    neg = jnp.float32(NEG)
    row_b = jnp.repeat(jnp.arange(B, dtype=jnp.int32), Ss)
    col_b_d = jnp.repeat(jnp.arange(B, dtype=jnp.int32), Sd)
    causal = jnp.triu(jnp.ones((Ss, Ss), dtype=bool), k=1)
    self_mask = ((row_b[:, None] != row_b[None, :])
                 | jnp.tile(causal, (B, B))
                 | tgt_pad_m[None, :])
    cross_mask = (row_b[:, None] != col_b_d[None, :]) | mem_pad[None, :]
    self_bias = jnp.where(self_mask, neg, 0.0).astype(jnp.float32)    # (Ms, Ms)
    cross_bias = jnp.where(cross_mask, neg, 0.0).astype(jnp.float32)  # (Ms, Md)

    doc_ids = doc_tokens.reshape(Md, 1).astype(jnp.int32)
    sum_ids = sum_tokens.reshape(Ms, 1).astype(jnp.int32)

    operands = [doc_ids, sum_ids, self_bias, cross_bias,
                packed["enc_word"], packed["enc_pt"], packed["dec_word"], packed["dec_pt"],
                packed["cs"], packed["ss"], packed["cd"], packed["sd"],
                packed["enc_w1"], packed["enc_w2"],
                packed["sa_wq"], packed["sa_wk"], packed["sa_wv"], packed["sa_wo"],
                packed["ca_wq"], packed["ca_wk"], packed["ca_wv"], packed["ca_wo"],
                packed["dec_w1"], packed["dec_w2"],
                packed["vecD"], packed["vecF"], packed["w_out"], packed["b_out"]]

    def full(shape):
        n = len(shape)
        return pl.BlockSpec(tuple(shape), lambda i, _n=n: (0,) * _n)

    logits_pad = pl.pallas_call(
        functools.partial(_fused_kernel, n_head=n_head),
        out_shape=jax.ShapeDtypeStruct((Ms, NOUT), jnp.float32),
        grid=(1,),
        in_specs=[full(op.shape) for op in operands],
        out_specs=full((Ms, NOUT)),
        compiler_params=pltpu.CompilerParams(dimension_semantics=("arbitrary",)),
    )(*operands)

    return logits_pad[:, :tgt_vs].reshape(B, Ss, tgt_vs)


# ------------------------------- parameter handling ---------------------------
def _dft_cos_sin(n):
    idx = np.arange(n)
    ang = 2.0 * np.pi * np.outer(idx, idx) / n
    return np.cos(ang).astype(np.float32), np.sin(ang).astype(np.float32)


def init_params(key, *, model_dim, dim_ff, num_layers, src_vs, tgt_vs,
                src_pad, tgt_pad, max_len):
    keys = iter(jax.random.split(key, 512))

    def glorot(shape):
        lim = math.sqrt(6.0 / (shape[0] + shape[1]))
        return jax.random.uniform(next(keys), shape, jnp.float32, -lim, lim)

    ones = lambda: jnp.ones((model_dim,), jnp.float32)
    zeros = lambda n=model_dim: jnp.zeros((n,), jnp.float32)

    def emb_block(vs, pad):
        word = glorot((vs, model_dim)).at[pad].set(0.0)
        return dict(word=word, pos=glorot((max_len, model_dim)),
                    type=glorot((2, model_dim)), ln_g=ones(), ln_b=zeros())

    def attn_block():
        return dict(wq=glorot((model_dim, model_dim)), bq=zeros(),
                    wk=glorot((model_dim, model_dim)), bk=zeros(),
                    wv=glorot((model_dim, model_dim)), bv=zeros(),
                    wo=glorot((model_dim, model_dim)), bo=zeros())

    enc_layers = [dict(w1=glorot((model_dim, dim_ff)), b1=zeros(dim_ff),
                       w2=glorot((dim_ff, model_dim)), b2=zeros(),
                       ln1_g=ones(), ln1_b=zeros(), ln2_g=ones(), ln2_b=zeros())
                  for _ in range(num_layers)]
    dec_layers = [dict(self_attn=attn_block(), cross_attn=attn_block(),
                       w1=glorot((model_dim, dim_ff)), b1=zeros(dim_ff),
                       w2=glorot((dim_ff, model_dim)), b2=zeros(),
                       ln1_g=ones(), ln1_b=zeros(), ln2_g=ones(), ln2_b=zeros(),
                       ln3_g=ones(), ln3_b=zeros())
                  for _ in range(num_layers)]

    # lane-dense padded output projection (pad tgt_vs up to a multiple of 128)
    n_pad = ((tgt_vs + 127) // 128) * 128
    w_out = glorot((model_dim, tgt_vs))
    w_out_pad = jnp.zeros((model_dim, n_pad), jnp.float32).at[:, :tgt_vs].set(w_out)
    b_out_pad = jnp.zeros((1, n_pad), jnp.float32)

    return dict(enc_emb=emb_block(src_vs, src_pad), dec_emb=emb_block(tgt_vs, tgt_pad),
                enc_layers=enc_layers, dec_layers=dec_layers,
                w_out_pad=w_out_pad, b_out_pad=b_out_pad)


def pack_params(params, *, B, doc_len, sum_len):
    """Packs params into the fused-kernel operand layout (done once, outside jit)."""
    ee, de = params["enc_emb"], params["dec_emb"]
    D = ee["word"].shape[1]

    # (·, D) and (·, F) vectors, in the exact consumption order of the kernel.
    vecD, vecF = [], []
    vecD += [ee["ln_g"], ee["ln_b"]]
    for lp in params["enc_layers"]:
        vecD += [lp["ln1_g"], lp["ln1_b"], lp["b2"], lp["ln2_g"], lp["ln2_b"]]
        vecF += [lp["b1"]]
    vecD += [de["ln_g"], de["ln_b"]]
    for lp in params["dec_layers"]:
        sa, ca = lp["self_attn"], lp["cross_attn"]
        vecD += [sa["bq"], sa["bk"], sa["bv"], sa["bo"],
                 lp["ln1_g"], lp["ln1_b"],
                 ca["bq"], ca["bk"], ca["bv"], ca["bo"],
                 lp["ln2_g"], lp["ln2_b"],
                 lp["b2"], lp["ln3_g"], lp["ln3_b"]]
        vecF += [lp["b1"]]

    stack_bf16 = lambda ts: jnp.stack(ts).astype(BF16)

    cs, ss = _dft_cos_sin(doc_len)
    cd, sd = _dft_cos_sin(D)
    eye = np.eye(B, dtype=np.float32)     # block-diagonal over batch for seq mixing

    return dict(
        enc_word=ee["word"].astype(jnp.float32),
        enc_pt=jnp.tile(ee["pos"][:doc_len] + ee["type"][0][None, :], (B, 1)),
        dec_word=de["word"].astype(jnp.float32),
        dec_pt=jnp.tile(de["pos"][:sum_len] + de["type"][0][None, :], (B, 1)),
        cs=jnp.asarray(np.kron(eye, cs), dtype=BF16),
        ss=jnp.asarray(np.kron(eye, ss), dtype=BF16),
        cd=jnp.asarray(cd, dtype=BF16),
        sd=jnp.asarray(sd, dtype=BF16),
        enc_w1=stack_bf16([lp["w1"] for lp in params["enc_layers"]]),
        enc_w2=stack_bf16([lp["w2"] for lp in params["enc_layers"]]),
        sa_wq=stack_bf16([lp["self_attn"]["wq"] for lp in params["dec_layers"]]),
        sa_wk=stack_bf16([lp["self_attn"]["wk"] for lp in params["dec_layers"]]),
        sa_wv=stack_bf16([lp["self_attn"]["wv"] for lp in params["dec_layers"]]),
        sa_wo=stack_bf16([lp["self_attn"]["wo"] for lp in params["dec_layers"]]),
        ca_wq=stack_bf16([lp["cross_attn"]["wq"] for lp in params["dec_layers"]]),
        ca_wk=stack_bf16([lp["cross_attn"]["wk"] for lp in params["dec_layers"]]),
        ca_wv=stack_bf16([lp["cross_attn"]["wv"] for lp in params["dec_layers"]]),
        ca_wo=stack_bf16([lp["cross_attn"]["wo"] for lp in params["dec_layers"]]),
        dec_w1=stack_bf16([lp["w1"] for lp in params["dec_layers"]]),
        dec_w2=stack_bf16([lp["w2"] for lp in params["dec_layers"]]),
        vecD=jnp.stack(vecD).astype(jnp.float32),
        vecF=jnp.stack(vecF).astype(jnp.float32),
        w_out=params["w_out_pad"].astype(BF16),
        b_out=params["b_out_pad"].astype(jnp.float32),
    )


# ------------------------------------ main -------------------------------------
if __name__ == "__main__":
    model_dim, n_head, dim_ff, num_layers = 32, 4, 64, 2
    src_vs, tgt_vs = 50, 40
    src_pad = tgt_pad = 0
    B, doc_len, sum_len, max_len = 2, 16, 8, 64

    key = jax.random.PRNGKey(0)
    pkey, dkey, skey = jax.random.split(key, 3)
    params = init_params(pkey, model_dim=model_dim, dim_ff=dim_ff, num_layers=num_layers,
                         src_vs=src_vs, tgt_vs=tgt_vs, src_pad=src_pad, tgt_pad=tgt_pad,
                         max_len=max_len)
    packed = pack_params(params, B=B, doc_len=doc_len, sum_len=sum_len)

    doc_tokens = jax.random.randint(dkey, (B, doc_len), 1, src_vs, dtype=jnp.int32)
    sum_tokens = jax.random.randint(skey, (B, sum_len), 1, tgt_vs, dtype=jnp.int32)
    # trailing padding to exercise the key-padding masks
    doc_tokens = doc_tokens.at[:, -3:].set(src_pad)
    sum_tokens = sum_tokens.at[:, -2:].set(tgt_pad)

    fwd = jax.jit(functools.partial(fnet_forward, n_head=n_head, src_pad=src_pad,
                                    tgt_pad=tgt_pad, tgt_vs=tgt_vs))
    logits = jax.block_until_ready(fwd(packed, doc_tokens, sum_tokens))
    assert logits.shape == (B, sum_len, tgt_vs)
    assert bool(jnp.all(jnp.isfinite(logits)))
    print("KERNEL_OK")
</pallas_src>

<mosaic_0001>
module attributes {stable_mosaic.version = 11 : i64} {
  func.func @_fused_kernel(%arg0: i32, %arg1: memref<32x1xi32, #tpu.memory_space<vmem>>, %arg2: memref<16x1xi32, #tpu.memory_space<vmem>>, %arg3: memref<16x16xf32, #tpu.memory_space<vmem>>, %arg4: memref<16x32xf32, #tpu.memory_space<vmem>>, %arg5: memref<50x32xf32, #tpu.memory_space<vmem>>, %arg6: memref<32x32xf32, #tpu.memory_space<vmem>>, %arg7: memref<40x32xf32, #tpu.memory_space<vmem>>, %arg8: memref<16x32xf32, #tpu.memory_space<vmem>>, %arg9: memref<32x32xbf16, #tpu.memory_space<vmem>>, %arg10: memref<32x32xbf16, #tpu.memory_space<vmem>>, %arg11: memref<32x32xbf16, #tpu.memory_space<vmem>>, %arg12: memref<32x32xbf16, #tpu.memory_space<vmem>>, %arg13: memref<2x32x64xbf16, #tpu.memory_space<vmem>>, %arg14: memref<2x64x32xbf16, #tpu.memory_space<vmem>>, %arg15: memref<2x32x32xbf16, #tpu.memory_space<vmem>>, %arg16: memref<2x32x32xbf16, #tpu.memory_space<vmem>>, %arg17: memref<2x32x32xbf16, #tpu.memory_space<vmem>>, %arg18: memref<2x32x32xbf16, #tpu.memory_space<vmem>>, %arg19: memref<2x32x32xbf16, #tpu.memory_space<vmem>>, %arg20: memref<2x32x32xbf16, #tpu.memory_space<vmem>>, %arg21: memref<2x32x32xbf16, #tpu.memory_space<vmem>>, %arg22: memref<2x32x32xbf16, #tpu.memory_space<vmem>>, %arg23: memref<2x32x64xbf16, #tpu.memory_space<vmem>>, %arg24: memref<2x64x32xbf16, #tpu.memory_space<vmem>>, %arg25: memref<44x32xf32, #tpu.memory_space<vmem>>, %arg26: memref<4x64xf32, #tpu.memory_space<vmem>>, %arg27: memref<32x128xbf16, #tpu.memory_space<vmem>>, %arg28: memref<1x128xf32, #tpu.memory_space<vmem>>, %arg29: memref<16x128xf32, #tpu.memory_space<vmem>>) attributes {dimension_semantics = [#tpu.dimension_semantics<arbitrary>], iteration_bounds = array<i64: 1>, scalar_prefetch = 0 : i64, scratch_operands = 0 : i64, tpu.core_type = #tpu.core_type<tc>, window_params = [{pipeline_mode = #tpu.pipeline_mode<synchronous>, transform_indices = @transform_0, window_bounds = array<i64: 32, 1>}, {pipeline_mode = #tpu.pipeline_mode<synchronous>, transform_indices = @transform_1, window_bounds = array<i64: 16, 1>}, {pipeline_mode = #tpu.pipeline_mode<synchronous>, transform_indices = @transform_2, window_bounds = array<i64: 16, 16>}, {pipeline_mode = #tpu.pipeline_mode<synchronous>, transform_indices = @transform_3, window_bounds = array<i64: 16, 32>}, {pipeline_mode = #tpu.pipeline_mode<synchronous>, transform_indices = @transform_4, window_bounds = array<i64: 50, 32>}, {pipeline_mode = #tpu.pipeline_mode<synchronous>, transform_indices = @transform_5, window_bounds = array<i64: 32, 32>}, {pipeline_mode = #tpu.pipeline_mode<synchronous>, transform_indices = @transform_6, window_bounds = array<i64: 40, 32>}, {pipeline_mode = #tpu.pipeline_mode<synchronous>, transform_indices = @transform_7, window_bounds = array<i64: 16, 32>}, {pipeline_mode = #tpu.pipeline_mode<synchronous>, transform_indices = @transform_8, window_bounds = array<i64: 32, 32>}, {pipeline_mode = #tpu.pipeline_mode<synchronous>, transform_indices = @transform_9, window_bounds = array<i64: 32, 32>}, {pipeline_mode = #tpu.pipeline_mode<synchronous>, transform_indices = @transform_10, window_bounds = array<i64: 32, 32>}, {pipeline_mode = #tpu.pipeline_mode<synchronous>, transform_indices = @transform_11, window_bounds = array<i64: 32, 32>}, {pipeline_mode = #tpu.pipeline_mode<synchronous>, transform_indices = @transform_12, window_bounds = array<i64: 2, 32, 64>}, {pipeline_mode = #tpu.pipeline_mode<synchronous>, transform_indices = @transform_13, window_bounds = array<i64: 2, 64, 32>}, {pipeline_mode = #tpu.pipeline_mode<synchronous>, transform_indices = @transform_14, window_bounds = array<i64: 2, 32, 32>}, {pipeline_mode = #tpu.pipeline_mode<synchronous>, transform_indices = @transform_15, window_bounds = array<i64: 2, 32, 32>}, {pipeline_mode = #tpu.pipeline_mode<synchronous>, transform_indices = @transform_16, window_bounds = array<i64: 2, 32, 32>}, {pipeline_mode = #tpu.pipeline_mode<synchronous>, transform_indices = @transform_17, window_bounds = array<i64: 2, 32, 32>}, {pipeline_mode = #tpu.pipeline_mode<synchronous>, transform_indices = @transform_18, window_bounds = array<i64: 2, 32, 32>}, {pipeline_mode = #tpu.pipeline_mode<synchronous>, transform_indices = @transform_19, window_bounds = array<i64: 2, 32, 32>}, {pipeline_mode = #tpu.pipeline_mode<synchronous>, transform_indices = @transform_20, window_bounds = array<i64: 2, 32, 32>}, {pipeline_mode = #tpu.pipeline_mode<synchronous>, transform_indices = @transform_21, window_bounds = array<i64: 2, 32, 32>}, {pipeline_mode = #tpu.pipeline_mode<synchronous>, transform_indices = @transform_22, window_bounds = array<i64: 2, 32, 64>}, {pipeline_mode = #tpu.pipeline_mode<synchronous>, transform_indices = @transform_23, window_bounds = array<i64: 2, 64, 32>}, {pipeline_mode = #tpu.pipeline_mode<synchronous>, transform_indices = @transform_24, window_bounds = array<i64: 44, 32>}, {pipeline_mode = #tpu.pipeline_mode<synchronous>, transform_indices = @transform_25, window_bounds = array<i64: 4, 64>}, {pipeline_mode = #tpu.pipeline_mode<synchronous>, transform_indices = @transform_26, window_bounds = array<i64: 32, 128>}, {pipeline_mode = #tpu.pipeline_mode<synchronous>, transform_indices = @transform_27, window_bounds = array<i64: 1, 128>}, {pipeline_mode = #tpu.pipeline_mode<synchronous>, transform_indices = @transform_28, window_bounds = array<i64: 16, 128>}]} {
    %0 = tpu.iota {dimensions = array<i32: 1>} : vector<1x32xi32>
    %c0_i32 = arith.constant 0 : i32
    %1 = vector.broadcast %c0_i32 : i32 to vector<1x32xi32>
    %2 = arith.cmpi sge, %0, %1 : vector<1x32xi32>
    %c8_i32 = arith.constant 8 : i32
    %3 = vector.broadcast %c8_i32 : i32 to vector<1x32xi32>
    %4 = arith.cmpi slt, %0, %3 : vector<1x32xi32>
    %5 = arith.andi %2, %4 : vector<1x32xi1>
    %c8_i32_0 = arith.constant 8 : i32
    %6 = vector.broadcast %c8_i32_0 : i32 to vector<1x32xi32>
    %7 = arith.cmpi sge, %0, %6 : vector<1x32xi32>
    %c16_i32 = arith.constant 16 : i32
    %8 = vector.broadcast %c16_i32 : i32 to vector<1x32xi32>
    %9 = arith.cmpi slt, %0, %8 : vector<1x32xi32>
    %10 = arith.andi %7, %9 : vector<1x32xi1>
    %c16_i32_1 = arith.constant 16 : i32
    %11 = vector.broadcast %c16_i32_1 : i32 to vector<1x32xi32>
    %12 = arith.cmpi sge, %0, %11 : vector<1x32xi32>
    %c24_i32 = arith.constant 24 : i32
    %13 = vector.broadcast %c24_i32 : i32 to vector<1x32xi32>
    %14 = arith.cmpi slt, %0, %13 : vector<1x32xi32>
    %15 = arith.andi %12, %14 : vector<1x32xi1>
    %c24_i32_2 = arith.constant 24 : i32
    %16 = vector.broadcast %c24_i32_2 : i32 to vector<1x32xi32>
    %17 = arith.cmpi sge, %0, %16 : vector<1x32xi32>
    %c32_i32 = arith.constant 32 : i32
    %18 = vector.broadcast %c32_i32 : i32 to vector<1x32xi32>
    %19 = arith.cmpi slt, %0, %18 : vector<1x32xi32>
    %20 = arith.andi %17, %19 : vector<1x32xi1>
    %c0 = arith.constant 0 : index
    %c0_3 = arith.constant 0 : index
    %21 = vector.load %arg1[%c0, %c0_3] : memref<32x1xi32, #tpu.memory_space<vmem>>, vector<32x1xi32>
    %22 = tpu.iota {dimensions = array<i32: 1>} : vector<32x50xi32>
    %23 = vector.broadcast %21 : vector<32x1xi32> to vector<32x50xi32>
    %24 = arith.cmpi eq, %22, %23 : vector<32x50xi32>
    %25 = arith.extui %24 : vector<32x50xi1> to vector<32x50xi32>
    %26 = arith.sitofp %25 : vector<32x50xi32> to vector<32x50xf32>
    %c0_4 = arith.constant 0 : index
    %c0_5 = arith.constant 0 : index
    %27 = vector.load %arg5[%c0_4, %c0_5] : memref<50x32xf32, #tpu.memory_space<vmem>>, vector<50x32xf32>
    %cst = arith.constant dense<0.000000e+00> : vector<32x32xf32>
    %28 = tpu.matmul %26, %27, %cst {dimension_numbers = #tpu.dot_dimension_numbers<[1], [0], [0], [1], [0, 0, 1, 1], [], []>} : vector<32x50xf32>, vector<50x32xf32>, vector<32x32xf32> -> vector<32x32xf32>
    %c0_6 = arith.constant 0 : index
    %c0_7 = arith.constant 0 : index
    %29 = vector.load %arg6[%c0_6, %c0_7] : memref<32x32xf32, #tpu.memory_space<vmem>>, vector<32x32xf32>
    %30 = arith.addf %28, %29 : vector<32x32xf32>
    %c0_8 = arith.constant 0 : index
    %c0_9 = arith.constant 0 : index
    %31 = vector.load %arg25[%c0_8, %c0_9] : memref<44x32xf32, #tpu.memory_space<vmem>>, vector<1x32xf32>
    %c1 = arith.constant 1 : index
    %c0_10 = arith.constant 0 : index
    %32 = vector.load %arg25[%c1, %c0_10] : memref<44x32xf32, #tpu.memory_space<vmem>>, vector<1x32xf32>
    %cst_11 = arith.constant dense<0.000000e+00> : vector<32xf32>
    %33 = vector.multi_reduction <add>, %30, %cst_11 [1] : vector<32x32xf32> to vector<32xf32>
    %34 = vector.shape_cast %33 : vector<32xf32> to vector<32x1xf32>
    %cst_12 = arith.constant 3.200000e+01 : f32
    %35 = vector.broadcast %cst_12 : f32 to vector<32x1xf32>
    %36 = arith.divf %34, %35 : vector<32x1xf32>
    %37 = vector.broadcast %36 : vector<32x1xf32> to vector<32x32xf32>
    %38 = arith.subf %30, %37 : vector<32x32xf32>
    %39 = arith.mulf %38, %38 : vector<32x32xf32>
    %cst_13 = arith.constant dense<0.000000e+00> : vector<32xf32>
    %40 = vector.multi_reduction <add>, %39, %cst_13 [1] : vector<32x32xf32> to vector<32xf32>
    %41 = vector.shape_cast %40 : vector<32xf32> to vector<32x1xf32>
    %cst_14 = arith.constant 3.200000e+01 : f32
    %42 = vector.broadcast %cst_14 : f32 to vector<32x1xf32>
    %43 = arith.divf %41, %42 : vector<32x1xf32>
    %44 = vector.broadcast %36 : vector<32x1xf32> to vector<32x32xf32>
    %45 = arith.subf %30, %44 : vector<32x32xf32>
    %cst_15 = arith.constant 9.99999974E-6 : f32
    %46 = vector.broadcast %cst_15 : f32 to vector<32x1xf32>
    %47 = arith.addf %43, %46 : vector<32x1xf32>
    %48 = math.rsqrt %47 : vector<32x1xf32>
    %49 = vector.broadcast %48 : vector<32x1xf32> to vector<32x32xf32>
    %50 = arith.mulf %45, %49 : vector<32x32xf32>
    %51 = vector.broadcast %31 : vector<1x32xf32> to vector<32x32xf32>
    %52 = arith.mulf %50, %51 : vector<32x32xf32>
    %53 = vector.broadcast %32 : vector<1x32xf32> to vector<32x32xf32>
    %54 = arith.addf %52, %53 : vector<32x32xf32>
    %c0_16 = arith.constant 0 : index
    %c0_17 = arith.constant 0 : index
    %55 = vector.load %arg9[%c0_16, %c0_17] : memref<32x32xbf16, #tpu.memory_space<vmem>>, vector<32x32xbf16>
    %c0_18 = arith.constant 0 : index
    %c0_19 = arith.constant 0 : index
    %56 = vector.load %arg10[%c0_18, %c0_19] : memref<32x32xbf16, #tpu.memory_space<vmem>>, vector<32x32xbf16>
    %c0_20 = arith.constant 0 : index
    %c0_21 = arith.constant 0 : index
    %57 = vector.load %arg11[%c0_20, %c0_21] : memref<32x32xbf16, #tpu.memory_space<vmem>>, vector<32x32xbf16>
    %c0_22 = arith.constant 0 : index
    %c0_23 = arith.constant 0 : index
    %58 = vector.load %arg12[%c0_22, %c0_23] : memref<32x32xbf16, #tpu.memory_space<vmem>>, vector<32x32xbf16>
    %59 = arith.truncf %54 : vector<32x32xf32> to vector<32x32xbf16>
    %cst_24 = arith.constant dense<0.000000e+00> : vector<32x32xf32>
    %60 = tpu.matmul %59, %57, %cst_24 {dimension_numbers = #tpu.dot_dimension_numbers<[1], [0], [0], [1], [0, 0, 1, 1], [], []>} : vector<32x32xbf16>, vector<32x32xbf16>, vector<32x32xf32> -> vector<32x32xf32>
    %cst_25 = arith.constant dense<0.000000e+00> : vector<32x32xf32>
    %61 = tpu.matmul %59, %58, %cst_25 {dimension_numbers = #tpu.dot_dimension_numbers<[1], [0], [0], [1], [0, 0, 1, 1], [], []>} : vector<32x32xbf16>, vector<32x32xbf16>, vector<32x32xf32> -> vector<32x32xf32>
    %62 = arith.truncf %60 : vector<32x32xf32> to vector<32x32xbf16>
    %cst_26 = arith.constant dense<0.000000e+00> : vector<32x32xf32>
    %63 = tpu.matmul %55, %62, %cst_26 {dimension_numbers = #tpu.dot_dimension_numbers<[1], [0], [0], [1], [0, 0, 1, 1], [], []>} : vector<32x32xbf16>, vector<32x32xbf16>, vector<32x32xf32> -> vector<32x32xf32>
    %64 = arith.truncf %61 : vector<32x32xf32> to vector<32x32xbf16>
    %cst_27 = arith.constant dense<0.000000e+00> : vector<32x32xf32>
    %65 = tpu.matmul %56, %64, %cst_27 {dimension_numbers = #tpu.dot_dimension_numbers<[1], [0], [0], [1], [0, 0, 1, 1], [], []>} : vector<32x32xbf16>, vector<32x32xbf16>, vector<32x32xf32> -> vector<32x32xf32>
    %66 = arith.subf %63, %65 : vector<32x32xf32>
    %67 = arith.addf %54, %66 : vector<32x32xf32>
    %c2 = arith.constant 2 : index
    %c0_28 = arith.constant 0 : index
    %68 = vector.load %arg25[%c2, %c0_28] : memref<44x32xf32, #tpu.memory_space<vmem>>, vector<1x32xf32>
    %c3 = arith.constant 3 : index
    %c0_29 = arith.constant 0 : index
    %69 = vector.load %arg25[%c3, %c0_29] : memref<44x32xf32, #tpu.memory_space<vmem>>, vector<1x32xf32>
    %cst_30 = arith.constant dense<0.000000e+00> : vector<32xf32>
    %70 = vector.multi_reduction <add>, %67, %cst_30 [1] : vector<32x32xf32> to vector<32xf32>
    %71 = vector.shape_cast %70 : vector<32xf32> to vector<32x1xf32>
    %cst_31 = arith.constant 3.200000e+01 : f32
    %72 = vector.broadcast %cst_31 : f32 to vector<32x1xf32>
    %73 = arith.divf %71, %72 : vector<32x1xf32>
    %74 = vector.broadcast %73 : vector<32x1xf32> to vector<32x32xf32>
    %75 = arith.subf %67, %74 : vector<32x32xf32>
    %76 = arith.mulf %75, %75 : vector<32x32xf32>
    %cst_32 = arith.constant dense<0.000000e+00> : vector<32xf32>
    %77 = vector.multi_reduction <add>, %76, %cst_32 [1] : vector<32x32xf32> to vector<32xf32>
    %78 = vector.shape_cast %77 : vector<32xf32> to vector<32x1xf32>
    %cst_33 = arith.constant 3.200000e+01 : f32
    %79 = vector.broadcast %cst_33 : f32 to vector<32x1xf32>
    %80 = arith.divf %78, %79 : vector<32x1xf32>
    %81 = vector.broadcast %73 : vector<32x1xf32> to vector<32x32xf32>
    %82 = arith.subf %67, %81 : vector<32x32xf32>
    %cst_34 = arith.constant 9.99999974E-6 : f32
    %83 = vector.broadcast %cst_34 : f32 to vector<32x1xf32>
    %84 = arith.addf %80, %83 : vector<32x1xf32>
    %85 = math.rsqrt %84 : vector<32x1xf32>
    %86 = vector.broadcast %85 : vector<32x1xf32> to vector<32x32xf32>
    %87 = arith.mulf %82, %86 : vector<32x32xf32>
    %88 = vector.broadcast %68 : vector<1x32xf32> to vector<32x32xf32>
    %89 = arith.mulf %87, %88 : vector<32x32xf32>
    %90 = vector.broadcast %69 : vector<1x32xf32> to vector<32x32xf32>
    %91 = arith.addf %89, %90 : vector<32x32xf32>
    %92 = arith.truncf %91 : vector<32x32xf32> to vector<32x32xbf16>
    %c0_35 = arith.constant 0 : index
    %c0_36 = arith.constant 0 : index
    %c0_37 = arith.constant 0 : index
    %93 = vector.load %arg13[%c0_35, %c0_36, %c0_37] : memref<2x32x64xbf16, #tpu.memory_space<vmem>>, vector<1x32x64xbf16>
    %94 = vector.shape_cast %93 : vector<1x32x64xbf16> to vector<32x64xbf16>
    %cst_38 = arith.constant dense<0.000000e+00> : vector<32x64xf32>
    %95 = tpu.matmul %92, %94, %cst_38 {dimension_numbers = #tpu.dot_dimension_numbers<[1], [0], [0], [1], [0, 0, 1, 1], [], []>} : vector<32x32xbf16>, vector<32x64xbf16>, vector<32x64xf32> -> vector<32x64xf32>
    %c0_39 = arith.constant 0 : index
    %c0_40 = arith.constant 0 : index
    %96 = vector.load %arg26[%c0_39, %c0_40] : memref<4x64xf32, #tpu.memory_space<vmem>>, vector<1x64xf32>
    %97 = vector.broadcast %96 : vector<1x64xf32> to vector<32x64xf32>
    %98 = arith.addf %95, %97 : vector<32x64xf32>
    %99 = arith.mulf %98, %98 : vector<32x64xf32>
    %100 = arith.mulf %98, %99 : vector<32x64xf32>
    %cst_41 = arith.constant 4.471500e-02 : f32
    %101 = vector.broadcast %cst_41 : f32 to vector<32x64xf32>
    %102 = arith.mulf %101, %100 : vector<32x64xf32>
    %103 = arith.addf %98, %102 : vector<32x64xf32>
    %cst_42 = arith.constant 0.797884583 : f32
    %104 = vector.broadcast %cst_42 : f32 to vector<32x64xf32>
    %105 = arith.mulf %104, %103 : vector<32x64xf32>
    %106 = math.tanh %105 : vector<32x64xf32>
    %cst_43 = arith.constant 1.000000e+00 : f32
    %107 = vector.broadcast %cst_43 : f32 to vector<32x64xf32>
    %108 = arith.addf %107, %106 : vector<32x64xf32>
    %cst_44 = arith.constant 5.000000e-01 : f32
    %109 = vector.broadcast %cst_44 : f32 to vector<32x64xf32>
    %110 = arith.mulf %109, %108 : vector<32x64xf32>
    %111 = arith.mulf %98, %110 : vector<32x64xf32>
    %112 = arith.truncf %111 : vector<32x64xf32> to vector<32x64xbf16>
    %c0_45 = arith.constant 0 : index
    %c0_46 = arith.constant 0 : index
    %c0_47 = arith.constant 0 : index
    %113 = vector.load %arg14[%c0_45, %c0_46, %c0_47] : memref<2x64x32xbf16, #tpu.memory_space<vmem>>, vector<1x64x32xbf16>
    %114 = vector.shape_cast %113 : vector<1x64x32xbf16> to vector<64x32xbf16>
    %cst_48 = arith.constant dense<0.000000e+00> : vector<32x32xf32>
    %115 = tpu.matmul %112, %114, %cst_48 {dimension_numbers = #tpu.dot_dimension_numbers<[1], [0], [0], [1], [0, 0, 1, 1], [], []>} : vector<32x64xbf16>, vector<64x32xbf16>, vector<32x32xf32> -> vector<32x32xf32>
    %c4 = arith.constant 4 : index
    %c0_49 = arith.constant 0 : index
    %116 = vector.load %arg25[%c4, %c0_49] : memref<44x32xf32, #tpu.memory_space<vmem>>, vector<1x32xf32>
    %117 = vector.broadcast %116 : vector<1x32xf32> to vector<32x32xf32>
    %118 = arith.addf %115, %117 : vector<32x32xf32>
    %119 = arith.addf %91, %118 : vector<32x32xf32>
    %c5 = arith.constant 5 : index
    %c0_50 = arith.constant 0 : index
    %120 = vector.load %arg25[%c5, %c0_50] : memref<44x32xf32, #tpu.memory_space<vmem>>, vector<1x32xf32>
    %c6 = arith.constant 6 : index
    %c0_51 = arith.constant 0 : index
    %121 = vector.load %arg25[%c6, %c0_51] : memref<44x32xf32, #tpu.memory_space<vmem>>, vector<1x32xf32>
    %cst_52 = arith.constant dense<0.000000e+00> : vector<32xf32>
    %122 = vector.multi_reduction <add>, %119, %cst_52 [1] : vector<32x32xf32> to vector<32xf32>
    %123 = vector.shape_cast %122 : vector<32xf32> to vector<32x1xf32>
    %cst_53 = arith.constant 3.200000e+01 : f32
    %124 = vector.broadcast %cst_53 : f32 to vector<32x1xf32>
    %125 = arith.divf %123, %124 : vector<32x1xf32>
    %126 = vector.broadcast %125 : vector<32x1xf32> to vector<32x32xf32>
    %127 = arith.subf %119, %126 : vector<32x32xf32>
    %128 = arith.mulf %127, %127 : vector<32x32xf32>
    %cst_54 = arith.constant dense<0.000000e+00> : vector<32xf32>
    %129 = vector.multi_reduction <add>, %128, %cst_54 [1] : vector<32x32xf32> to vector<32xf32>
    %130 = vector.shape_cast %129 : vector<32xf32> to vector<32x1xf32>
    %cst_55 = arith.constant 3.200000e+01 : f32
    %131 = vector.broadcast %cst_55 : f32 to vector<32x1xf32>
    %132 = arith.divf %130, %131 : vector<32x1xf32>
    %133 = vector.broadcast %125 : vector<32x1xf32> to vector<32x32xf32>
    %134 = arith.subf %119, %133 : vector<32x32xf32>
    %cst_56 = arith.constant 9.99999974E-6 : f32
    %135 = vector.broadcast %cst_56 : f32 to vector<32x1xf32>
    %136 = arith.addf %132, %135 : vector<32x1xf32>
    %137 = math.rsqrt %136 : vector<32x1xf32>
    %138 = vector.broadcast %137 : vector<32x1xf32> to vector<32x32xf32>
    %139 = arith.mulf %134, %138 : vector<32x32xf32>
    %140 = vector.broadcast %120 : vector<1x32xf32> to vector<32x32xf32>
    %141 = arith.mulf %139, %140 : vector<32x32xf32>
    %142 = vector.broadcast %121 : vector<1x32xf32> to vector<32x32xf32>
    %143 = arith.addf %141, %142 : vector<32x32xf32>
    %144 = arith.truncf %143 : vector<32x32xf32> to vector<32x32xbf16>
    %cst_57 = arith.constant dense<0.000000e+00> : vector<32x32xf32>
    %145 = tpu.matmul %144, %57, %cst_57 {dimension_numbers = #tpu.dot_dimension_numbers<[1], [0], [0], [1], [0, 0, 1, 1], [], []>} : vector<32x32xbf16>, vector<32x32xbf16>, vector<32x32xf32> -> vector<32x32xf32>
    %cst_58 = arith.constant dense<0.000000e+00> : vector<32x32xf32>
    %146 = tpu.matmul %144, %58, %cst_58 {dimension_numbers = #tpu.dot_dimension_numbers<[1], [0], [0], [1], [0, 0, 1, 1], [], []>} : vector<32x32xbf16>, vector<32x32xbf16>, vector<32x32xf32> -> vector<32x32xf32>
    %147 = arith.truncf %145 : vector<32x32xf32> to vector<32x32xbf16>
    %cst_59 = arith.constant dense<0.000000e+00> : vector<32x32xf32>
    %148 = tpu.matmul %55, %147, %cst_59 {dimension_numbers = #tpu.dot_dimension_numbers<[1], [0], [0], [1], [0, 0, 1, 1], [], []>} : vector<32x32xbf16>, vector<32x32xbf16>, vector<32x32xf32> -> vector<32x32xf32>
    %149 = arith.truncf %146 : vector<32x32xf32> to vector<32x32xbf16>
    %cst_60 = arith.constant dense<0.000000e+00> : vector<32x32xf32>
    %150 = tpu.matmul %56, %149, %cst_60 {dimension_numbers = #tpu.dot_dimension_numbers<[1], [0], [0], [1], [0, 0, 1, 1], [], []>} : vector<32x32xbf16>, vector<32x32xbf16>, vector<32x32xf32> -> vector<32x32xf32>
    %151 = arith.subf %148, %150 : vector<32x32xf32>
    %152 = arith.addf %143, %151 : vector<32x32xf32>
    %c7 = arith.constant 7 : index
    %c0_61 = arith.constant 0 : index
    %153 = vector.load %arg25[%c7, %c0_61] : memref<44x32xf32, #tpu.memory_space<vmem>>, vector<1x32xf32>
    %c8 = arith.constant 8 : index
    %c0_62 = arith.constant 0 : index
    %154 = vector.load %arg25[%c8, %c0_62] : memref<44x32xf32, #tpu.memory_space<vmem>>, vector<1x32xf32>
    %cst_63 = arith.constant dense<0.000000e+00> : vector<32xf32>
    %155 = vector.multi_reduction <add>, %152, %cst_63 [1] : vector<32x32xf32> to vector<32xf32>
    %156 = vector.shape_cast %155 : vector<32xf32> to vector<32x1xf32>
    %cst_64 = arith.constant 3.200000e+01 : f32
    %157 = vector.broadcast %cst_64 : f32 to vector<32x1xf32>
    %158 = arith.divf %156, %157 : vector<32x1xf32>
    %159 = vector.broadcast %158 : vector<32x1xf32> to vector<32x32xf32>
    %160 = arith.subf %152, %159 : vector<32x32xf32>
    %161 = arith.mulf %160, %160 : vector<32x32xf32>
    %cst_65 = arith.constant dense<0.000000e+00> : vector<32xf32>
    %162 = vector.multi_reduction <add>, %161, %cst_65 [1] : vector<32x32xf32> to vector<32xf32>
    %163 = vector.shape_cast %162 : vector<32xf32> to vector<32x1xf32>
    %cst_66 = arith.constant 3.200000e+01 : f32
    %164 = vector.broadcast %cst_66 : f32 to vector<32x1xf32>
    %165 = arith.divf %163, %164 : vector<32x1xf32>
    %166 = vector.broadcast %158 : vector<32x1xf32> to vector<32x32xf32>
    %167 = arith.subf %152, %166 : vector<32x32xf32>
    %cst_67 = arith.constant 9.99999974E-6 : f32
    %168 = vector.broadcast %cst_67 : f32 to vector<32x1xf32>
    %169 = arith.addf %165, %168 : vector<32x1xf32>
    %170 = math.rsqrt %169 : vector<32x1xf32>
    %171 = vector.broadcast %170 : vector<32x1xf32> to vector<32x32xf32>
    %172 = arith.mulf %167, %171 : vector<32x32xf32>
    %173 = vector.broadcast %153 : vector<1x32xf32> to vector<32x32xf32>
    %174 = arith.mulf %172, %173 : vector<32x32xf32>
    %175 = vector.broadcast %154 : vector<1x32xf32> to vector<32x32xf32>
    %176 = arith.addf %174, %175 : vector<32x32xf32>
    %177 = arith.truncf %176 : vector<32x32xf32> to vector<32x32xbf16>
    %c1_68 = arith.constant 1 : index
    %c0_69 = arith.constant 0 : index
    %c0_70 = arith.constant 0 : index
    %178 = vector.load %arg13[%c1_68, %c0_69, %c0_70] : memref<2x32x64xbf16, #tpu.memory_space<vmem>>, vector<1x32x64xbf16>
    %179 = vector.shape_cast %178 : vector<1x32x64xbf16> to vector<32x64xbf16>
    %cst_71 = arith.constant dense<0.000000e+00> : vector<32x64xf32>
    %180 = tpu.matmul %177, %179, %cst_71 {dimension_numbers = #tpu.dot_dimension_numbers<[1], [0], [0], [1], [0, 0, 1, 1], [], []>} : vector<32x32xbf16>, vector<32x64xbf16>, vector<32x64xf32> -> vector<32x64xf32>
    %c1_72 = arith.constant 1 : index
    %c0_73 = arith.constant 0 : index
    %181 = vector.load %arg26[%c1_72, %c0_73] : memref<4x64xf32, #tpu.memory_space<vmem>>, vector<1x64xf32>
    %182 = vector.broadcast %181 : vector<1x64xf32> to vector<32x64xf32>
    %183 = arith.addf %180, %182 : vector<32x64xf32>
    %184 = arith.mulf %183, %183 : vector<32x64xf32>
    %185 = arith.mulf %183, %184 : vector<32x64xf32>
    %cst_74 = arith.constant 4.471500e-02 : f32
    %186 = vector.broadcast %cst_74 : f32 to vector<32x64xf32>
    %187 = arith.mulf %186, %185 : vector<32x64xf32>
    %188 = arith.addf %183, %187 : vector<32x64xf32>
    %cst_75 = arith.constant 0.797884583 : f32
    %189 = vector.broadcast %cst_75 : f32 to vector<32x64xf32>
    %190 = arith.mulf %189, %188 : vector<32x64xf32>
    %191 = math.tanh %190 : vector<32x64xf32>
    %cst_76 = arith.constant 1.000000e+00 : f32
    %192 = vector.broadcast %cst_76 : f32 to vector<32x64xf32>
    %193 = arith.addf %192, %191 : vector<32x64xf32>
    %cst_77 = arith.constant 5.000000e-01 : f32
    %194 = vector.broadcast %cst_77 : f32 to vector<32x64xf32>
    %195 = arith.mulf %194, %193 : vector<32x64xf32>
    %196 = arith.mulf %183, %195 : vector<32x64xf32>
    %197 = arith.truncf %196 : vector<32x64xf32> to vector<32x64xbf16>
    %c1_78 = arith.constant 1 : index
    %c0_79 = arith.constant 0 : index
    %c0_80 = arith.constant 0 : index
    %198 = vector.load %arg14[%c1_78, %c0_79, %c0_80] : memref<2x64x32xbf16, #tpu.memory_space<vmem>>, vector<1x64x32xbf16>
    %199 = vector.shape_cast %198 : vector<1x64x32xbf16> to vector<64x32xbf16>
    %cst_81 = arith.constant dense<0.000000e+00> : vector<32x32xf32>
    %200 = tpu.matmul %197, %199, %cst_81 {dimension_numbers = #tpu.dot_dimension_numbers<[1], [0], [0], [1], [0, 0, 1, 1], [], []>} : vector<32x64xbf16>, vector<64x32xbf16>, vector<32x32xf32> -> vector<32x32xf32>
    %c9 = arith.constant 9 : index
    %c0_82 = arith.constant 0 : index
    %201 = vector.load %arg25[%c9, %c0_82] : memref<44x32xf32, #tpu.memory_space<vmem>>, vector<1x32xf32>
    %202 = vector.broadcast %201 : vector<1x32xf32> to vector<32x32xf32>
    %203 = arith.addf %200, %202 : vector<32x32xf32>
    %204 = arith.addf %176, %203 : vector<32x32xf32>
    %c10 = arith.constant 10 : index
    %c0_83 = arith.constant 0 : index
    %205 = vector.load %arg25[%c10, %c0_83] : memref<44x32xf32, #tpu.memory_space<vmem>>, vector<1x32xf32>
    %c11 = arith.constant 11 : index
    %c0_84 = arith.constant 0 : index
    %206 = vector.load %arg25[%c11, %c0_84] : memref<44x32xf32, #tpu.memory_space<vmem>>, vector<1x32xf32>
    %cst_85 = arith.constant dense<0.000000e+00> : vector<32xf32>
    %207 = vector.multi_reduction <add>, %204, %cst_85 [1] : vector<32x32xf32> to vector<32xf32>
    %208 = vector.shape_cast %207 : vector<32xf32> to vector<32x1xf32>
    %cst_86 = arith.constant 3.200000e+01 : f32
    %209 = vector.broadcast %cst_86 : f32 to vector<32x1xf32>
    %210 = arith.divf %208, %209 : vector<32x1xf32>
    %211 = vector.broadcast %210 : vector<32x1xf32> to vector<32x32xf32>
    %212 = arith.subf %204, %211 : vector<32x32xf32>
    %213 = arith.mulf %212, %212 : vector<32x32xf32>
    %cst_87 = arith.constant dense<0.000000e+00> : vector<32xf32>
    %214 = vector.multi_reduction <add>, %213, %cst_87 [1] : vector<32x32xf32> to vector<32xf32>
    %215 = vector.shape_cast %214 : vector<32xf32> to vector<32x1xf32>
    %cst_88 = arith.constant 3.200000e+01 : f32
    %216 = vector.broadcast %cst_88 : f32 to vector<32x1xf32>
    %217 = arith.divf %215, %216 : vector<32x1xf32>
    %218 = vector.broadcast %210 : vector<32x1xf32> to vector<32x32xf32>
    %219 = arith.subf %204, %218 : vector<32x32xf32>
    %cst_89 = arith.constant 9.99999974E-6 : f32
    %220 = vector.broadcast %cst_89 : f32 to vector<32x1xf32>
    %221 = arith.addf %217, %220 : vector<32x1xf32>
    %222 = math.rsqrt %221 : vector<32x1xf32>
    %223 = vector.broadcast %222 : vector<32x1xf32> to vector<32x32xf32>
    %224 = arith.mulf %219, %223 : vector<32x32xf32>
    %225 = vector.broadcast %205 : vector<1x32xf32> to vector<32x32xf32>
    %226 = arith.mulf %224, %225 : vector<32x32xf32>
    %227 = vector.broadcast %206 : vector<1x32xf32> to vector<32x32xf32>
    %228 = arith.addf %226, %227 : vector<32x32xf32>
    %229 = arith.truncf %228 : vector<32x32xf32> to vector<32x32xbf16>
    %c0_90 = arith.constant 0 : index
    %c0_91 = arith.constant 0 : index
    %230 = vector.load %arg2[%c0_90, %c0_91] : memref<16x1xi32, #tpu.memory_space<vmem>>, vector<16x1xi32>
    %231 = tpu.iota {dimensions = array<i32: 1>} : vector<16x40xi32>
    %232 = vector.broadcast %230 : vector<16x1xi32> to vector<16x40xi32>
    %233 = arith.cmpi eq, %231, %232 : vector<16x40xi32>
    %234 = arith.extui %233 : vector<16x40xi1> to vector<16x40xi32>
    %235 = arith.sitofp %234 : vector<16x40xi32> to vector<16x40xf32>
    %c0_92 = arith.constant 0 : index
    %c0_93 = arith.constant 0 : index
    %236 = vector.load %arg7[%c0_92, %c0_93] : memref<40x32xf32, #tpu.memory_space<vmem>>, vector<40x32xf32>
    %cst_94 = arith.constant dense<0.000000e+00> : vector<16x32xf32>
    %237 = tpu.matmul %235, %236, %cst_94 {dimension_numbers = #tpu.dot_dimension_numbers<[1], [0], [0], [1], [0, 0, 1, 1], [], []>} : vector<16x40xf32>, vector<40x32xf32>, vector<16x32xf32> -> vector<16x32xf32>
    %c0_95 = arith.constant 0 : index
    %c0_96 = arith.constant 0 : index
    %238 = vector.load %arg8[%c0_95, %c0_96] : memref<16x32xf32, #tpu.memory_space<vmem>>, vector<16x32xf32>
    %239 = arith.addf %237, %238 : vector<16x32xf32>
    %c12 = arith.constant 12 : index
    %c0_97 = arith.constant 0 : index
    %240 = vector.load %arg25[%c12, %c0_97] : memref<44x32xf32, #tpu.memory_space<vmem>>, vector<1x32xf32>
    %c13 = arith.constant 13 : index
    %c0_98 = arith.constant 0 : index
    %241 = vector.load %arg25[%c13, %c0_98] : memref<44x32xf32, #tpu.memory_space<vmem>>, vector<1x32xf32>
    %cst_99 = arith.constant dense<0.000000e+00> : vector<16xf32>
    %242 = vector.multi_reduction <add>, %239, %cst_99 [1] : vector<16x32xf32> to vector<16xf32>
    %243 = vector.shape_cast %242 : vector<16xf32> to vector<16x1xf32>
    %cst_100 = arith.constant 3.200000e+01 : f32
    %244 = vector.broadcast %cst_100 : f32 to vector<16x1xf32>
    %245 = arith.divf %243, %244 : vector<16x1xf32>
    %246 = vector.broadcast %245 : vector<16x1xf32> to vector<16x32xf32>
    %247 = arith.subf %239, %246 : vector<16x32xf32>
    %248 = arith.mulf %247, %247 : vector<16x32xf32>
    %cst_101 = arith.constant dense<0.000000e+00> : vector<16xf32>
    %249 = vector.multi_reduction <add>, %248, %cst_101 [1] : vector<16x32xf32> to vector<16xf32>
    %250 = vector.shape_cast %249 : vector<16xf32> to vector<16x1xf32>
    %cst_102 = arith.constant 3.200000e+01 : f32
    %251 = vector.broadcast %cst_102 : f32 to vector<16x1xf32>
    %252 = arith.divf %250, %251 : vector<16x1xf32>
    %253 = vector.broadcast %245 : vector<16x1xf32> to vector<16x32xf32>
    %254 = arith.subf %239, %253 : vector<16x32xf32>
    %cst_103 = arith.constant 9.99999974E-6 : f32
    %255 = vector.broadcast %cst_103 : f32 to vector<16x1xf32>
    %256 = arith.addf %252, %255 : vector<16x1xf32>
    %257 = math.rsqrt %256 : vector<16x1xf32>
    %258 = vector.broadcast %257 : vector<16x1xf32> to vector<16x32xf32>
    %259 = arith.mulf %254, %258 : vector<16x32xf32>
    %260 = vector.broadcast %240 : vector<1x32xf32> to vector<16x32xf32>
    %261 = arith.mulf %259, %260 : vector<16x32xf32>
    %262 = vector.broadcast %241 : vector<1x32xf32> to vector<16x32xf32>
    %263 = arith.addf %261, %262 : vector<16x32xf32>
    %c0_104 = arith.constant 0 : index
    %c0_105 = arith.constant 0 : index
    %264 = vector.load %arg3[%c0_104, %c0_105] : memref<16x16xf32, #tpu.memory_space<vmem>>, vector<16x16xf32>
    %265 = tpu.concatenate %264, %264, %264, %264 in 0 : vector<16x16xf32>, vector<16x16xf32>, vector<16x16xf32>, vector<16x16xf32> -> vector<64x16xf32>
    %c0_106 = arith.constant 0 : index
    %c0_107 = arith.constant 0 : index
    %266 = vector.load %arg4[%c0_106, %c0_107] : memref<16x32xf32, #tpu.memory_space<vmem>>, vector<16x32xf32>
    %267 = tpu.concatenate %266, %266, %266, %266 in 0 : vector<16x32xf32>, vector<16x32xf32>, vector<16x32xf32>, vector<16x32xf32> -> vector<64x32xf32>
    %268 = arith.truncf %263 : vector<16x32xf32> to vector<16x32xbf16>
    %c0_108 = arith.constant 0 : index
    %c0_109 = arith.constant 0 : index
    %c0_110 = arith.constant 0 : index
    %269 = vector.load %arg15[%c0_108, %c0_109, %c0_110] : memref<2x32x32xbf16, #tpu.memory_space<vmem>>, vector<1x32x32xbf16>
    %270 = vector.shape_cast %269 : vector<1x32x32xbf16> to vector<32x32xbf16>
    %cst_111 = arith.constant dense<0.000000e+00> : vector<16x32xf32>
    %271 = tpu.matmul %268, %270, %cst_111 {dimension_numbers = #tpu.dot_dimension_numbers<[1], [0], [0], [1], [0, 0, 1, 1], [], []>} : vector<16x32xbf16>, vector<32x32xbf16>, vector<16x32xf32> -> vector<16x32xf32>
    %c14 = arith.constant 14 : index
    %c0_112 = arith.constant 0 : index
    %272 = vector.load %arg25[%c14, %c0_112] : memref<44x32xf32, #tpu.memory_space<vmem>>, vector<1x32xf32>
    %273 = vector.broadcast %272 : vector<1x32xf32> to vector<16x32xf32>
    %274 = arith.addf %271, %273 : vector<16x32xf32>
    %c0_113 = arith.constant 0 : index
    %c0_114 = arith.constant 0 : index
    %c0_115 = arith.constant 0 : index
    %275 = vector.load %arg16[%c0_113, %c0_114, %c0_115] : memref<2x32x32xbf16, #tpu.memory_space<vmem>>, vector<1x32x32xbf16>
    %276 = vector.shape_cast %275 : vector<1x32x32xbf16> to vector<32x32xbf16>
    %cst_116 = arith.constant dense<0.000000e+00> : vector<16x32xf32>
    %277 = tpu.matmul %268, %276, %cst_116 {dimension_numbers = #tpu.dot_dimension_numbers<[1], [0], [0], [1], [0, 0, 1, 1], [], []>} : vector<16x32xbf16>, vector<32x32xbf16>, vector<16x32xf32> -> vector<16x32xf32>
    %c15 = arith.constant 15 : index
    %c0_117 = arith.constant 0 : index
    %278 = vector.load %arg25[%c15, %c0_117] : memref<44x32xf32, #tpu.memory_space<vmem>>, vector<1x32xf32>
    %279 = vector.broadcast %278 : vector<1x32xf32> to vector<16x32xf32>
    %280 = arith.addf %277, %279 : vector<16x32xf32>
    %c0_118 = arith.constant 0 : index
    %c0_119 = arith.constant 0 : index
    %c0_120 = arith.constant 0 : index
    %281 = vector.load %arg17[%c0_118, %c0_119, %c0_120] : memref<2x32x32xbf16, #tpu.memory_space<vmem>>, vector<1x32x32xbf16>
    %282 = vector.shape_cast %281 : vector<1x32x32xbf16> to vector<32x32xbf16>
    %cst_121 = arith.constant dense<0.000000e+00> : vector<16x32xf32>
    %283 = tpu.matmul %268, %282, %cst_121 {dimension_numbers = #tpu.dot_dimension_numbers<[1], [0], [0], [1], [0, 0, 1, 1], [], []>} : vector<16x32xbf16>, vector<32x32xbf16>, vector<16x32xf32> -> vector<16x32xf32>
    %c16 = arith.constant 16 : index
    %c0_122 = arith.constant 0 : index
    %284 = vector.load %arg25[%c16, %c0_122] : memref<44x32xf32, #tpu.memory_space<vmem>>, vector<1x32xf32>
    %285 = vector.broadcast %284 : vector<1x32xf32> to vector<16x32xf32>
    %286 = arith.addf %283, %285 : vector<16x32xf32>
    %287 = arith.truncf %280 : vector<16x32xf32> to vector<16x32xbf16>
    %cst_123 = arith.constant 0.000000e+00 : f32
    %288 = vector.shape_cast %5 : vector<1x32xi1> to vector<1x32xi1>
    %289 = vector.broadcast %288 : vector<1x32xi1> to vector<16x32xi1>
    %290 = vector.broadcast %cst_123 : f32 to vector<16x32xf32>
    %291 = arith.select %289, %274, %290 : vector<16x32xi1>, vector<16x32xf32>
    %cst_124 = arith.constant 0.000000e+00 : f32
    %292 = vector.shape_cast %10 : vector<1x32xi1> to vector<1x32xi1>
    %293 = vector.broadcast %292 : vector<1x32xi1> to vector<16x32xi1>
    %294 = vector.broadcast %cst_124 : f32 to vector<16x32xf32>
    %295 = arith.select %293, %274, %294 : vector<16x32xi1>, vector<16x32xf32>
    %cst_125 = arith.constant 0.000000e+00 : f32
    %296 = vector.shape_cast %15 : vector<1x32xi1> to vector<1x32xi1>
    %297 = vector.broadcast %296 : vector<1x32xi1> to vector<16x32xi1>
    %298 = vector.broadcast %cst_125 : f32 to vector<16x32xf32>
    %299 = arith.select %297, %274, %298 : vector<16x32xi1>, vector<16x32xf32>
    %cst_126 = arith.constant 0.000000e+00 : f32
    %300 = vector.shape_cast %20 : vector<1x32xi1> to vector<1x32xi1>
    %301 = vector.broadcast %300 : vector<1x32xi1> to vector<16x32xi1>
    %302 = vector.broadcast %cst_126 : f32 to vector<16x32xf32>
    %303 = arith.select %301, %274, %302 : vector<16x32xi1>, vector<16x32xf32>
    %304 = tpu.concatenate %291, %295, %299, %303 in 0 : vector<16x32xf32>, vector<16x32xf32>, vector<16x32xf32>, vector<16x32xf32> -> vector<64x32xf32>
    %305 = arith.truncf %304 : vector<64x32xf32> to vector<64x32xbf16>
    %cst_127 = arith.constant dense<0.000000e+00> : vector<64x16xf32>
    %306 = tpu.matmul %305, %287, %cst_127 {dimension_numbers = #tpu.dot_dimension_numbers<[1], [1], [0], [0], [0, 0, 1, 0], [], []>} : vector<64x32xbf16>, vector<16x32xbf16>, vector<64x16xf32> -> vector<64x16xf32>
    %cst_128 = arith.constant 0.353553385 : f32
    %307 = vector.broadcast %cst_128 : f32 to vector<64x16xf32>
    %308 = arith.mulf %306, %307 : vector<64x16xf32>
    %309 = arith.addf %308, %265 : vector<64x16xf32>
    %cst_129 = arith.constant dense<0xFF800000> : vector<64xf32>
    %310 = vector.multi_reduction <maximumf>, %309, %cst_129 [1] : vector<64x16xf32> to vector<64xf32>
    %311 = vector.shape_cast %310 : vector<64xf32> to vector<64x1xf32>
    %312 = vector.broadcast %311 : vector<64x1xf32> to vector<64x16xf32>
    %313 = arith.subf %309, %312 : vector<64x16xf32>
    %314 = math.exp %313 : vector<64x16xf32>
    %cst_130 = arith.constant dense<0.000000e+00> : vector<64xf32>
    %315 = vector.multi_reduction <add>, %314, %cst_130 [1] : vector<64x16xf32> to vector<64xf32>
    %316 = vector.shape_cast %315 : vector<64xf32> to vector<64x1xf32>
    %317 = tpu.reciprocal %316 {approx = true} : vector<64x1xf32> -> vector<64x1xf32>
    %318 = vector.broadcast %317 : vector<64x1xf32> to vector<64x16xf32>
    %319 = arith.mulf %314, %318 : vector<64x16xf32>
    %320 = arith.truncf %319 : vector<64x16xf32> to vector<64x16xbf16>
    %321 = arith.truncf %286 : vector<16x32xf32> to vector<16x32xbf16>
    %cst_131 = arith.constant dense<0.000000e+00> : vector<64x32xf32>
    %322 = tpu.matmul %320, %321, %cst_131 {dimension_numbers = #tpu.dot_dimension_numbers<[1], [0], [0], [1], [0, 0, 1, 1], [], []>} : vector<64x16xbf16>, vector<16x32xbf16>, vector<64x32xf32> -> vector<64x32xf32>
    %cst_132 = arith.constant 0.000000e+00 : f32
    %323 = vector.broadcast %cst_132 : f32 to vector<16x32xf32>
    %324 = vector.extract_strided_slice %322 {offsets = [0, 0], sizes = [16, 32], strides = [1, 1]} : vector<64x32xf32> to vector<16x32xf32>
    %cst_133 = arith.constant 0.000000e+00 : f32
    %325 = vector.shape_cast %5 : vector<1x32xi1> to vector<1x32xi1>
    %326 = vector.broadcast %325 : vector<1x32xi1> to vector<16x32xi1>
    %327 = vector.broadcast %cst_133 : f32 to vector<16x32xf32>
    %328 = arith.select %326, %324, %327 : vector<16x32xi1>, vector<16x32xf32>
    %329 = arith.addf %323, %328 : vector<16x32xf32>
    %330 = vector.extract_strided_slice %322 {offsets = [16, 0], sizes = [16, 32], strides = [1, 1]} : vector<64x32xf32> to vector<16x32xf32>
    %cst_134 = arith.constant 0.000000e+00 : f32
    %331 = vector.shape_cast %10 : vector<1x32xi1> to vector<1x32xi1>
    %332 = vector.broadcast %331 : vector<1x32xi1> to vector<16x32xi1>
    %333 = vector.broadcast %cst_134 : f32 to vector<16x32xf32>
    %334 = arith.select %332, %330, %333 : vector<16x32xi1>, vector<16x32xf32>
    %335 = arith.addf %329, %334 : vector<16x32xf32>
    %336 = vector.extract_strided_slice %322 {offsets = [32, 0], sizes = [16, 32], strides = [1, 1]} : vector<64x32xf32> to vector<16x32xf32>
    %cst_135 = arith.constant 0.000000e+00 : f32
    %337 = vector.shape_cast %15 : vector<1x32xi1> to vector<1x32xi1>
    %338 = vector.broadcast %337 : vector<1x32xi1> to vector<16x32xi1>
    %339 = vector.broadcast %cst_135 : f32 to vector<16x32xf32>
    %340 = arith.select %338, %336, %339 : vector<16x32xi1>, vector<16x32xf32>
    %341 = arith.addf %335, %340 : vector<16x32xf32>
    %342 = vector.extract_strided_slice %322 {offsets = [48, 0], sizes = [16, 32], strides = [1, 1]} : vector<64x32xf32> to vector<16x32xf32>
    %cst_136 = arith.constant 0.000000e+00 : f32
    %343 = vector.shape_cast %20 : vector<1x32xi1> to vector<1x32xi1>
    %344 = vector.broadcast %343 : vector<1x32xi1> to vector<16x32xi1>
    %345 = vector.broadcast %cst_136 : f32 to vector<16x32xf32>
    %346 = arith.select %344, %342, %345 : vector<16x32xi1>, vector<16x32xf32>
    %347 = arith.addf %341, %346 : vector<16x32xf32>
    %348 = arith.truncf %347 : vector<16x32xf32> to vector<16x32xbf16>
    %c0_137 = arith.constant 0 : index
    %c0_138 = arith.constant 0 : index
    %c0_139 = arith.constant 0 : index
    %349 = vector.load %arg18[%c0_137, %c0_138, %c0_139] : memref<2x32x32xbf16, #tpu.memory_space<vmem>>, vector<1x32x32xbf16>
    %350 = vector.shape_cast %349 : vector<1x32x32xbf16> to vector<32x32xbf16>
    %cst_140 = arith.constant dense<0.000000e+00> : vector<16x32xf32>
    %351 = tpu.matmul %348, %350, %cst_140 {dimension_numbers = #tpu.dot_dimension_numbers<[1], [0], [0], [1], [0, 0, 1, 1], [], []>} : vector<16x32xbf16>, vector<32x32xbf16>, vector<16x32xf32> -> vector<16x32xf32>
    %c17 = arith.constant 17 : index
    %c0_141 = arith.constant 0 : index
    %352 = vector.load %arg25[%c17, %c0_141] : memref<44x32xf32, #tpu.memory_space<vmem>>, vector<1x32xf32>
    %353 = vector.broadcast %352 : vector<1x32xf32> to vector<16x32xf32>
    %354 = arith.addf %351, %353 : vector<16x32xf32>
    %355 = arith.addf %263, %354 : vector<16x32xf32>
    %c18 = arith.constant 18 : index
    %c0_142 = arith.constant 0 : index
    %356 = vector.load %arg25[%c18, %c0_142] : memref<44x32xf32, #tpu.memory_space<vmem>>, vector<1x32xf32>
    %c19 = arith.constant 19 : index
    %c0_143 = arith.constant 0 : index
    %357 = vector.load %arg25[%c19, %c0_143] : memref<44x32xf32, #tpu.memory_space<vmem>>, vector<1x32xf32>
    %cst_144 = arith.constant dense<0.000000e+00> : vector<16xf32>
    %358 = vector.multi_reduction <add>, %355, %cst_144 [1] : vector<16x32xf32> to vector<16xf32>
    %359 = vector.shape_cast %358 : vector<16xf32> to vector<16x1xf32>
    %cst_145 = arith.constant 3.200000e+01 : f32
    %360 = vector.broadcast %cst_145 : f32 to vector<16x1xf32>
    %361 = arith.divf %359, %360 : vector<16x1xf32>
    %362 = vector.broadcast %361 : vector<16x1xf32> to vector<16x32xf32>
    %363 = arith.subf %355, %362 : vector<16x32xf32>
    %364 = arith.mulf %363, %363 : vector<16x32xf32>
    %cst_146 = arith.constant dense<0.000000e+00> : vector<16xf32>
    %365 = vector.multi_reduction <add>, %364, %cst_146 [1] : vector<16x32xf32> to vector<16xf32>
    %366 = vector.shape_cast %365 : vector<16xf32> to vector<16x1xf32>
    %cst_147 = arith.constant 3.200000e+01 : f32
    %367 = vector.broadcast %cst_147 : f32 to vector<16x1xf32>
    %368 = arith.divf %366, %367 : vector<16x1xf32>
    %369 = vector.broadcast %361 : vector<16x1xf32> to vector<16x32xf32>
    %370 = arith.subf %355, %369 : vector<16x32xf32>
    %cst_148 = arith.constant 9.99999974E-6 : f32
    %371 = vector.broadcast %cst_148 : f32 to vector<16x1xf32>
    %372 = arith.addf %368, %371 : vector<16x1xf32>
    %373 = math.rsqrt %372 : vector<16x1xf32>
    %374 = vector.broadcast %373 : vector<16x1xf32> to vector<16x32xf32>
    %375 = arith.mulf %370, %374 : vector<16x32xf32>
    %376 = vector.broadcast %356 : vector<1x32xf32> to vector<16x32xf32>
    %377 = arith.mulf %375, %376 : vector<16x32xf32>
    %378 = vector.broadcast %357 : vector<1x32xf32> to vector<16x32xf32>
    %379 = arith.addf %377, %378 : vector<16x32xf32>
    %380 = arith.truncf %379 : vector<16x32xf32> to vector<16x32xbf16>
    %c0_149 = arith.constant 0 : index
    %c0_150 = arith.constant 0 : index
    %c0_151 = arith.constant 0 : index
    %381 = vector.load %arg19[%c0_149, %c0_150, %c0_151] : memref<2x32x32xbf16, #tpu.memory_space<vmem>>, vector<1x32x32xbf16>
    %382 = vector.shape_cast %381 : vector<1x32x32xbf16> to vector<32x32xbf16>
    %cst_152 = arith.constant dense<0.000000e+00> : vector<16x32xf32>
    %383 = tpu.matmul %380, %382, %cst_152 {dimension_numbers = #tpu.dot_dimension_numbers<[1], [0], [0], [1], [0, 0, 1, 1], [], []>} : vector<16x32xbf16>, vector<32x32xbf16>, vector<16x32xf32> -> vector<16x32xf32>
    %c20 = arith.constant 20 : index
    %c0_153 = arith.constant 0 : index
    %384 = vector.load %arg25[%c20, %c0_153] : memref<44x32xf32, #tpu.memory_space<vmem>>, vector<1x32xf32>
    %385 = vector.broadcast %384 : vector<1x32xf32> to vector<16x32xf32>
    %386 = arith.addf %383, %385 : vector<16x32xf32>
    %c0_154 = arith.constant 0 : index
    %c0_155 = arith.constant 0 : index
    %c0_156 = arith.constant 0 : index
    %387 = vector.load %arg20[%c0_154, %c0_155, %c0_156] : memref<2x32x32xbf16, #tpu.memory_space<vmem>>, vector<1x32x32xbf16>
    %388 = vector.shape_cast %387 : vector<1x32x32xbf16> to vector<32x32xbf16>
    %cst_157 = arith.constant dense<0.000000e+00> : vector<32x32xf32>
    %389 = tpu.matmul %229, %388, %cst_157 {dimension_numbers = #tpu.dot_dimension_numbers<[1], [0], [0], [1], [0, 0, 1, 1], [], []>} : vector<32x32xbf16>, vector<32x32xbf16>, vector<32x32xf32> -> vector<32x32xf32>
    %c21 = arith.constant 21 : index
    %c0_158 = arith.constant 0 : index
    %390 = vector.load %arg25[%c21, %c0_158] : memref<44x32xf32, #tpu.memory_space<vmem>>, vector<1x32xf32>
    %391 = vector.broadcast %390 : vector<1x32xf32> to vector<32x32xf32>
    %392 = arith.addf %389, %391 : vector<32x32xf32>
    %c0_159 = arith.constant 0 : index
    %c0_160 = arith.constant 0 : index
    %c0_161 = arith.constant 0 : index
    %393 = vector.load %arg21[%c0_159, %c0_160, %c0_161] : memref<2x32x32xbf16, #tpu.memory_space<vmem>>, vector<1x32x32xbf16>
    %394 = vector.shape_cast %393 : vector<1x32x32xbf16> to vector<32x32xbf16>
    %cst_162 = arith.constant dense<0.000000e+00> : vector<32x32xf32>
    %395 = tpu.matmul %229, %394, %cst_162 {dimension_numbers = #tpu.dot_dimension_numbers<[1], [0], [0], [1], [0, 0, 1, 1], [], []>} : vector<32x32xbf16>, vector<32x32xbf16>, vector<32x32xf32> -> vector<32x32xf32>
    %c22 = arith.constant 22 : index
    %c0_163 = arith.constant 0 : index
    %396 = vector.load %arg25[%c22, %c0_163] : memref<44x32xf32, #tpu.memory_space<vmem>>, vector<1x32xf32>
    %397 = vector.broadcast %396 : vector<1x32xf32> to vector<32x32xf32>
    %398 = arith.addf %395, %397 : vector<32x32xf32>
    %399 = arith.truncf %392 : vector<32x32xf32> to vector<32x32xbf16>
    %cst_164 = arith.constant 0.000000e+00 : f32
    %400 = vector.shape_cast %5 : vector<1x32xi1> to vector<1x32xi1>
    %401 = vector.broadcast %400 : vector<1x32xi1> to vector<16x32xi1>
    %402 = vector.broadcast %cst_164 : f32 to vector<16x32xf32>
    %403 = arith.select %401, %386, %402 : vector<16x32xi1>, vector<16x32xf32>
    %cst_165 = arith.constant 0.000000e+00 : f32
    %404 = vector.shape_cast %10 : vector<1x32xi1> to vector<1x32xi1>
    %405 = vector.broadcast %404 : vector<1x32xi1> to vector<16x32xi1>
    %406 = vector.broadcast %cst_165 : f32 to vector<16x32xf32>
    %407 = arith.select %405, %386, %406 : vector<16x32xi1>, vector<16x32xf32>
    %cst_166 = arith.constant 0.000000e+00 : f32
    %408 = vector.shape_cast %15 : vector<1x32xi1> to vector<1x32xi1>
    %409 = vector.broadcast %408 : vector<1x32xi1> to vector<16x32xi1>
    %410 = vector.broadcast %cst_166 : f32 to vector<16x32xf32>
    %411 = arith.select %409, %386, %410 : vector<16x32xi1>, vector<16x32xf32>
    %cst_167 = arith.constant 0.000000e+00 : f32
    %412 = vector.shape_cast %20 : vector<1x32xi1> to vector<1x32xi1>
    %413 = vector.broadcast %412 : vector<1x32xi1> to vector<16x32xi1>
    %414 = vector.broadcast %cst_167 : f32 to vector<16x32xf32>
    %415 = arith.select %413, %386, %414 : vector<16x32xi1>, vector<16x32xf32>
    %416 = tpu.concatenate %403, %407, %411, %415 in 0 : vector<16x32xf32>, vector<16x32xf32>, vector<16x32xf32>, vector<16x32xf32> -> vector<64x32xf32>
    %417 = arith.truncf %416 : vector<64x32xf32> to vector<64x32xbf16>
    %cst_168 = arith.constant dense<0.000000e+00> : vector<64x32xf32>
    %418 = tpu.matmul %417, %399, %cst_168 {dimension_numbers = #tpu.dot_dimension_numbers<[1], [1], [0], [0], [0, 0, 1, 0], [], []>} : vector<64x32xbf16>, vector<32x32xbf16>, vector<64x32xf32> -> vector<64x32xf32>
    %cst_169 = arith.constant 0.353553385 : f32
    %419 = vector.broadcast %cst_169 : f32 to vector<64x32xf32>
    %420 = arith.mulf %418, %419 : vector<64x32xf32>
    %421 = arith.addf %420, %267 : vector<64x32xf32>
    %cst_170 = arith.constant dense<0xFF800000> : vector<64xf32>
    %422 = vector.multi_reduction <maximumf>, %421, %cst_170 [1] : vector<64x32xf32> to vector<64xf32>
    %423 = vector.shape_cast %422 : vector<64xf32> to vector<64x1xf32>
    %424 = vector.broadcast %423 : vector<64x1xf32> to vector<64x32xf32>
    %425 = arith.subf %421, %424 : vector<64x32xf32>
    %426 = math.exp %425 : vector<64x32xf32>
    %cst_171 = arith.constant dense<0.000000e+00> : vector<64xf32>
    %427 = vector.multi_reduction <add>, %426, %cst_171 [1] : vector<64x32xf32> to vector<64xf32>
    %428 = vector.shape_cast %427 : vector<64xf32> to vector<64x1xf32>
    %429 = tpu.reciprocal %428 {approx = true} : vector<64x1xf32> -> vector<64x1xf32>
    %430 = vector.broadcast %429 : vector<64x1xf32> to vector<64x32xf32>
    %431 = arith.mulf %426, %430 : vector<64x32xf32>
    %432 = arith.truncf %431 : vector<64x32xf32> to vector<64x32xbf16>
    %433 = arith.truncf %398 : vector<32x32xf32> to vector<32x32xbf16>
    %cst_172 = arith.constant dense<0.000000e+00> : vector<64x32xf32>
    %434 = tpu.matmul %432, %433, %cst_172 {dimension_numbers = #tpu.dot_dimension_numbers<[1], [0], [0], [1], [0, 0, 1, 1], [], []>} : vector<64x32xbf16>, vector<32x32xbf16>, vector<64x32xf32> -> vector<64x32xf32>
    %cst_173 = arith.constant 0.000000e+00 : f32
    %435 = vector.broadcast %cst_173 : f32 to vector<16x32xf32>
    %436 = vector.extract_strided_slice %434 {offsets = [0, 0], sizes = [16, 32], strides = [1, 1]} : vector<64x32xf32> to vector<16x32xf32>
    %cst_174 = arith.constant 0.000000e+00 : f32
    %437 = vector.shape_cast %5 : vector<1x32xi1> to vector<1x32xi1>
    %438 = vector.broadcast %437 : vector<1x32xi1> to vector<16x32xi1>
    %439 = vector.broadcast %cst_174 : f32 to vector<16x32xf32>
    %440 = arith.select %438, %436, %439 : vector<16x32xi1>, vector<16x32xf32>
    %441 = arith.addf %435, %440 : vector<16x32xf32>
    %442 = vector.extract_strided_slice %434 {offsets = [16, 0], sizes = [16, 32], strides = [1, 1]} : vector<64x32xf32> to vector<16x32xf32>
    %cst_175 = arith.constant 0.000000e+00 : f32
    %443 = vector.shape_cast %10 : vector<1x32xi1> to vector<1x32xi1>
    %444 = vector.broadcast %443 : vector<1x32xi1> to vector<16x32xi1>
    %445 = vector.broadcast %cst_175 : f32 to vector<16x32xf32>
    %446 = arith.select %444, %442, %445 : vector<16x32xi1>, vector<16x32xf32>
    %447 = arith.addf %441, %446 : vector<16x32xf32>
    %448 = vector.extract_strided_slice %434 {offsets = [32, 0], sizes = [16, 32], strides = [1, 1]} : vector<64x32xf32> to vector<16x32xf32>
    %cst_176 = arith.constant 0.000000e+00 : f32
    %449 = vector.shape_cast %15 : vector<1x32xi1> to vector<1x32xi1>
    %450 = vector.broadcast %449 : vector<1x32xi1> to vector<16x32xi1>
    %451 = vector.broadcast %cst_176 : f32 to vector<16x32xf32>
    %452 = arith.select %450, %448, %451 : vector<16x32xi1>, vector<16x32xf32>
    %453 = arith.addf %447, %452 : vector<16x32xf32>
    %454 = vector.extract_strided_slice %434 {offsets = [48, 0], sizes = [16, 32], strides = [1, 1]} : vector<64x32xf32> to vector<16x32xf32>
    %cst_177 = arith.constant 0.000000e+00 : f32
    %455 = vector.shape_cast %20 : vector<1x32xi1> to vector<1x32xi1>
    %456 = vector.broadcast %455 : vector<1x32xi1> to vector<16x32xi1>
    %457 = vector.broadcast %cst_177 : f32 to vector<16x32xf32>
    %458 = arith.select %456, %454, %457 : vector<16x32xi1>, vector<16x32xf32>
    %459 = arith.addf %453, %458 : vector<16x32xf32>
    %460 = arith.truncf %459 : vector<16x32xf32> to vector<16x32xbf16>
    %c0_178 = arith.constant 0 : index
    %c0_179 = arith.constant 0 : index
    %c0_180 = arith.constant 0 : index
    %461 = vector.load %arg22[%c0_178, %c0_179, %c0_180] : memref<2x32x32xbf16, #tpu.memory_space<vmem>>, vector<1x32x32xbf16>
    %462 = vector.shape_cast %461 : vector<1x32x32xbf16> to vector<32x32xbf16>
    %cst_181 = arith.constant dense<0.000000e+00> : vector<16x32xf32>
    %463 = tpu.matmul %460, %462, %cst_181 {dimension_numbers = #tpu.dot_dimension_numbers<[1], [0], [0], [1], [0, 0, 1, 1], [], []>} : vector<16x32xbf16>, vector<32x32xbf16>, vector<16x32xf32> -> vector<16x32xf32>
    %c23 = arith.constant 23 : index
    %c0_182 = arith.constant 0 : index
    %464 = vector.load %arg25[%c23, %c0_182] : memref<44x32xf32, #tpu.memory_space<vmem>>, vector<1x32xf32>
    %465 = vector.broadcast %464 : vector<1x32xf32> to vector<16x32xf32>
    %466 = arith.addf %463, %465 : vector<16x32xf32>
    %467 = arith.addf %379, %466 : vector<16x32xf32>
    %c24 = arith.constant 24 : index
    %c0_183 = arith.constant 0 : index
    %468 = vector.load %arg25[%c24, %c0_183] : memref<44x32xf32, #tpu.memory_space<vmem>>, vector<1x32xf32>
    %c25 = arith.constant 25 : index
    %c0_184 = arith.constant 0 : index
    %469 = vector.load %arg25[%c25, %c0_184] : memref<44x32xf32, #tpu.memory_space<vmem>>, vector<1x32xf32>
    %cst_185 = arith.constant dense<0.000000e+00> : vector<16xf32>
    %470 = vector.multi_reduction <add>, %467, %cst_185 [1] : vector<16x32xf32> to vector<16xf32>
    %471 = vector.shape_cast %470 : vector<16xf32> to vector<16x1xf32>
    %cst_186 = arith.constant 3.200000e+01 : f32
    %472 = vector.broadcast %cst_186 : f32 to vector<16x1xf32>
    %473 = arith.divf %471, %472 : vector<16x1xf32>
    %474 = vector.broadcast %473 : vector<16x1xf32> to vector<16x32xf32>
    %475 = arith.subf %467, %474 : vector<16x32xf32>
    %476 = arith.mulf %475, %475 : vector<16x32xf32>
    %cst_187 = arith.constant dense<0.000000e+00> : vector<16xf32>
    %477 = vector.multi_reduction <add>, %476, %cst_187 [1] : vector<16x32xf32> to vector<16xf32>
    %478 = vector.shape_cast %477 : vector<16xf32> to vector<16x1xf32>
    %cst_188 = arith.constant 3.200000e+01 : f32
    %479 = vector.broadcast %cst_188 : f32 to vector<16x1xf32>
    %480 = arith.divf %478, %479 : vector<16x1xf32>
    %481 = vector.broadcast %473 : vector<16x1xf32> to vector<16x32xf32>
    %482 = arith.subf %467, %481 : vector<16x32xf32>
    %cst_189 = arith.constant 9.99999974E-6 : f32
    %483 = vector.broadcast %cst_189 : f32 to vector<16x1xf32>
    %484 = arith.addf %480, %483 : vector<16x1xf32>
    %485 = math.rsqrt %484 : vector<16x1xf32>
    %486 = vector.broadcast %485 : vector<16x1xf32> to vector<16x32xf32>
    %487 = arith.mulf %482, %486 : vector<16x32xf32>
    %488 = vector.broadcast %468 : vector<1x32xf32> to vector<16x32xf32>
    %489 = arith.mulf %487, %488 : vector<16x32xf32>
    %490 = vector.broadcast %469 : vector<1x32xf32> to vector<16x32xf32>
    %491 = arith.addf %489, %490 : vector<16x32xf32>
    %492 = arith.truncf %491 : vector<16x32xf32> to vector<16x32xbf16>
    %c0_190 = arith.constant 0 : index
    %c0_191 = arith.constant 0 : index
    %c0_192 = arith.constant 0 : index
    %493 = vector.load %arg23[%c0_190, %c0_191, %c0_192] : memref<2x32x64xbf16, #tpu.memory_space<vmem>>, vector<1x32x64xbf16>
    %494 = vector.shape_cast %493 : vector<1x32x64xbf16> to vector<32x64xbf16>
    %cst_193 = arith.constant dense<0.000000e+00> : vector<16x64xf32>
    %495 = tpu.matmul %492, %494, %cst_193 {dimension_numbers = #tpu.dot_dimension_numbers<[1], [0], [0], [1], [0, 0, 1, 1], [], []>} : vector<16x32xbf16>, vector<32x64xbf16>, vector<16x64xf32> -> vector<16x64xf32>
    %c2_194 = arith.constant 2 : index
    %c0_195 = arith.constant 0 : index
    %496 = vector.load %arg26[%c2_194, %c0_195] : memref<4x64xf32, #tpu.memory_space<vmem>>, vector<1x64xf32>
    %497 = vector.broadcast %496 : vector<1x64xf32> to vector<16x64xf32>
    %498 = arith.addf %495, %497 : vector<16x64xf32>
    %cst_196 = arith.constant 0.000000e+00 : f32
    %499 = vector.broadcast %cst_196 : f32 to vector<16x64xf32>
    %500 = arith.maximumf %498, %499 : vector<16x64xf32>
    %501 = arith.truncf %500 : vector<16x64xf32> to vector<16x64xbf16>
    %c0_197 = arith.constant 0 : index
    %c0_198 = arith.constant 0 : index
    %c0_199 = arith.constant 0 : index
    %502 = vector.load %arg24[%c0_197, %c0_198, %c0_199] : memref<2x64x32xbf16, #tpu.memory_space<vmem>>, vector<1x64x32xbf16>
    %503 = vector.shape_cast %502 : vector<1x64x32xbf16> to vector<64x32xbf16>
    %cst_200 = arith.constant dense<0.000000e+00> : vector<16x32xf32>
    %504 = tpu.matmul %501, %503, %cst_200 {dimension_numbers = #tpu.dot_dimension_numbers<[1], [0], [0], [1], [0, 0, 1, 1], [], []>} : vector<16x64xbf16>, vector<64x32xbf16>, vector<16x32xf32> -> vector<16x32xf32>
    %c26 = arith.constant 26 : index
    %c0_201 = arith.constant 0 : index
    %505 = vector.load %arg25[%c26, %c0_201] : memref<44x32xf32, #tpu.memory_space<vmem>>, vector<1x32xf32>
    %506 = vector.broadcast %505 : vector<1x32xf32> to vector<16x32xf32>
    %507 = arith.addf %504, %506 : vector<16x32xf32>
    %508 = arith.addf %491, %507 : vector<16x32xf32>
    %c27 = arith.constant 27 : index
    %c0_202 = arith.constant 0 : index
    %509 = vector.load %arg25[%c27, %c0_202] : memref<44x32xf32, #tpu.memory_space<vmem>>, vector<1x32xf32>
    %c28 = arith.constant 28 : index
    %c0_203 = arith.constant 0 : index
    %510 = vector.load %arg25[%c28, %c0_203] : memref<44x32xf32, #tpu.memory_space<vmem>>, vector<1x32xf32>
    %cst_204 = arith.constant dense<0.000000e+00> : vector<16xf32>
    %511 = vector.multi_reduction <add>, %508, %cst_204 [1] : vector<16x32xf32> to vector<16xf32>
    %512 = vector.shape_cast %511 : vector<16xf32> to vector<16x1xf32>
    %cst_205 = arith.constant 3.200000e+01 : f32
    %513 = vector.broadcast %cst_205 : f32 to vector<16x1xf32>
    %514 = arith.divf %512, %513 : vector<16x1xf32>
    %515 = vector.broadcast %514 : vector<16x1xf32> to vector<16x32xf32>
    %516 = arith.subf %508, %515 : vector<16x32xf32>
    %517 = arith.mulf %516, %516 : vector<16x32xf32>
    %cst_206 = arith.constant dense<0.000000e+00> : vector<16xf32>
    %518 = vector.multi_reduction <add>, %517, %cst_206 [1] : vector<16x32xf32> to vector<16xf32>
    %519 = vector.shape_cast %518 : vector<16xf32> to vector<16x1xf32>
    %cst_207 = arith.constant 3.200000e+01 : f32
    %520 = vector.broadcast %cst_207 : f32 to vector<16x1xf32>
    %521 = arith.divf %519, %520 : vector<16x1xf32>
    %522 = vector.broadcast %514 : vector<16x1xf32> to vector<16x32xf32>
    %523 = arith.subf %508, %522 : vector<16x32xf32>
    %cst_208 = arith.constant 9.99999974E-6 : f32
    %524 = vector.broadcast %cst_208 : f32 to vector<16x1xf32>
    %525 = arith.addf %521, %524 : vector<16x1xf32>
    %526 = math.rsqrt %525 : vector<16x1xf32>
    %527 = vector.broadcast %526 : vector<16x1xf32> to vector<16x32xf32>
    %528 = arith.mulf %523, %527 : vector<16x32xf32>
    %529 = vector.broadcast %509 : vector<1x32xf32> to vector<16x32xf32>
    %530 = arith.mulf %528, %529 : vector<16x32xf32>
    %531 = vector.broadcast %510 : vector<1x32xf32> to vector<16x32xf32>
    %532 = arith.addf %530, %531 : vector<16x32xf32>
    %533 = arith.truncf %532 : vector<16x32xf32> to vector<16x32xbf16>
    %c1_209 = arith.constant 1 : index
    %c0_210 = arith.constant 0 : index
    %c0_211 = arith.constant 0 : index
    %534 = vector.load %arg15[%c1_209, %c0_210, %c0_211] : memref<2x32x32xbf16, #tpu.memory_space<vmem>>, vector<1x32x32xbf16>
    %535 = vector.shape_cast %534 : vector<1x32x32xbf16> to vector<32x32xbf16>
    %cst_212 = arith.constant dense<0.000000e+00> : vector<16x32xf32>
    %536 = tpu.matmul %533, %535, %cst_212 {dimension_numbers = #tpu.dot_dimension_numbers<[1], [0], [0], [1], [0, 0, 1, 1], [], []>} : vector<16x32xbf16>, vector<32x32xbf16>, vector<16x32xf32> -> vector<16x32xf32>
    %c29 = arith.constant 29 : index
    %c0_213 = arith.constant 0 : index
    %537 = vector.load %arg25[%c29, %c0_213] : memref<44x32xf32, #tpu.memory_space<vmem>>, vector<1x32xf32>
    %538 = vector.broadcast %537 : vector<1x32xf32> to vector<16x32xf32>
    %539 = arith.addf %536, %538 : vector<16x32xf32>
    %c1_214 = arith.constant 1 : index
    %c0_215 = arith.constant 0 : index
    %c0_216 = arith.constant 0 : index
    %540 = vector.load %arg16[%c1_214, %c0_215, %c0_216] : memref<2x32x32xbf16, #tpu.memory_space<vmem>>, vector<1x32x32xbf16>
    %541 = vector.shape_cast %540 : vector<1x32x32xbf16> to vector<32x32xbf16>
    %cst_217 = arith.constant dense<0.000000e+00> : vector<16x32xf32>
    %542 = tpu.matmul %533, %541, %cst_217 {dimension_numbers = #tpu.dot_dimension_numbers<[1], [0], [0], [1], [0, 0, 1, 1], [], []>} : vector<16x32xbf16>, vector<32x32xbf16>, vector<16x32xf32> -> vector<16x32xf32>
    %c30 = arith.constant 30 : index
    %c0_218 = arith.constant 0 : index
    %543 = vector.load %arg25[%c30, %c0_218] : memref<44x32xf32, #tpu.memory_space<vmem>>, vector<1x32xf32>
    %544 = vector.broadcast %543 : vector<1x32xf32> to vector<16x32xf32>
    %545 = arith.addf %542, %544 : vector<16x32xf32>
    %c1_219 = arith.constant 1 : index
    %c0_220 = arith.constant 0 : index
    %c0_221 = arith.constant 0 : index
    %546 = vector.load %arg17[%c1_219, %c0_220, %c0_221] : memref<2x32x32xbf16, #tpu.memory_space<vmem>>, vector<1x32x32xbf16>
    %547 = vector.shape_cast %546 : vector<1x32x32xbf16> to vector<32x32xbf16>
    %cst_222 = arith.constant dense<0.000000e+00> : vector<16x32xf32>
    %548 = tpu.matmul %533, %547, %cst_222 {dimension_numbers = #tpu.dot_dimension_numbers<[1], [0], [0], [1], [0, 0, 1, 1], [], []>} : vector<16x32xbf16>, vector<32x32xbf16>, vector<16x32xf32> -> vector<16x32xf32>
    %c31 = arith.constant 31 : index
    %c0_223 = arith.constant 0 : index
    %549 = vector.load %arg25[%c31, %c0_223] : memref<44x32xf32, #tpu.memory_space<vmem>>, vector<1x32xf32>
    %550 = vector.broadcast %549 : vector<1x32xf32> to vector<16x32xf32>
    %551 = arith.addf %548, %550 : vector<16x32xf32>
    %552 = arith.truncf %545 : vector<16x32xf32> to vector<16x32xbf16>
    %cst_224 = arith.constant 0.000000e+00 : f32
    %553 = vector.shape_cast %5 : vector<1x32xi1> to vector<1x32xi1>
    %554 = vector.broadcast %553 : vector<1x32xi1> to vector<16x32xi1>
    %555 = vector.broadcast %cst_224 : f32 to vector<16x32xf32>
    %556 = arith.select %554, %539, %555 : vector<16x32xi1>, vector<16x32xf32>
    %cst_225 = arith.constant 0.000000e+00 : f32
    %557 = vector.shape_cast %10 : vector<1x32xi1> to vector<1x32xi1>
    %558 = vector.broadcast %557 : vector<1x32xi1> to vector<16x32xi1>
    %559 = vector.broadcast %cst_225 : f32 to vector<16x32xf32>
    %560 = arith.select %558, %539, %559 : vector<16x32xi1>, vector<16x32xf32>
    %cst_226 = arith.constant 0.000000e+00 : f32
    %561 = vector.shape_cast %15 : vector<1x32xi1> to vector<1x32xi1>
    %562 = vector.broadcast %561 : vector<1x32xi1> to vector<16x32xi1>
    %563 = vector.broadcast %cst_226 : f32 to vector<16x32xf32>
    %564 = arith.select %562, %539, %563 : vector<16x32xi1>, vector<16x32xf32>
    %cst_227 = arith.constant 0.000000e+00 : f32
    %565 = vector.shape_cast %20 : vector<1x32xi1> to vector<1x32xi1>
    %566 = vector.broadcast %565 : vector<1x32xi1> to vector<16x32xi1>
    %567 = vector.broadcast %cst_227 : f32 to vector<16x32xf32>
    %568 = arith.select %566, %539, %567 : vector<16x32xi1>, vector<16x32xf32>
    %569 = tpu.concatenate %556, %560, %564, %568 in 0 : vector<16x32xf32>, vector<16x32xf32>, vector<16x32xf32>, vector<16x32xf32> -> vector<64x32xf32>
    %570 = arith.truncf %569 : vector<64x32xf32> to vector<64x32xbf16>
    %cst_228 = arith.constant dense<0.000000e+00> : vector<64x16xf32>
    %571 = tpu.matmul %570, %552, %cst_228 {dimension_numbers = #tpu.dot_dimension_numbers<[1], [1], [0], [0], [0, 0, 1, 0], [], []>} : vector<64x32xbf16>, vector<16x32xbf16>, vector<64x16xf32> -> vector<64x16xf32>
    %cst_229 = arith.constant 0.353553385 : f32
    %572 = vector.broadcast %cst_229 : f32 to vector<64x16xf32>
    %573 = arith.mulf %571, %572 : vector<64x16xf32>
    %574 = arith.addf %573, %265 : vector<64x16xf32>
    %cst_230 = arith.constant dense<0xFF800000> : vector<64xf32>
    %575 = vector.multi_reduction <maximumf>, %574, %cst_230 [1] : vector<64x16xf32> to vector<64xf32>
    %576 = vector.shape_cast %575 : vector<64xf32> to vector<64x1xf32>
    %577 = vector.broadcast %576 : vector<64x1xf32> to vector<64x16xf32>
    %578 = arith.subf %574, %577 : vector<64x16xf32>
    %579 = math.exp %578 : vector<64x16xf32>
    %cst_231 = arith.constant dense<0.000000e+00> : vector<64xf32>
    %580 = vector.multi_reduction <add>, %579, %cst_231 [1] : vector<64x16xf32> to vector<64xf32>
    %581 = vector.shape_cast %580 : vector<64xf32> to vector<64x1xf32>
    %582 = tpu.reciprocal %581 {approx = true} : vector<64x1xf32> -> vector<64x1xf32>
    %583 = vector.broadcast %582 : vector<64x1xf32> to vector<64x16xf32>
    %584 = arith.mulf %579, %583 : vector<64x16xf32>
    %585 = arith.truncf %584 : vector<64x16xf32> to vector<64x16xbf16>
    %586 = arith.truncf %551 : vector<16x32xf32> to vector<16x32xbf16>
    %cst_232 = arith.constant dense<0.000000e+00> : vector<64x32xf32>
    %587 = tpu.matmul %585, %586, %cst_232 {dimension_numbers = #tpu.dot_dimension_numbers<[1], [0], [0], [1], [0, 0, 1, 1], [], []>} : vector<64x16xbf16>, vector<16x32xbf16>, vector<64x32xf32> -> vector<64x32xf32>
    %cst_233 = arith.constant 0.000000e+00 : f32
    %588 = vector.broadcast %cst_233 : f32 to vector<16x32xf32>
    %589 = vector.extract_strided_slice %587 {offsets = [0, 0], sizes = [16, 32], strides = [1, 1]} : vector<64x32xf32> to vector<16x32xf32>
    %cst_234 = arith.constant 0.000000e+00 : f32
    %590 = vector.shape_cast %5 : vector<1x32xi1> to vector<1x32xi1>
    %591 = vector.broadcast %590 : vector<1x32xi1> to vector<16x32xi1>
    %592 = vector.broadcast %cst_234 : f32 to vector<16x32xf32>
    %593 = arith.select %591, %589, %592 : vector<16x32xi1>, vector<16x32xf32>
    %594 = arith.addf %588, %593 : vector<16x32xf32>
    %595 = vector.extract_strided_slice %587 {offsets = [16, 0], sizes = [16, 32], strides = [1, 1]} : vector<64x32xf32> to vector<16x32xf32>
    %cst_235 = arith.constant 0.000000e+00 : f32
    %596 = vector.shape_cast %10 : vector<1x32xi1> to vector<1x32xi1>
    %597 = vector.broadcast %596 : vector<1x32xi1> to vector<16x32xi1>
    %598 = vector.broadcast %cst_235 : f32 to vector<16x32xf32>
    %599 = arith.select %597, %595, %598 : vector<16x32xi1>, vector<16x32xf32>
    %600 = arith.addf %594, %599 : vector<16x32xf32>
    %601 = vector.extract_strided_slice %587 {offsets = [32, 0], sizes = [16, 32], strides = [1, 1]} : vector<64x32xf32> to vector<16x32xf32>
    %cst_236 = arith.constant 0.000000e+00 : f32
    %602 = vector.shape_cast %15 : vector<1x32xi1> to vector<1x32xi1>
    %603 = vector.broadcast %602 : vector<1x32xi1> to vector<16x32xi1>
    %604 = vector.broadcast %cst_236 : f32 to vector<16x32xf32>
    %605 = arith.select %603, %601, %604 : vector<16x32xi1>, vector<16x32xf32>
    %606 = arith.addf %600, %605 : vector<16x32xf32>
    %607 = vector.extract_strided_slice %587 {offsets = [48, 0], sizes = [16, 32], strides = [1, 1]} : vector<64x32xf32> to vector<16x32xf32>
    %cst_237 = arith.constant 0.000000e+00 : f32
    %608 = vector.shape_cast %20 : vector<1x32xi1> to vector<1x32xi1>
    %609 = vector.broadcast %608 : vector<1x32xi1> to vector<16x32xi1>
    %610 = vector.broadcast %cst_237 : f32 to vector<16x32xf32>
    %611 = arith.select %609, %607, %610 : vector<16x32xi1>, vector<16x32xf32>
    %612 = arith.addf %606, %611 : vector<16x32xf32>
    %613 = arith.truncf %612 : vector<16x32xf32> to vector<16x32xbf16>
    %c1_238 = arith.constant 1 : index
    %c0_239 = arith.constant 0 : index
    %c0_240 = arith.constant 0 : index
    %614 = vector.load %arg18[%c1_238, %c0_239, %c0_240] : memref<2x32x32xbf16, #tpu.memory_space<vmem>>, vector<1x32x32xbf16>
    %615 = vector.shape_cast %614 : vector<1x32x32xbf16> to vector<32x32xbf16>
    %cst_241 = arith.constant dense<0.000000e+00> : vector<16x32xf32>
    %616 = tpu.matmul %613, %615, %cst_241 {dimension_numbers = #tpu.dot_dimension_numbers<[1], [0], [0], [1], [0, 0, 1, 1], [], []>} : vector<16x32xbf16>, vector<32x32xbf16>, vector<16x32xf32> -> vector<16x32xf32>
    %c32 = arith.constant 32 : index
    %c0_242 = arith.constant 0 : index
    %617 = vector.load %arg25[%c32, %c0_242] : memref<44x32xf32, #tpu.memory_space<vmem>>, vector<1x32xf32>
    %618 = vector.broadcast %617 : vector<1x32xf32> to vector<16x32xf32>
    %619 = arith.addf %616, %618 : vector<16x32xf32>
    %620 = arith.addf %532, %619 : vector<16x32xf32>
    %c33 = arith.constant 33 : index
    %c0_243 = arith.constant 0 : index
    %621 = vector.load %arg25[%c33, %c0_243] : memref<44x32xf32, #tpu.memory_space<vmem>>, vector<1x32xf32>
    %c34 = arith.constant 34 : index
    %c0_244 = arith.constant 0 : index
    %622 = vector.load %arg25[%c34, %c0_244] : memref<44x32xf32, #tpu.memory_space<vmem>>, vector<1x32xf32>
    %cst_245 = arith.constant dense<0.000000e+00> : vector<16xf32>
    %623 = vector.multi_reduction <add>, %620, %cst_245 [1] : vector<16x32xf32> to vector<16xf32>
    %624 = vector.shape_cast %623 : vector<16xf32> to vector<16x1xf32>
    %cst_246 = arith.constant 3.200000e+01 : f32
    %625 = vector.broadcast %cst_246 : f32 to vector<16x1xf32>
    %626 = arith.divf %624, %625 : vector<16x1xf32>
    %627 = vector.broadcast %626 : vector<16x1xf32> to vector<16x32xf32>
    %628 = arith.subf %620, %627 : vector<16x32xf32>
    %629 = arith.mulf %628, %628 : vector<16x32xf32>
    %cst_247 = arith.constant dense<0.000000e+00> : vector<16xf32>
    %630 = vector.multi_reduction <add>, %629, %cst_247 [1] : vector<16x32xf32> to vector<16xf32>
    %631 = vector.shape_cast %630 : vector<16xf32> to vector<16x1xf32>
    %cst_248 = arith.constant 3.200000e+01 : f32
    %632 = vector.broadcast %cst_248 : f32 to vector<16x1xf32>
    %633 = arith.divf %631, %632 : vector<16x1xf32>
    %634 = vector.broadcast %626 : vector<16x1xf32> to vector<16x32xf32>
    %635 = arith.subf %620, %634 : vector<16x32xf32>
    %cst_249 = arith.constant 9.99999974E-6 : f32
    %636 = vector.broadcast %cst_249 : f32 to vector<16x1xf32>
    %637 = arith.addf %633, %636 : vector<16x1xf32>
    %638 = math.rsqrt %637 : vector<16x1xf32>
    %639 = vector.broadcast %638 : vector<16x1xf32> to vector<16x32xf32>
    %640 = arith.mulf %635, %639 : vector<16x32xf32>
    %641 = vector.broadcast %621 : vector<1x32xf32> to vector<16x32xf32>
    %642 = arith.mulf %640, %641 : vector<16x32xf32>
    %643 = vector.broadcast %622 : vector<1x32xf32> to vector<16x32xf32>
    %644 = arith.addf %642, %643 : vector<16x32xf32>
    %645 = arith.truncf %644 : vector<16x32xf32> to vector<16x32xbf16>
    %c1_250 = arith.constant 1 : index
    %c0_251 = arith.constant 0 : index
    %c0_252 = arith.constant 0 : index
    %646 = vector.load %arg19[%c1_250, %c0_251, %c0_252] : memref<2x32x32xbf16, #tpu.memory_space<vmem>>, vector<1x32x32xbf16>
    %647 = vector.shape_cast %646 : vector<1x32x32xbf16> to vector<32x32xbf16>
    %cst_253 = arith.constant dense<0.000000e+00> : vector<16x32xf32>
    %648 = tpu.matmul %645, %647, %cst_253 {dimension_numbers = #tpu.dot_dimension_numbers<[1], [0], [0], [1], [0, 0, 1, 1], [], []>} : vector<16x32xbf16>, vector<32x32xbf16>, vector<16x32xf32> -> vector<16x32xf32>
    %c35 = arith.constant 35 : index
    %c0_254 = arith.constant 0 : index
    %649 = vector.load %arg25[%c35, %c0_254] : memref<44x32xf32, #tpu.memory_space<vmem>>, vector<1x32xf32>
    %650 = vector.broadcast %649 : vector<1x32xf32> to vector<16x32xf32>
    %651 = arith.addf %648, %650 : vector<16x32xf32>
    %c1_255 = arith.constant 1 : index
    %c0_256 = arith.constant 0 : index
    %c0_257 = arith.constant 0 : index
    %652 = vector.load %arg20[%c1_255, %c0_256, %c0_257] : memref<2x32x32xbf16, #tpu.memory_space<vmem>>, vector<1x32x32xbf16>
    %653 = vector.shape_cast %652 : vector<1x32x32xbf16> to vector<32x32xbf16>
    %cst_258 = arith.constant dense<0.000000e+00> : vector<32x32xf32>
    %654 = tpu.matmul %229, %653, %cst_258 {dimension_numbers = #tpu.dot_dimension_numbers<[1], [0], [0], [1], [0, 0, 1, 1], [], []>} : vector<32x32xbf16>, vector<32x32xbf16>, vector<32x32xf32> -> vector<32x32xf32>
    %c36 = arith.constant 36 : index
    %c0_259 = arith.constant 0 : index
    %655 = vector.load %arg25[%c36, %c0_259] : memref<44x32xf32, #tpu.memory_space<vmem>>, vector<1x32xf32>
    %656 = vector.broadcast %655 : vector<1x32xf32> to vector<32x32xf32>
    %657 = arith.addf %654, %656 : vector<32x32xf32>
    %c1_260 = arith.constant 1 : index
    %c0_261 = arith.constant 0 : index
    %c0_262 = arith.constant 0 : index
    %658 = vector.load %arg21[%c1_260, %c0_261, %c0_262] : memref<2x32x32xbf16, #tpu.memory_space<vmem>>, vector<1x32x32xbf16>
    %659 = vector.shape_cast %658 : vector<1x32x32xbf16> to vector<32x32xbf16>
    %cst_263 = arith.constant dense<0.000000e+00> : vector<32x32xf32>
    %660 = tpu.matmul %229, %659, %cst_263 {dimension_numbers = #tpu.dot_dimension_numbers<[1], [0], [0], [1], [0, 0, 1, 1], [], []>} : vector<32x32xbf16>, vector<32x32xbf16>, vector<32x32xf32> -> vector<32x32xf32>
    %c37 = arith.constant 37 : index
    %c0_264 = arith.constant 0 : index
    %661 = vector.load %arg25[%c37, %c0_264] : memref<44x32xf32, #tpu.memory_space<vmem>>, vector<1x32xf32>
    %662 = vector.broadcast %661 : vector<1x32xf32> to vector<32x32xf32>
    %663 = arith.addf %660, %662 : vector<32x32xf32>
    %664 = arith.truncf %657 : vector<32x32xf32> to vector<32x32xbf16>
    %cst_265 = arith.constant 0.000000e+00 : f32
    %665 = vector.shape_cast %5 : vector<1x32xi1> to vector<1x32xi1>
    %666 = vector.broadcast %665 : vector<1x32xi1> to vector<16x32xi1>
    %667 = vector.broadcast %cst_265 : f32 to vector<16x32xf32>
    %668 = arith.select %666, %651, %667 : vector<16x32xi1>, vector<16x32xf32>
    %cst_266 = arith.constant 0.000000e+00 : f32
    %669 = vector.shape_cast %10 : vector<1x32xi1> to vector<1x32xi1>
    %670 = vector.broadcast %669 : vector<1x32xi1> to vector<16x32xi1>
    %671 = vector.broadcast %cst_266 : f32 to vector<16x32xf32>
    %672 = arith.select %670, %651, %671 : vector<16x32xi1>, vector<16x32xf32>
    %cst_267 = arith.constant 0.000000e+00 : f32
    %673 = vector.shape_cast %15 : vector<1x32xi1> to vector<1x32xi1>
    %674 = vector.broadcast %673 : vector<1x32xi1> to vector<16x32xi1>
    %675 = vector.broadcast %cst_267 : f32 to vector<16x32xf32>
    %676 = arith.select %674, %651, %675 : vector<16x32xi1>, vector<16x32xf32>
    %cst_268 = arith.constant 0.000000e+00 : f32
    %677 = vector.shape_cast %20 : vector<1x32xi1> to vector<1x32xi1>
    %678 = vector.broadcast %677 : vector<1x32xi1> to vector<16x32xi1>
    %679 = vector.broadcast %cst_268 : f32 to vector<16x32xf32>
    %680 = arith.select %678, %651, %679 : vector<16x32xi1>, vector<16x32xf32>
    %681 = tpu.concatenate %668, %672, %676, %680 in 0 : vector<16x32xf32>, vector<16x32xf32>, vector<16x32xf32>, vector<16x32xf32> -> vector<64x32xf32>
    %682 = arith.truncf %681 : vector<64x32xf32> to vector<64x32xbf16>
    %cst_269 = arith.constant dense<0.000000e+00> : vector<64x32xf32>
    %683 = tpu.matmul %682, %664, %cst_269 {dimension_numbers = #tpu.dot_dimension_numbers<[1], [1], [0], [0], [0, 0, 1, 0], [], []>} : vector<64x32xbf16>, vector<32x32xbf16>, vector<64x32xf32> -> vector<64x32xf32>
    %cst_270 = arith.constant 0.353553385 : f32
    %684 = vector.broadcast %cst_270 : f32 to vector<64x32xf32>
    %685 = arith.mulf %683, %684 : vector<64x32xf32>
    %686 = arith.addf %685, %267 : vector<64x32xf32>
    %cst_271 = arith.constant dense<0xFF800000> : vector<64xf32>
    %687 = vector.multi_reduction <maximumf>, %686, %cst_271 [1] : vector<64x32xf32> to vector<64xf32>
    %688 = vector.shape_cast %687 : vector<64xf32> to vector<64x1xf32>
    %689 = vector.broadcast %688 : vector<64x1xf32> to vector<64x32xf32>
    %690 = arith.subf %686, %689 : vector<64x32xf32>
    %691 = math.exp %690 : vector<64x32xf32>
    %cst_272 = arith.constant dense<0.000000e+00> : vector<64xf32>
    %692 = vector.multi_reduction <add>, %691, %cst_272 [1] : vector<64x32xf32> to vector<64xf32>
    %693 = vector.shape_cast %692 : vector<64xf32> to vector<64x1xf32>
    %694 = tpu.reciprocal %693 {approx = true} : vector<64x1xf32> -> vector<64x1xf32>
    %695 = vector.broadcast %694 : vector<64x1xf32> to vector<64x32xf32>
    %696 = arith.mulf %691, %695 : vector<64x32xf32>
    %697 = arith.truncf %696 : vector<64x32xf32> to vector<64x32xbf16>
    %698 = arith.truncf %663 : vector<32x32xf32> to vector<32x32xbf16>
    %cst_273 = arith.constant dense<0.000000e+00> : vector<64x32xf32>
    %699 = tpu.matmul %697, %698, %cst_273 {dimension_numbers = #tpu.dot_dimension_numbers<[1], [0], [0], [1], [0, 0, 1, 1], [], []>} : vector<64x32xbf16>, vector<32x32xbf16>, vector<64x32xf32> -> vector<64x32xf32>
    %cst_274 = arith.constant 0.000000e+00 : f32
    %700 = vector.broadcast %cst_274 : f32 to vector<16x32xf32>
    %701 = vector.extract_strided_slice %699 {offsets = [0, 0], sizes = [16, 32], strides = [1, 1]} : vector<64x32xf32> to vector<16x32xf32>
    %cst_275 = arith.constant 0.000000e+00 : f32
    %702 = vector.shape_cast %5 : vector<1x32xi1> to vector<1x32xi1>
    %703 = vector.broadcast %702 : vector<1x32xi1> to vector<16x32xi1>
    %704 = vector.broadcast %cst_275 : f32 to vector<16x32xf32>
    %705 = arith.select %703, %701, %704 : vector<16x32xi1>, vector<16x32xf32>
    %706 = arith.addf %700, %705 : vector<16x32xf32>
    %707 = vector.extract_strided_slice %699 {offsets = [16, 0], sizes = [16, 32], strides = [1, 1]} : vector<64x32xf32> to vector<16x32xf32>
    %cst_276 = arith.constant 0.000000e+00 : f32
    %708 = vector.shape_cast %10 : vector<1x32xi1> to vector<1x32xi1>
    %709 = vector.broadcast %708 : vector<1x32xi1> to vector<16x32xi1>
    %710 = vector.broadcast %cst_276 : f32 to vector<16x32xf32>
    %711 = arith.select %709, %707, %710 : vector<16x32xi1>, vector<16x32xf32>
    %712 = arith.addf %706, %711 : vector<16x32xf32>
    %713 = vector.extract_strided_slice %699 {offsets = [32, 0], sizes = [16, 32], strides = [1, 1]} : vector<64x32xf32> to vector<16x32xf32>
    %cst_277 = arith.constant 0.000000e+00 : f32
    %714 = vector.shape_cast %15 : vector<1x32xi1> to vector<1x32xi1>
    %715 = vector.broadcast %714 : vector<1x32xi1> to vector<16x32xi1>
    %716 = vector.broadcast %cst_277 : f32 to vector<16x32xf32>
    %717 = arith.select %715, %713, %716 : vector<16x32xi1>, vector<16x32xf32>
    %718 = arith.addf %712, %717 : vector<16x32xf32>
    %719 = vector.extract_strided_slice %699 {offsets = [48, 0], sizes = [16, 32], strides = [1, 1]} : vector<64x32xf32> to vector<16x32xf32>
    %cst_278 = arith.constant 0.000000e+00 : f32
    %720 = vector.shape_cast %20 : vector<1x32xi1> to vector<1x32xi1>
    %721 = vector.broadcast %720 : vector<1x32xi1> to vector<16x32xi1>
    %722 = vector.broadcast %cst_278 : f32 to vector<16x32xf32>
    %723 = arith.select %721, %719, %722 : vector<16x32xi1>, vector<16x32xf32>
    %724 = arith.addf %718, %723 : vector<16x32xf32>
    %725 = arith.truncf %724 : vector<16x32xf32> to vector<16x32xbf16>
    %c1_279 = arith.constant 1 : index
    %c0_280 = arith.constant 0 : index
    %c0_281 = arith.constant 0 : index
    %726 = vector.load %arg22[%c1_279, %c0_280, %c0_281] : memref<2x32x32xbf16, #tpu.memory_space<vmem>>, vector<1x32x32xbf16>
    %727 = vector.shape_cast %726 : vector<1x32x32xbf16> to vector<32x32xbf16>
    %cst_282 = arith.constant dense<0.000000e+00> : vector<16x32xf32>
    %728 = tpu.matmul %725, %727, %cst_282 {dimension_numbers = #tpu.dot_dimension_numbers<[1], [0], [0], [1], [0, 0, 1, 1], [], []>} : vector<16x32xbf16>, vector<32x32xbf16>, vector<16x32xf32> -> vector<16x32xf32>
    %c38 = arith.constant 38 : index
    %c0_283 = arith.constant 0 : index
    %729 = vector.load %arg25[%c38, %c0_283] : memref<44x32xf32, #tpu.memory_space<vmem>>, vector<1x32xf32>
    %730 = vector.broadcast %729 : vector<1x32xf32> to vector<16x32xf32>
    %731 = arith.addf %728, %730 : vector<16x32xf32>
    %732 = arith.addf %644, %731 : vector<16x32xf32>
    %c39 = arith.constant 39 : index
    %c0_284 = arith.constant 0 : index
    %733 = vector.load %arg25[%c39, %c0_284] : memref<44x32xf32, #tpu.memory_space<vmem>>, vector<1x32xf32>
    %c40 = arith.constant 40 : index
    %c0_285 = arith.constant 0 : index
    %734 = vector.load %arg25[%c40, %c0_285] : memref<44x32xf32, #tpu.memory_space<vmem>>, vector<1x32xf32>
    %cst_286 = arith.constant dense<0.000000e+00> : vector<16xf32>
    %735 = vector.multi_reduction <add>, %732, %cst_286 [1] : vector<16x32xf32> to vector<16xf32>
    %736 = vector.shape_cast %735 : vector<16xf32> to vector<16x1xf32>
    %cst_287 = arith.constant 3.200000e+01 : f32
    %737 = vector.broadcast %cst_287 : f32 to vector<16x1xf32>
    %738 = arith.divf %736, %737 : vector<16x1xf32>
    %739 = vector.broadcast %738 : vector<16x1xf32> to vector<16x32xf32>
    %740 = arith.subf %732, %739 : vector<16x32xf32>
    %741 = arith.mulf %740, %740 : vector<16x32xf32>
    %cst_288 = arith.constant dense<0.000000e+00> : vector<16xf32>
    %742 = vector.multi_reduction <add>, %741, %cst_288 [1] : vector<16x32xf32> to vector<16xf32>
    %743 = vector.shape_cast %742 : vector<16xf32> to vector<16x1xf32>
    %cst_289 = arith.constant 3.200000e+01 : f32
    %744 = vector.broadcast %cst_289 : f32 to vector<16x1xf32>
    %745 = arith.divf %743, %744 : vector<16x1xf32>
    %746 = vector.broadcast %738 : vector<16x1xf32> to vector<16x32xf32>
    %747 = arith.subf %732, %746 : vector<16x32xf32>
    %cst_290 = arith.constant 9.99999974E-6 : f32
    %748 = vector.broadcast %cst_290 : f32 to vector<16x1xf32>
    %749 = arith.addf %745, %748 : vector<16x1xf32>
    %750 = math.rsqrt %749 : vector<16x1xf32>
    %751 = vector.broadcast %750 : vector<16x1xf32> to vector<16x32xf32>
    %752 = arith.mulf %747, %751 : vector<16x32xf32>
    %753 = vector.broadcast %733 : vector<1x32xf32> to vector<16x32xf32>
    %754 = arith.mulf %752, %753 : vector<16x32xf32>
    %755 = vector.broadcast %734 : vector<1x32xf32> to vector<16x32xf32>
    %756 = arith.addf %754, %755 : vector<16x32xf32>
    %757 = arith.truncf %756 : vector<16x32xf32> to vector<16x32xbf16>
    %c1_291 = arith.constant 1 : index
    %c0_292 = arith.constant 0 : index
    %c0_293 = arith.constant 0 : index
    %758 = vector.load %arg23[%c1_291, %c0_292, %c0_293] : memref<2x32x64xbf16, #tpu.memory_space<vmem>>, vector<1x32x64xbf16>
    %759 = vector.shape_cast %758 : vector<1x32x64xbf16> to vector<32x64xbf16>
    %cst_294 = arith.constant dense<0.000000e+00> : vector<16x64xf32>
    %760 = tpu.matmul %757, %759, %cst_294 {dimension_numbers = #tpu.dot_dimension_numbers<[1], [0], [0], [1], [0, 0, 1, 1], [], []>} : vector<16x32xbf16>, vector<32x64xbf16>, vector<16x64xf32> -> vector<16x64xf32>
    %c3_295 = arith.constant 3 : index
    %c0_296 = arith.constant 0 : index
    %761 = vector.load %arg26[%c3_295, %c0_296] : memref<4x64xf32, #tpu.memory_space<vmem>>, vector<1x64xf32>
    %762 = vector.broadcast %761 : vector<1x64xf32> to vector<16x64xf32>
    %763 = arith.addf %760, %762 : vector<16x64xf32>
    %cst_297 = arith.constant 0.000000e+00 : f32
    %764 = vector.broadcast %cst_297 : f32 to vector<16x64xf32>
    %765 = arith.maximumf %763, %764 : vector<16x64xf32>
    %766 = arith.truncf %765 : vector<16x64xf32> to vector<16x64xbf16>
    %c1_298 = arith.constant 1 : index
    %c0_299 = arith.constant 0 : index
    %c0_300 = arith.constant 0 : index
    %767 = vector.load %arg24[%c1_298, %c0_299, %c0_300] : memref<2x64x32xbf16, #tpu.memory_space<vmem>>, vector<1x64x32xbf16>
    %768 = vector.shape_cast %767 : vector<1x64x32xbf16> to vector<64x32xbf16>
    %cst_301 = arith.constant dense<0.000000e+00> : vector<16x32xf32>
    %769 = tpu.matmul %766, %768, %cst_301 {dimension_numbers = #tpu.dot_dimension_numbers<[1], [0], [0], [1], [0, 0, 1, 1], [], []>} : vector<16x64xbf16>, vector<64x32xbf16>, vector<16x32xf32> -> vector<16x32xf32>
    %c41 = arith.constant 41 : index
    %c0_302 = arith.constant 0 : index
    %770 = vector.load %arg25[%c41, %c0_302] : memref<44x32xf32, #tpu.memory_space<vmem>>, vector<1x32xf32>
    %771 = vector.broadcast %770 : vector<1x32xf32> to vector<16x32xf32>
    %772 = arith.addf %769, %771 : vector<16x32xf32>
    %773 = arith.addf %756, %772 : vector<16x32xf32>
    %c42 = arith.constant 42 : index
    %c0_303 = arith.constant 0 : index
    %774 = vector.load %arg25[%c42, %c0_303] : memref<44x32xf32, #tpu.memory_space<vmem>>, vector<1x32xf32>
    %c43 = arith.constant 43 : index
    %c0_304 = arith.constant 0 : index
    %775 = vector.load %arg25[%c43, %c0_304] : memref<44x32xf32, #tpu.memory_space<vmem>>, vector<1x32xf32>
    %cst_305 = arith.constant dense<0.000000e+00> : vector<16xf32>
    %776 = vector.multi_reduction <add>, %773, %cst_305 [1] : vector<16x32xf32> to vector<16xf32>
    %777 = vector.shape_cast %776 : vector<16xf32> to vector<16x1xf32>
    %cst_306 = arith.constant 3.200000e+01 : f32
    %778 = vector.broadcast %cst_306 : f32 to vector<16x1xf32>
    %779 = arith.divf %777, %778 : vector<16x1xf32>
    %780 = vector.broadcast %779 : vector<16x1xf32> to vector<16x32xf32>
    %781 = arith.subf %773, %780 : vector<16x32xf32>
    %782 = arith.mulf %781, %781 : vector<16x32xf32>
    %cst_307 = arith.constant dense<0.000000e+00> : vector<16xf32>
    %783 = vector.multi_reduction <add>, %782, %cst_307 [1] : vector<16x32xf32> to vector<16xf32>
    %784 = vector.shape_cast %783 : vector<16xf32> to vector<16x1xf32>
    %cst_308 = arith.constant 3.200000e+01 : f32
    %785 = vector.broadcast %cst_308 : f32 to vector<16x1xf32>
    %786 = arith.divf %784, %785 : vector<16x1xf32>
    %787 = vector.broadcast %779 : vector<16x1xf32> to vector<16x32xf32>
    %788 = arith.subf %773, %787 : vector<16x32xf32>
    %cst_309 = arith.constant 9.99999974E-6 : f32
    %789 = vector.broadcast %cst_309 : f32 to vector<16x1xf32>
    %790 = arith.addf %786, %789 : vector<16x1xf32>
    %791 = math.rsqrt %790 : vector<16x1xf32>
    %792 = vector.broadcast %791 : vector<16x1xf32> to vector<16x32xf32>
    %793 = arith.mulf %788, %792 : vector<16x32xf32>
    %794 = vector.broadcast %774 : vector<1x32xf32> to vector<16x32xf32>
    %795 = arith.mulf %793, %794 : vector<16x32xf32>
    %796 = vector.broadcast %775 : vector<1x32xf32> to vector<16x32xf32>
    %797 = arith.addf %795, %796 : vector<16x32xf32>
    %798 = arith.truncf %797 : vector<16x32xf32> to vector<16x32xbf16>
    %c0_310 = arith.constant 0 : index
    %c0_311 = arith.constant 0 : index
    %799 = vector.load %arg27[%c0_310, %c0_311] : memref<32x128xbf16, #tpu.memory_space<vmem>>, vector<32x128xbf16>
    %cst_312 = arith.constant dense<0.000000e+00> : vector<16x128xf32>
    %800 = tpu.matmul %798, %799, %cst_312 {dimension_numbers = #tpu.dot_dimension_numbers<[1], [0], [0], [1], [0, 0, 1, 1], [], []>} : vector<16x32xbf16>, vector<32x128xbf16>, vector<16x128xf32> -> vector<16x128xf32>
    %c0_313 = arith.constant 0 : index
    %c0_314 = arith.constant 0 : index
    %801 = vector.load %arg28[%c0_313, %c0_314] : memref<1x128xf32, #tpu.memory_space<vmem>>, vector<1x128xf32>
    %802 = vector.broadcast %801 : vector<1x128xf32> to vector<16x128xf32>
    %803 = arith.addf %800, %802 : vector<16x128xf32>
    %c0_315 = arith.constant 0 : index
    %c0_316 = arith.constant 0 : index
    %804 = vector.load %arg29[%c0_315, %c0_316] : memref<16x128xf32, #tpu.memory_space<vmem>>, vector<16x128xf32>
    tpu.vector_store %arg29[%c0_315, %c0_316], %803 {strides = array<i32>} : memref<16x128xf32, #tpu.memory_space<vmem>>, vector<16x128xf32>,
    return
  }
  func.func @transform_0(%arg0: i32) -> (i32, i32) {
    %c0_i32 = arith.constant 0 : i32
    %c0_i32_0 = arith.constant 0 : i32
    %c0_i32_1 = arith.constant 0 : i32
    return %c0_i32, %c0_i32_0 : i32, i32
  }
  func.func @transform_1(%arg0: i32) -> (i32, i32) {
    %c0_i32 = arith.constant 0 : i32
    %c0_i32_0 = arith.constant 0 : i32
    %c0_i32_1 = arith.constant 0 : i32
    return %c0_i32, %c0_i32_0 : i32, i32
  }
  func.func @transform_2(%arg0: i32) -> (i32, i32) {
    %c0_i32 = arith.constant 0 : i32
    %c0_i32_0 = arith.constant 0 : i32
    %c0_i32_1 = arith.constant 0 : i32
    return %c0_i32, %c0_i32_0 : i32, i32
  }
  func.func @transform_3(%arg0: i32) -> (i32, i32) {
    %c0_i32 = arith.constant 0 : i32
    %c0_i32_0 = arith.constant 0 : i32
    %c0_i32_1 = arith.constant 0 : i32
    return %c0_i32, %c0_i32_0 : i32, i32
  }
  func.func @transform_4(%arg0: i32) -> (i32, i32) {
    %c0_i32 = arith.constant 0 : i32
    %c0_i32_0 = arith.constant 0 : i32
    %c0_i32_1 = arith.constant 0 : i32
    return %c0_i32, %c0_i32_0 : i32, i32
  }
  func.func @transform_5(%arg0: i32) -> (i32, i32) {
    %c0_i32 = arith.constant 0 : i32
    %c0_i32_0 = arith.constant 0 : i32
    %c0_i32_1 = arith.constant 0 : i32
    return %c0_i32, %c0_i32_0 : i32, i32
  }
  func.func @transform_6(%arg0: i32) -> (i32, i32) {
    %c0_i32 = arith.constant 0 : i32
    %c0_i32_0 = arith.constant 0 : i32
    %c0_i32_1 = arith.constant 0 : i32
    return %c0_i32, %c0_i32_0 : i32, i32
  }
  func.func @transform_7(%arg0: i32) -> (i32, i32) {
    %c0_i32 = arith.constant 0 : i32
    %c0_i32_0 = arith.constant 0 : i32
    %c0_i32_1 = arith.constant 0 : i32
    return %c0_i32, %c0_i32_0 : i32, i32
  }
  func.func @transform_8(%arg0: i32) -> (i32, i32) {
    %c0_i32 = arith.constant 0 : i32
    %c0_i32_0 = arith.constant 0 : i32
    %c0_i32_1 = arith.constant 0 : i32
    return %c0_i32, %c0_i32_0 : i32, i32
  }
  func.func @transform_9(%arg0: i32) -> (i32, i32) {
    %c0_i32 = arith.constant 0 : i32
    %c0_i32_0 = arith.constant 0 : i32
    %c0_i32_1 = arith.constant 0 : i32
    return %c0_i32, %c0_i32_0 : i32, i32
  }
  func.func @transform_10(%arg0: i32) -> (i32, i32) {
    %c0_i32 = arith.constant 0 : i32
    %c0_i32_0 = arith.constant 0 : i32
    %c0_i32_1 = arith.constant 0 : i32
    return %c0_i32, %c0_i32_0 : i32, i32
  }
  func.func @transform_11(%arg0: i32) -> (i32, i32) {
    %c0_i32 = arith.constant 0 : i32
    %c0_i32_0 = arith.constant 0 : i32
    %c0_i32_1 = arith.constant 0 : i32
    return %c0_i32, %c0_i32_0 : i32, i32
  }
  func.func @transform_12(%arg0: i32) -> (i32, i32, i32) {
    %c0_i32 = arith.constant 0 : i32
    %c0_i32_0 = arith.constant 0 : i32
    %c0_i32_1 = arith.constant 0 : i32
    %c0_i32_2 = arith.constant 0 : i32
    return %c0_i32, %c0_i32_0, %c0_i32_1 : i32, i32, i32
  }
  func.func @transform_13(%arg0: i32) -> (i32, i32, i32) {
    %c0_i32 = arith.constant 0 : i32
    %c0_i32_0 = arith.constant 0 : i32
    %c0_i32_1 = arith.constant 0 : i32
    %c0_i32_2 = arith.constant 0 : i32
    return %c0_i32, %c0_i32_0, %c0_i32_1 : i32, i32, i32
  }
  func.func @transform_14(%arg0: i32) -> (i32, i32, i32) {
    %c0_i32 = arith.constant 0 : i32
    %c0_i32_0 = arith.constant 0 : i32
    %c0_i32_1 = arith.constant 0 : i32
    %c0_i32_2 = arith.constant 0 : i32
    return %c0_i32, %c0_i32_0, %c0_i32_1 : i32, i32, i32
  }
  func.func @transform_15(%arg0: i32) -> (i32, i32, i32) {
    %c0_i32 = arith.constant 0 : i32
    %c0_i32_0 = arith.constant 0 : i32
    %c0_i32_1 = arith.constant 0 : i32
    %c0_i32_2 = arith.constant 0 : i32
    return %c0_i32, %c0_i32_0, %c0_i32_1 : i32, i32, i32
  }
  func.func @transform_16(%arg0: i32) -> (i32, i32, i32) {
    %c0_i32 = arith.constant 0 : i32
    %c0_i32_0 = arith.constant 0 : i32
    %c0_i32_1 = arith.constant 0 : i32
    %c0_i32_2 = arith.constant 0 : i32
    return %c0_i32, %c0_i32_0, %c0_i32_1 : i32, i32, i32
  }
  func.func @transform_17(%arg0: i32) -> (i32, i32, i32) {
    %c0_i32 = arith.constant 0 : i32
    %c0_i32_0 = arith.constant 0 : i32
    %c0_i32_1 = arith.constant 0 : i32
    %c0_i32_2 = arith.constant 0 : i32
    return %c0_i32, %c0_i32_0, %c0_i32_1 : i32, i32, i32
  }
  func.func @transform_18(%arg0: i32) -> (i32, i32, i32) {
    %c0_i32 = arith.constant 0 : i32
    %c0_i32_0 = arith.constant 0 : i32
    %c0_i32_1 = arith.constant 0 : i32
    %c0_i32_2 = arith.constant 0 : i32
    return %c0_i32, %c0_i32_0, %c0_i32_1 : i32, i32, i32
  }
  func.func @transform_19(%arg0: i32) -> (i32, i32, i32) {
    %c0_i32 = arith.constant 0 : i32
    %c0_i32_0 = arith.constant 0 : i32
    %c0_i32_1 = arith.constant 0 : i32
    %c0_i32_2 = arith.constant 0 : i32
    return %c0_i32, %c0_i32_0, %c0_i32_1 : i32, i32, i32
  }
  func.func @transform_20(%arg0: i32) -> (i32, i32, i32) {
    %c0_i32 = arith.constant 0 : i32
    %c0_i32_0 = arith.constant 0 : i32
    %c0_i32_1 = arith.constant 0 : i32
    %c0_i32_2 = arith.constant 0 : i32
    return %c0_i32, %c0_i32_0, %c0_i32_1 : i32, i32, i32
  }
  func.func @transform_21(%arg0: i32) -> (i32, i32, i32) {
    %c0_i32 = arith.constant 0 : i32
    %c0_i32_0 = arith.constant 0 : i32
    %c0_i32_1 = arith.constant 0 : i32
    %c0_i32_2 = arith.constant 0 : i32
    return %c0_i32, %c0_i32_0, %c0_i32_1 : i32, i32, i32
  }
  func.func @transform_22(%arg0: i32) -> (i32, i32, i32) {
    %c0_i32 = arith.constant 0 : i32
    %c0_i32_0 = arith.constant 0 : i32
    %c0_i32_1 = arith.constant 0 : i32
    %c0_i32_2 = arith.constant 0 : i32
    return %c0_i32, %c0_i32_0, %c0_i32_1 : i32, i32, i32
  }
  func.func @transform_23(%arg0: i32) -> (i32, i32, i32) {
    %c0_i32 = arith.constant 0 : i32
    %c0_i32_0 = arith.constant 0 : i32
    %c0_i32_1 = arith.constant 0 : i32
    %c0_i32_2 = arith.constant 0 : i32
    return %c0_i32, %c0_i32_0, %c0_i32_1 : i32, i32, i32
  }
  func.func @transform_24(%arg0: i32) -> (i32, i32) {
    %c0_i32 = arith.constant 0 : i32
    %c0_i32_0 = arith.constant 0 : i32
    %c0_i32_1 = arith.constant 0 : i32
    return %c0_i32, %c0_i32_0 : i32, i32
  }
  func.func @transform_25(%arg0: i32) -> (i32, i32) {
    %c0_i32 = arith.constant 0 : i32
    %c0_i32_0 = arith.constant 0 : i32
    %c0_i32_1 = arith.constant 0 : i32
    return %c0_i32, %c0_i32_0 : i32, i32
  }
  func.func @transform_26(%arg0: i32) -> (i32, i32) {
    %c0_i32 = arith.constant 0 : i32
    %c0_i32_0 = arith.constant 0 : i32
    %c0_i32_1 = arith.constant 0 : i32
    return %c0_i32, %c0_i32_0 : i32, i32
  }
  func.func @transform_27(%arg0: i32) -> (i32, i32) {
    %c0_i32 = arith.constant 0 : i32
    %c0_i32_0 = arith.constant 0 : i32
    %c0_i32_1 = arith.constant 0 : i32
    return %c0_i32, %c0_i32_0 : i32, i32
  }
  func.func @transform_28(%arg0: i32) -> (i32, i32) {
    %c0_i32 = arith.constant 0 : i32
    %c0_i32_0 = arith.constant 0 : i32
    %c0_i32_1 = arith.constant 0 : i32
    return %c0_i32, %c0_i32_0 : i32, i32
  }
}

</mosaic_0001>

<llo_original>
// kernel: ne.25
$region0: #{ne.25}
  %s0 = inlined_call_operand.vmem [shape: s32[2,16], index: 0, kind: input, shape index: {}]
  %s1 = inlined_call_operand.vmem [shape: s32[32], index: 1, kind: output, shape index: {}]
  $region1: #{ne.25} parent=0
    #allocation0 [shape = 'u8[4096]{0}', space=vmem, size = 0x1000, scoped, tag = 'scoped mem for output reshape']
    #allocation1 [shape = 'u8[4096]{0}', space=vmem, size = 0x1000, scoped, tag = 'scoped mem for input reshape']
    %s3 = ssub.s32 4, 1
    %v4 = vld [vmem:[%s0] sm:%s3]
    %5 = vst [vmem:[#allocation1] sm:%s3] %v4
    %v6 = vld [vmem:[#allocation1] sm:$0x1]
    %vm7 = vcmask 130048
    %8 = vst.msk [vmem:[#allocation0] sm:$0x1] %vm7, %v6
    %s9 = scalar_lea.vmem [#allocation1], 1
    %v10 = vld [vmem:[%s9] sm:$0x1]
    %11 = vrot.lane.b32.xlu0 %v10, 16
    %v12 = vpop.permute.xlu0 %11
    %vm13 = vcmask 261248
    %14 = vst.msk [vmem:[#allocation0] sm:$0x1] %vm13, %v12
    %s16 = ssub.s32 2, 1
    %v17 = vld [vmem:[#allocation0] sm:%s16]
    %s19 = ssub.s32 2, 1
    %20 = vst [vmem:[%s1] sm:%s19] %v17

// kernel: ne.15
$region0: #{ne.15}
  %s0 = inlined_call_operand.vmem [shape: s32[2,8], index: 0, kind: input, shape index: {}]
  %s1 = inlined_call_operand.vmem [shape: s32[16], index: 1, kind: output, shape index: {}]
  $region1: #{ne.15} parent=0
    #allocation0 [shape = 'u8[4096]{0}', space=vmem, size = 0x1000, scoped, tag = 'scoped mem for output reshape']
    #allocation1 [shape = 'u8[4096]{0}', space=vmem, size = 0x1000, scoped, tag = 'scoped mem for input reshape']
    %s3 = ssub.s32 4, 1
    %v4 = vld [vmem:[%s0] sm:%s3]
    %5 = vst [vmem:[#allocation1] sm:%s3] %v4
    %v6 = vld [vmem:[#allocation1] sm:$0x1]
    %vm7 = vcmask 64512
    %8 = vst.msk [vmem:[#allocation0] sm:$0x1] %vm7, %v6
    %s9 = scalar_lea.vmem [#allocation1], 1
    %v10 = vld [vmem:[%s9] sm:$0x1]
    %11 = vrot.lane.b32.xlu0 %v10, 8
    %v12 = vpop.permute.xlu0 %11
    %vm13 = vcmask 130112
    %14 = vst.msk [vmem:[#allocation0] sm:$0x1] %vm13, %v12
    %s16 = ssub.s32 2, 1
    %v17 = vld [vmem:[#allocation0] sm:%s16]
    %s19 = ssub.s32 2, 1
    %20 = vst [vmem:[%s1] sm:%s19] %v17

// kernel: tile.8
$region0: #{tile.8}
  #allocation0 [shape = 's32[1]{0}', space=sflag, size = 0x4, scoped, tag = 'scoped memory for tile.8']
  %s0 = inlined_call_operand.vmem [shape: pred[8,8], index: 0, kind: input, shape index: {}]
  %s1 = inlined_call_operand.vmem [shape: pred[2,8,2,8], index: 1, kind: output, shape index: {}]
  // Predicated region
  $region2: #{tile.8} parent=0 // pred_check
    _
  $region3: #{tile.8} parent=0 // pred_check_branch
    %3 = sbr.rel (0) target = $region5
  $region4: #{tile.8} parent=0 // pred_region
    _
  $region5: #{tile.8} parent=0 // pred_fallthru
    _
  %v4 = vld [vmem:[%s0] ss:$0 sm:$0xff]
  %v6 = vshra.s32 %v4, 0
  %v7 = vand.u32 %v6, 255
  %v8 = vpack.c.b16 0, %v7
  %v9 = vpack.c.b8 0, %v8
  %s11 = ssub.s32 2, 1
  %12 = vst [vmem:[%s1] sm:%s11] %v9
  %s13 = scalar_lea.vmem %s1, 8
  %v14 = vpack.c.b16 0, %v7
  %v15 = vpack.c.b8 0, %v14
  %s17 = ssub.s32 2, 1
  %18 = vst [vmem:[%s13] sm:%s17] %v15
  %v19 = vld [vmem:[%s0] ss:$0 sm:$0xff]
  %v21 = vshra.s32 %v19, 8
  %v22 = vand.u32 %v21, 255
  %s23 = scalar_lea.vmem %s1, 1
  %v24 = vpack.c.b16 0, %v22
  %v25 = vpack.c.b8 0, %v24
  %s27 = ssub.s32 2, 1
  %28 = vst [vmem:[%s23] sm:%s27] %v25
  %s29 = scalar_lea.vmem %s1, 9
  %v30 = vpack.c.b16 0, %v22
  %v31 = vpack.c.b8 0, %v30
  %s33 = ssub.s32 2, 1
  %34 = vst [vmem:[%s29] sm:%s33] %v31
  %v35 = vld [vmem:[%s0] ss:$0 sm:$0xff]
  %v37 = vshra.s32 %v35, 16
  %v38 = vand.u32 %v37, 255
  %s39 = scalar_lea.vmem %s1, 2
  %v40 = vpack.c.b16 0, %v38
  %v41 = vpack.c.b8 0, %v40
  %s43 = ssub.s32 2, 1
  %44 = vst [vmem:[%s39] sm:%s43] %v41
  %s45 = scalar_lea.vmem %s1, 10
  %v46 = vpack.c.b16 0, %v38
  %v47 = vpack.c.b8 0, %v46
  %s49 = ssub.s32 2, 1
  %50 = vst [vmem:[%s45] sm:%s49] %v47
  %v51 = vld [vmem:[%s0] ss:$0 sm:$0xff]
  %v53 = vshra.s32 %v51, 24
  %v54 = vand.u32 %v53, 255
  %s55 = scalar_lea.vmem %s1, 3
  %v56 = vpack.c.b16 0, %v54
  %v57 = vpack.c.b8 0, %v56
  %s59 = ssub.s32 2, 1
  %60 = vst [vmem:[%s55] sm:%s59] %v57
  %s61 = scalar_lea.vmem %s1, 11
  %v62 = vpack.c.b16 0, %v54
  %v63 = vpack.c.b8 0, %v62
  %s65 = ssub.s32 2, 1
  %66 = vst [vmem:[%s61] sm:%s65] %v63
  %s67 = scalar_lea.vmem %s0, 1
  %v68 = vld [vmem:[%s67] ss:$0 sm:$0xff]
  %v70 = vshra.s32 %v68, 0
  %v71 = vand.u32 %v70, 255
  %s72 = scalar_lea.vmem %s1, 4
  %v73 = vpack.c.b16 0, %v71
  %v74 = vpack.c.b8 0, %v73
  %s76 = ssub.s32 2, 1
  %77 = vst [vmem:[%s72] sm:%s76] %v74
  %s78 = scalar_lea.vmem %s1, 12
  %v79 = vpack.c.b16 0, %v71
  %v80 = vpack.c.b8 0, %v79
  %s82 = ssub.s32 2, 1
  %83 = vst [vmem:[%s78] sm:%s82] %v80
  %s84 = scalar_lea.vmem %s0, 1
  %v85 = vld [vmem:[%s84] ss:$0 sm:$0xff]
  %v87 = vshra.s32 %v85, 8
  %v88 = vand.u32 %v87, 255
  %s89 = scalar_lea.vmem %s1, 5
  %v90 = vpack.c.b16 0, %v88
  %v91 = vpack.c.b8 0, %v90
  %s93 = ssub.s32 2, 1
  %94 = vst [vmem:[%s89] sm:%s93] %v91
  %s95 = scalar_lea.vmem %s1, 13
  %v96 = vpack.c.b16 0, %v88
  %v97 = vpack.c.b8 0, %v96
  %s99 = ssub.s32 2, 1
  %100 = vst [vmem:[%s95] sm:%s99] %v97
  %s101 = scalar_lea.vmem %s0, 1
  %v102 = vld [vmem:[%s101] ss:$0 sm:$0xff]
  %v104 = vshra.s32 %v102, 16
  %v105 = vand.u32 %v104, 255
  %s106 = scalar_lea.vmem %s1, 6
  %v107 = vpack.c.b16 0, %v105
  %v108 = vpack.c.b8 0, %v107
  %s110 = ssub.s32 2, 1
  %111 = vst [vmem:[%s106] sm:%s110] %v108
  %s112 = scalar_lea.vmem %s1, 14
  %v113 = vpack.c.b16 0, %v105
  %v114 = vpack.c.b8 0, %v113
  %s116 = ssub.s32 2, 1
  %117 = vst [vmem:[%s112] sm:%s116] %v114
  %s118 = scalar_lea.vmem %s0, 1
  %v119 = vld [vmem:[%s118] ss:$0 sm:$0xff]
  %v121 = vshra.s32 %v119, 24
  %v122 = vand.u32 %v121, 255
  %s123 = scalar_lea.vmem %s1, 7
  %v124 = vpack.c.b16 0, %v122
  %v125 = vpack.c.b8 0, %v124
  %s127 = ssub.s32 2, 1
  %128 = vst [vmem:[%s123] sm:%s127] %v125
  %s129 = scalar_lea.vmem %s1, 15
  %v130 = vpack.c.b16 0, %v122
  %v131 = vpack.c.b8 0, %v130
  %s133 = ssub.s32 2, 1
  %134 = vst [vmem:[%s129] sm:%s133] %v131

// kernel: tile.9
$region0: #{tile.9}
  %s0 = inlined_call_operand.vmem [shape: pred[2,8,2,8], index: 0, kind: input, shape index: {}]
  %s1 = inlined_call_operand.vmem [shape: pred[16,16], index: 1, kind: output, shape index: {}]
  $region1: #{tile.9} parent=0
    #allocation0 [shape = 'u8[8192]{0}', space=vmem, size = 0x2000, scoped, tag = 'scoped mem for output reshape']
    #allocation1 [shape = 'u8[65536]{0}', space=vmem, size = 0x10000, scoped, tag = 'scoped mem for input reshape']
    %s3 = ssub.s32 16, 1
    %s4 = sand.u32 %s3, 15
    %p5 = scmp.ne.s32.totalorder %s4, 0
    %s6 = scalar_select %p5, 1, 0
    %s7 = sand.u32 %s3, 240
    %p8 = scmp.ne.s32.totalorder %s7, 0
    %s9 = scalar_select %p8, 2, 0
    %s10 = sor.u32 %s6, %s9
    %s11 = scalar_lea.vmem %s0, 15
    %v12 = vld [vmem:[%s11] sm:%s10]
    %v13 = vunpack.c.0.s8 %v12
    %v14 = vunpack.c.1.s8 %v12
    %v15 = vunpack.c.2.s8 %v12
    %v16 = vunpack.c.3.s8 %v12
    %s17 = scalar_lea.vmem [#allocation1], 120
    %18 = vst [vmem:[%s17] sm:%s3] %v13
    %s19 = sand.u32 %s3, 15
    %p20 = scmp.ne.s32.totalorder %s19, 0
    %s21 = scalar_select %p20, 1, 0
    %s22 = sand.u32 %s3, 240
    %p23 = scmp.ne.s32.totalorder %s22, 0
    %s24 = scalar_select %p23, 2, 0
    %s25 = sor.u32 %s21, %s24
    %s26 = scalar_lea.vmem %s0, 14
    %v27 = vld [vmem:[%s26] sm:%s25]
    %v28 = vunpack.c.0.s8 %v27
    %v29 = vunpack.c.1.s8 %v27
    %v30 = vunpack.c.2.s8 %v27
    %v31 = vunpack.c.3.s8 %v27
    %s32 = scalar_lea.vmem [#allocation1], 112
    %33 = vst [vmem:[%s32] sm:%s3] %v28
    %s34 = sand.u32 %s3, 15
    %p35 = scmp.ne.s32.totalorder %s34, 0
    %s36 = scalar_select %p35, 1, 0
    %s37 = sand.u32 %s3, 240
    %p38 = scmp.ne.s32.totalorder %s37, 0
    %s39 = scalar_select %p38, 2, 0
    %s40 = sor.u32 %s36, %s39
    %s41 = scalar_lea.vmem %s0, 13
    %v42 = vld [vmem:[%s41] sm:%s40]
    %v43 = vunpack.c.0.s8 %v42
    %v44 = vunpack.c.1.s8 %v42
    %v45 = vunpack.c.2.s8 %v42
    %v46 = vunpack.c.3.s8 %v42
    %s47 = scalar_lea.vmem [#allocation1], 104
    %48 = vst [vmem:[%s47] sm:%s3] %v43
    %s49 = sand.u32 %s3, 15
    %p50 = scmp.ne.s32.totalorder %s49, 0
    %s51 = scalar_select %p50, 1, 0
    %s52 = sand.u32 %s3, 240
    %p53 = scmp.ne.s32.totalorder %s52, 0
    %s54 = scalar_select %p53, 2, 0
    %s55 = sor.u32 %s51, %s54
    %s56 = scalar_lea.vmem %s0, 12
    %v57 = vld [vmem:[%s56] sm:%s55]
    %v58 = vunpack.c.0.s8 %v57
    %v59 = vunpack.c.1.s8 %v57
    %v60 = vunpack.c.2.s8 %v57
    %v61 = vunpack.c.3.s8 %v57
    %s62 = scalar_lea.vmem [#allocation1], 96
    %63 = vst [vmem:[%s62] sm:%s3] %v58
    %s64 = sand.u32 %s3, 15
    %p65 = scmp.ne.s32.totalorder %s64, 0
    %s66 = scalar_select %p65, 1, 0
    %s67 = sand.u32 %s3, 240
    %p68 = scmp.ne.s32.totalorder %s67, 0
    %s69 = scalar_select %p68, 2, 0
    %s70 = sor.u32 %s66, %s69
    %s71 = scalar_lea.vmem %s0, 11
    %v72 = vld [vmem:[%s71] sm:%s70]
    %v73 = vunpack.c.0.s8 %v72
    %v74 = vunpack.c.1.s8 %v72
    %v75 = vunpack.c.2.s8 %v72
    %v76 = vunpack.c.3.s8 %v72
    %s77 = scalar_lea.vmem [#allocation1], 88
    %78 = vst [vmem:[%s77] sm:%s3] %v73
    %s79 = sand.u32 %s3, 15
    %p80 = scmp.ne.s32.totalorder %s79, 0
    %s81 = scalar_select %p80, 1, 0
    %s82 = sand.u32 %s3, 240
    %p83 = scmp.ne.s32.totalorder %s82, 0
    %s84 = scalar_select %p83, 2, 0
    %s85 = sor.u32 %s81, %s84
    %s86 = scalar_lea.vmem %s0, 10
    %v87 = vld [vmem:[%s86] sm:%s85]
    %v88 = vunpack.c.0.s8 %v87
    %v89 = vunpack.c.1.s8 %v87
    %v90 = vunpack.c.2.s8 %v87
    %v91 = vunpack.c.3.s8 %v87
    %s92 = scalar_lea.vmem [#allocation1], 80
    %93 = vst [vmem:[%s92] sm:%s3] %v88
    %s94 = sand.u32 %s3, 15
    %p95 = scmp.ne.s32.totalorder %s94, 0
    %s96 = scalar_select %p95, 1, 0
    %s97 = sand.u32 %s3, 240
    %p98 = scmp.ne.s32.totalorder %s97, 0
    %s99 = scalar_select %p98, 2, 0
    %s100 = sor.u32 %s96, %s99
    %s101 = scalar_lea.vmem %s0, 9
    %v102 = vld [vmem:[%s101] sm:%s100]
    %v103 = vunpack.c.0.s8 %v102
    %v104 = vunpack.c.1.s8 %v102
    %v105 = vunpack.c.2.s8 %v102
    %v106 = vunpack.c.3.s8 %v102
    %s107 = scalar_lea.vmem [#allocation1], 72
    %108 = vst [vmem:[%s107] sm:%s3] %v103
    %s109 = sand.u32 %s3, 15
    %p110 = scmp.ne.s32.totalorder %s109, 0
    %s111 = scalar_select %p110, 1, 0
    %s112 = sand.u32 %s3, 240
    %p113 = scmp.ne.s32.totalorder %s112, 0
    %s114 = scalar_select %p113, 2, 0
    %s115 = sor.u32 %s111, %s114
    %s116 = scalar_lea.vmem %s0, 8
    %v117 = vld [vmem:[%s116] sm:%s115]
    %v118 = vunpack.c.0.s8 %v117
    %v119 = vunpack.c.1.s8 %v117
    %v120 = vunpack.c.2.s8 %v117
    %v121 = vunpack.c.3.s8 %v117
    %s122 = scalar_lea.vmem [#allocation1], 64
    %123 = vst [vmem:[%s122] sm:%s3] %v118
    %s124 = sand.u32 %s3, 15
    %p125 = scmp.ne.s32.totalorder %s124, 0
    %s126 = scalar_select %p125, 1, 0
    %s127 = sand.u32 %s3, 240
    %p128 = scmp.ne.s32.totalorder %s127, 0
    %s129 = scalar_select %p128, 2, 0
    %s130 = sor.u32 %s126, %s129
    %s131 = scalar_lea.vmem %s0, 7
    %v132 = vld [vmem:[%s131] sm:%s130]
    %v133 = vunpack.c.0.s8 %v132
    %v134 = vunpack.c.1.s8 %v132
    %v135 = vunpack.c.2.s8 %v132
    %v136 = vunpack.c.3.s8 %v132
    %s137 = scalar_lea.vmem [#allocation1], 56
    %138 = vst [vmem:[%s137] sm:%s3] %v133
    %s139 = sand.u32 %s3, 15
    %p140 = scmp.ne.s32.totalorder %s139, 0
    %s141 = scalar_select %p140, 1, 0
    %s142 = sand.u32 %s3, 240
    %p143 = scmp.ne.s32.totalorder %s142, 0
    %s144 = scalar_select %p143, 2, 0
    %s145 = sor.u32 %s141, %s144
    %s146 = scalar_lea.vmem %s0, 6
    %v147 = vld [vmem:[%s146] sm:%s145]
    %v148 = vunpack.c.0.s8 %v147
    %v149 = vunpack.c.1.s8 %v147
    %v150 = vunpack.c.2.s8 %v147
    %v151 = vunpack.c.3.s8 %v147
    %s152 = scalar_lea.vmem [#allocation1], 48
    %153 = vst [vmem:[%s152] sm:%s3] %v148
    %s154 = sand.u32 %s3, 15
    %p155 = scmp.ne.s32.totalorder %s154, 0
    %s156 = scalar_select %p155, 1, 0
    %s157 = sand.u32 %s3, 240
    %p158 = scmp.ne.s32.totalorder %s157, 0
    %s159 = scalar_select %p158, 2, 0
    %s160 = sor.u32 %s156, %s159
    %s161 = scalar_lea.vmem %s0, 5
    %v162 = vld [vmem:[%s161] sm:%s160]
    %v163 = vunpack.c.0.s8 %v162
    %v164 = vunpack.c.1.s8 %v162
    %v165 = vunpack.c.2.s8 %v162
    %v166 = vunpack.c.3.s8 %v162
    %s167 = scalar_lea.vmem [#allocation1], 40
    %168 = vst [vmem:[%s167] sm:%s3] %v163
    %s169 = sand.u32 %s3, 15
    %p170 = scmp.ne.s32.totalorder %s169, 0
    %s171 = scalar_select %p170, 1, 0
    %s172 = sand.u32 %s3, 240
    %p173 = scmp.ne.s32.totalorder %s172, 0
    %s174 = scalar_select %p173, 2, 0
    %s175 = sor.u32 %s171, %s174
    %s176 = scalar_lea.vmem %s0, 4
    %v177 = vld [vmem:[%s176] sm:%s175]
    %v178 = vunpack.c.0.s8 %v177
    %v179 = vunpack.c.1.s8 %v177
    %v180 = vunpack.c.2.s8 %v177
    %v181 = vunpack.c.3.s8 %v177
    %s182 = scalar_lea.vmem [#allocation1], 32
    %183 = vst [vmem:[%s182] sm:%s3] %v178
    %s184 = sand.u32 %s3, 15
    %p185 = scmp.ne.s32.totalorder %s184, 0
    %s186 = scalar_select %p185, 1, 0
    %s187 = sand.u32 %s3, 240
    %p188 = scmp.ne.s32.totalorder %s187, 0
    %s189 = scalar_select %p188, 2, 0
    %s190 = sor.u32 %s186, %s189
    %s191 = scalar_lea.vmem %s0, 3
    %v192 = vld [vmem:[%s191] sm:%s190]
    %v193 = vunpack.c.0.s8 %v192
    %v194 = vunpack.c.1.s8 %v192
    %v195 = vunpack.c.2.s8 %v192
    %v196 = vunpack.c.3.s8 %v192
    %s197 = scalar_lea.vmem [#allocation1], 24
    %198 = vst [vmem:[%s197] sm:%s3] %v193
    %s199 = sand.u32 %s3, 15
    %p200 = scmp.ne.s32.totalorder %s199, 0
    %s201 = scalar_select %p200, 1, 0
    %s202 = sand.u32 %s3, 240
    %p203 = scmp.ne.s32.totalorder %s202, 0
    %s204 = scalar_select %p203, 2, 0
    %s205 = sor.u32 %s201, %s204
    %s206 = scalar_lea.vmem %s0, 2
    %v207 = vld [vmem:[%s206] sm:%s205]
    %v208 = vunpack.c.0.s8 %v207
    %v209 = vunpack.c.1.s8 %v207
    %v210 = vunpack.c.2.s8 %v207
    %v211 = vunpack.c.3.s8 %v207
    %s212 = scalar_lea.vmem [#allocation1], 16
    %213 = vst [vmem:[%s212] sm:%s3] %v208
    %s214 = sand.u32 %s3, 15
    %p215 = scmp.ne.s32.totalorder %s214, 0
    %s216 = scalar_select %p215, 1, 0
    %s217 = sand.u32 %s3, 240
    %p218 = scmp.ne.s32.totalorder %s217, 0
    %s219 = scalar_select %p218, 2, 0
    %s220 = sor.u32 %s216, %s219
    %s221 = scalar_lea.vmem %s0, 1
    %v222 = vld [vmem:[%s221] sm:%s220]
    %v223 = vunpack.c.0.s8 %v222
    %v224 = vunpack.c.1.s8 %v222
    %v225 = vunpack.c.2.s8 %v222
    %v226 = vunpack.c.3.s8 %v222
    %s227 = scalar_lea.vmem [#allocation1], 8
    %228 = vst [vmem:[%s227] sm:%s3] %v223
    %s229 = sand.u32 %s3, 15
    %p230 = scmp.ne.s32.totalorder %s229, 0
    %s231 = scalar_select %p230, 1, 0
    %s232 = sand.u32 %s3, 240
    %p233 = scmp.ne.s32.totalorder %s232, 0
    %s234 = scalar_select %p233, 2, 0
    %s235 = sor.u32 %s231, %s234
    %v236 = vld [vmem:[%s0] sm:%s235]
    %v237 = vunpack.c.0.s8 %v236
    %v238 = vunpack.c.1.s8 %v236
    %v239 = vunpack.c.2.s8 %v236
    %v240 = vunpack.c.3.s8 %v236
    %241 = vst [vmem:[#allocation1] sm:%s3] %v237
    %v242 = vld [vmem:[#allocation1] ss:$8 sm:$0xf]
    %v243 = vld [vmem:[#allocation1] ss:$8 sm:$0xf0]
    %vm244 = vcmask 1047556
    %v245 = vsel %vm244, %v243, %v242
    %vm246 = vcmask 64512
    %247 = vst.msk [vmem:[#allocation0] sm:$0xff] %vm246, %v245
    %s248 = scalar_lea.vmem [#allocation1], 64
    %v249 = vld [vmem:[%s248] ss:$8 sm:$0xf]
    %s250 = scalar_lea.vmem [#allocation1], 64
    %v251 = vld [vmem:[%s250] ss:$8 sm:$0xf0]
    %vm252 = vcmask 1047556
    %v253 = vsel %vm252, %v251, %v249
    %vm254 = vcmask 64512
    %s255 = scalar_lea.vmem [#allocation0], 8
    %256 = vst.msk [vmem:[%s255] sm:$0xff] %vm254, %v253
    %s257 = scalar_lea.vmem [#allocation1], 1
    %v258 = vld [vmem:[%s257] ss:$8 sm:$0xf]
    %s259 = scalar_lea.vmem [#allocation1], 1
    %v260 = vld [vmem:[%s259] ss:$8 sm:$0xf0]
    %vm261 = vcmask 1047556
    %v262 = vsel %vm261, %v260, %v258
    %263 = vrot.lane.b32.xlu0 %v262, 8
    %v264 = vpop.permute.xlu0 %263
    %vm265 = vcmask 130112
    %266 = vst.msk [vmem:[#allocation0] sm:$0xff] %vm265, %v264
    %s267 = scalar_lea.vmem [#allocation1], 65
    %v268 = vld [vmem:[%s267] ss:$8 sm:$0xf]
    %s269 = scalar_lea.vmem [#allocation1], 65
    %v270 = vld [vmem:[%s269] ss:$8 sm:$0xf0]
    %vm271 = vcmask 1047556
    %v272 = vsel %vm271, %v270, %v268
    %273 = vrot.lane.b32.xlu0 %v272, 8
    %v274 = vpop.permute.xlu0 %273
    %vm275 = vcmask 130112
    %s276 = scalar_lea.vmem [#allocation0], 8
    %277 = vst.msk [vmem:[%s276] sm:$0xff] %vm275, %v274
    %s279 = ssub.s32 256, 1
    %v280 = vld [vmem:[#allocation0] sm:%s279]
    %s282 = ssub.s32 4, 1
    %v283 = vpack.c.b16 0, %v280
    %v284 = vpack.c.b8 0, %v283
    %285 = vst [vmem:[%s1] sm:%s282] %v284
    %s286 = scalar_lea.vmem [#allocation0], 8
    %v287 = vld [vmem:[%s286] sm:%s279]
    %s289 = ssub.s32 4, 1
    %s290 = scalar_lea.vmem %s1, 2
    %v291 = vpack.c.b16 0, %v287
    %v292 = vpack.c.b8 0, %v291
    %293 = vst [vmem:[%s290] sm:%s289] %v292

// kernel: fnet_forward.1
$region0: #{fnet_forward.1}
  #allocation0 [shape = 'u32[]', space=smem, size = 0x4, offset = 0x4, fixed_abs, tag = 'smem constant byte address 0x4 - core index']
  #allocation1 [shape = 'u32[72,128]{1,0:T(1,128)}', space=vmem, size = 0x9000, scoped, tag = 'internal scratch']
  %s0 = inlined_call_operand.vmem [shape: s32[32,1], index: 0, kind: input, shape index: {}]
  %s1 = inlined_call_operand.vmem [shape: s32[16,1], index: 1, kind: input, shape index: {}]
  %s2 = inlined_call_operand.vmem [shape: f32[16,16], index: 2, kind: input, shape index: {}]
  %s3 = inlined_call_operand.vmem [shape: f32[16,32], index: 3, kind: input, shape index: {}]
  %s4 = inlined_call_operand.vmem [shape: f32[50,32], index: 4, kind: input, shape index: {}]
  %s5 = inlined_call_operand.vmem [shape: f32[32,32], index: 5, kind: input, shape index: {}]
  %s6 = inlined_call_operand.vmem [shape: f32[40,32], index: 6, kind: input, shape index: {}]
  %s7 = inlined_call_operand.vmem [shape: f32[16,32], index: 7, kind: input, shape index: {}]
  %s8 = inlined_call_operand.vmem [shape: bf16[32,32], index: 8, kind: input, shape index: {}]
  %s9 = inlined_call_operand.vmem [shape: bf16[32,32], index: 9, kind: input, shape index: {}]
  %s10 = inlined_call_operand.vmem [shape: bf16[32,32], index: 10, kind: input, shape index: {}]
  %s11 = inlined_call_operand.hbm [shape: bf16[32,32], index: 11, kind: input, shape index: {}]
  %s12 = inlined_call_operand.vmem [shape: bf16[2,32,64], index: 12, kind: input, shape index: {}]
  %s13 = inlined_call_operand.vmem [shape: bf16[2,64,32], index: 13, kind: input, shape index: {}]
  %s14 = inlined_call_operand.vmem [shape: bf16[2,32,32], index: 14, kind: input, shape index: {}]
  %s15 = inlined_call_operand.vmem [shape: bf16[2,32,32], index: 15, kind: input, shape index: {}]
  %s16 = inlined_call_operand.vmem [shape: bf16[2,32,32], index: 16, kind: input, shape index: {}]
  %s17 = inlined_call_operand.vmem [shape: bf16[2,32,32], index: 17, kind: input, shape index: {}]
  %s18 = inlined_call_operand.vmem [shape: bf16[2,32,32], index: 18, kind: input, shape index: {}]
  %s19 = inlined_call_operand.vmem [shape: bf16[2,32,32], index: 19, kind: input, shape index: {}]
  %s20 = inlined_call_operand.vmem [shape: bf16[2,32,32], index: 20, kind: input, shape index: {}]
  %s21 = inlined_call_operand.vmem [shape: bf16[2,32,32], index: 21, kind: input, shape index: {}]
  %s22 = inlined_call_operand.vmem [shape: bf16[2,32,64], index: 22, kind: input, shape index: {}]
  %s23 = inlined_call_operand.vmem [shape: bf16[2,64,32], index: 23, kind: input, shape index: {}]
  %s24 = inlined_call_operand.vmem [shape: f32[44,32], index: 24, kind: input, shape index: {}]
  %s25 = inlined_call_operand.vmem [shape: f32[4,64], index: 25, kind: input, shape index: {}]
  %s26 = inlined_call_operand.vmem [shape: bf16[32,128], index: 26, kind: input, shape index: {}]
  %s27 = inlined_call_operand.vmem [shape: f32[1,128], index: 27, kind: input, shape index: {}]
  %s28 = inlined_call_operand.vmem [shape: f32[16,128], index: 28, kind: output, shape index: {}]
  %s29 = sld [smem:[#allocation0]]
  $region126: #{fnet_forward.1} parent=0
    _
  %s31 = ssub.s32 1, %s29
  %s32 = scalar_select 0, %s31, %s29
  $region1: #{fnet_forward.1} parent=0
    #allocation2 [shape = 'u8[8192]{0}', space=vmem, size = 0x2000, scoped, tag = 'input window, operand 11, single buffered']
    #allocation3 [shape = 's32[1]{0}', space=sflag, size = 0x4, scoped, tag = 'scoped memory for fnet_forward.1']
    %33 = vsyncpa [#allocation3], 0
    // Predicated region
    $region2: #{fnet_forward.1} parent=1 // pred_check
      _
    $region3: #{fnet_forward.1} parent=1 // pred_check_branch
      %35 = sbr.rel (0) target = $region5
    $region4: #{fnet_forward.1} parent=1 // pred_region
      _
    $region5: #{fnet_forward.1} parent=1 // pred_fallthru
      _
    // Predicated region
    $region6: #{fnet_forward.1} parent=1 // pred_check
      _
    $region7: #{fnet_forward.1} parent=1 // pred_check_branch
      %37 = sbr.rel (0) target = $region9
    $region8: #{fnet_forward.1} parent=1 // pred_region
      _
    $region9: #{fnet_forward.1} parent=1 // pred_fallthru
      _
    // Predicated region
    $region10: #{fnet_forward.1} parent=1 // pred_check
      _
    $region11: #{fnet_forward.1} parent=1 // pred_check_branch
      %39 = sbr.rel (0) target = $region13
    $region12: #{fnet_forward.1} parent=1 // pred_region
      _
    $region13: #{fnet_forward.1} parent=1 // pred_fallthru
      _
    // Predicated region
    $region14: #{fnet_forward.1} parent=1 // pred_check
      _
    $region15: #{fnet_forward.1} parent=1 // pred_check_branch
      %41 = sbr.rel (0) target = $region17
    $region16: #{fnet_forward.1} parent=1 // pred_region
      _
    $region17: #{fnet_forward.1} parent=1 // pred_fallthru
      _
    // Predicated region
    $region18: #{fnet_forward.1} parent=1 // pred_check
      _
    $region19: #{fnet_forward.1} parent=1 // pred_check_branch
      %43 = sbr.rel (0) target = $region21
    $region20: #{fnet_forward.1} parent=1 // pred_region
      _
    $region21: #{fnet_forward.1} parent=1 // pred_fallthru
      _
    // Predicated region
    $region22: #{fnet_forward.1} parent=1 // pred_check
      _
    $region23: #{fnet_forward.1} parent=1 // pred_check_branch
      %45 = sbr.rel (0) target = $region25
    $region24: #{fnet_forward.1} parent=1 // pred_region
      _
    $region25: #{fnet_forward.1} parent=1 // pred_fallthru
      _
    // Predicated region
    $region26: #{fnet_forward.1} parent=1 // pred_check
      _
    $region27: #{fnet_forward.1} parent=1 // pred_check_branch
      %47 = sbr.rel (0) target = $region29
    $region28: #{fnet_forward.1} parent=1 // pred_region
      _
    $region29: #{fnet_forward.1} parent=1 // pred_fallthru
      _
    // Predicated region
    $region30: #{fnet_forward.1} parent=1 // pred_check
      _
    $region31: #{fnet_forward.1} parent=1 // pred_check_branch
      %49 = sbr.rel (0) target = $region33
    $region32: #{fnet_forward.1} parent=1 // pred_region
      _
    $region33: #{fnet_forward.1} parent=1 // pred_fallthru
      _
    // Predicated region
    $region34: #{fnet_forward.1} parent=1 // pred_check
      _
    $region35: #{fnet_forward.1} parent=1 // pred_check_branch
      %51 = sbr.rel (0) target = $region37
    $region36: #{fnet_forward.1} parent=1 // pred_region
      _
    $region37: #{fnet_forward.1} parent=1 // pred_fallthru
      _
    // Predicated region
    $region38: #{fnet_forward.1} parent=1 // pred_check
      _
    $region39: #{fnet_forward.1} parent=1 // pred_check_branch
      %53 = sbr.rel (0) target = $region41
    $region40: #{fnet_forward.1} parent=1 // pred_region
      _
    $region41: #{fnet_forward.1} parent=1 // pred_fallthru
      _
    // Predicated region
    $region42: #{fnet_forward.1} parent=1 // pred_check
      _
    $region43: #{fnet_forward.1} parent=1 // pred_check_branch
      %55 = sbr.rel (0) target = $region45
    $region44: #{fnet_forward.1} parent=1 // pred_region
      _
    $region45: #{fnet_forward.1} parent=1 // pred_fallthru
      _
    // Predicated region
    $region46: #{fnet_forward.1} parent=1 // pred_check
      _
    $region47: #{fnet_forward.1} parent=1 // pred_check_branch
      %57 = sbr.rel (0) target = $region49
    $region48: #{fnet_forward.1} parent=1 // pred_region
      %59 = vsyncadd [#allocation3], 0
      %s60 = sshll.u32 %s11, 4
      %s61 = int_to_ptr.hbm [resolvable:$true] %s60
      %s62 = sshll.u32 [#allocation2], 4
      %s63 = int_to_ptr.vmem [resolvable:$true] %s62
      %68 = dma.hbm_to_vmem [thread:$0]  %s61, 256, %s63, [#allocation3], 64, 64, 4
    $region49: #{fnet_forward.1} parent=1 // pred_fallthru
      _
    // Predicated region
    $region50: #{fnet_forward.1} parent=1 // pred_check
      _
    $region51: #{fnet_forward.1} parent=1 // pred_check_branch
      %70 = sbr.rel (0) target = $region53
    $region52: #{fnet_forward.1} parent=1 // pred_region
      _
    $region53: #{fnet_forward.1} parent=1 // pred_fallthru
      _
    // Predicated region
    $region54: #{fnet_forward.1} parent=1 // pred_check
      _
    $region55: #{fnet_forward.1} parent=1 // pred_check_branch
      %72 = sbr.rel (0) target = $region57
    $region56: #{fnet_forward.1} parent=1 // pred_region
      _
    $region57: #{fnet_forward.1} parent=1 // pred_fallthru
      _
    // Predicated region
    $region58: #{fnet_forward.1} parent=1 // pred_check
      _
    $region59: #{fnet_forward.1} parent=1 // pred_check_branch
      %74 = sbr.rel (0) target = $region61
    $region60: #{fnet_forward.1} parent=1 // pred_region
      _
    $region61: #{fnet_forward.1} parent=1 // pred_fallthru
      _
    // Predicated region
    $region62: #{fnet_forward.1} parent=1 // pred_check
      _
    $region63: #{fnet_forward.1} parent=1 // pred_check_branch
      %76 = sbr.rel (0) target = $region65
    $region64: #{fnet_forward.1} parent=1 // pred_region
      _
    $region65: #{fnet_forward.1} parent=1 // pred_fallthru
      _
    // Predicated region
    $region66: #{fnet_forward.1} parent=1 // pred_check
      _
    $region67: #{fnet_forward.1} parent=1 // pred_check_branch
      %78 = sbr.rel (0) target = $region69
    $region68: #{fnet_forward.1} parent=1 // pred_region
      _
    $region69: #{fnet_forward.1} parent=1 // pred_fallthru
      _
    // Predicated region
    $region70: #{fnet_forward.1} parent=1 // pred_check
      _
    $region71: #{fnet_forward.1} parent=1 // pred_check_branch
      %80 = sbr.rel (0) target = $region73
    $region72: #{fnet_forward.1} parent=1 // pred_region
      _
    $region73: #{fnet_forward.1} parent=1 // pred_fallthru
      _
    // Predicated region
    $region74: #{fnet_forward.1} parent=1 // pred_check
      _
    $region75: #{fnet_forward.1} parent=1 // pred_check_branch
      %82 = sbr.rel (0) target = $region77
    $region76: #{fnet_forward.1} parent=1 // pred_region
      _
    $region77: #{fnet_forward.1} parent=1 // pred_fallthru
      _
    // Predicated region
    $region78: #{fnet_forward.1} parent=1 // pred_check
      _
    $region79: #{fnet_forward.1} parent=1 // pred_check_branch
      %84 = sbr.rel (0) target = $region81
    $region80: #{fnet_forward.1} parent=1 // pred_region
      _
    $region81: #{fnet_forward.1} parent=1 // pred_fallthru
      _
    // Predicated region
    $region82: #{fnet_forward.1} parent=1 // pred_check
      _
    $region83: #{fnet_forward.1} parent=1 // pred_check_branch
      %86 = sbr.rel (0) target = $region85
    $region84: #{fnet_forward.1} parent=1 // pred_region
      _
    $region85: #{fnet_forward.1} parent=1 // pred_fallthru
      _
    // Predicated region
    $region86: #{fnet_forward.1} parent=1 // pred_check
      _
    $region87: #{fnet_forward.1} parent=1 // pred_check_branch
      %88 = sbr.rel (0) target = $region89
    $region88: #{fnet_forward.1} parent=1 // pred_region
      _
    $region89: #{fnet_forward.1} parent=1 // pred_fallthru
      _
    // Predicated region
    $region90: #{fnet_forward.1} parent=1 // pred_check
      _
    $region91: #{fnet_forward.1} parent=1 // pred_check_branch
      %90 = sbr.rel (0) target = $region93
    $region92: #{fnet_forward.1} parent=1 // pred_region
      _
    $region93: #{fnet_forward.1} parent=1 // pred_fallthru
      _
    // Predicated region
    $region94: #{fnet_forward.1} parent=1 // pred_check
      _
    $region95: #{fnet_forward.1} parent=1 // pred_check_branch
      %92 = sbr.rel (0) target = $region97
    $region96: #{fnet_forward.1} parent=1 // pred_region
      _
    $region97: #{fnet_forward.1} parent=1 // pred_fallthru
      _
    // Predicated region
    $region98: #{fnet_forward.1} parent=1 // pred_check
      _
    $region99: #{fnet_forward.1} parent=1 // pred_check_branch
      %94 = sbr.rel (0) target = $region101
    $region100: #{fnet_forward.1} parent=1 // pred_region
      _
    $region101: #{fnet_forward.1} parent=1 // pred_fallthru
      _
    // Predicated region
    $region102: #{fnet_forward.1} parent=1 // pred_check
      _
    $region103: #{fnet_forward.1} parent=1 // pred_check_branch
      %96 = sbr.rel (0) target = $region105
    $region104: #{fnet_forward.1} parent=1 // pred_region
      _
    $region105: #{fnet_forward.1} parent=1 // pred_fallthru
      _
    // Predicated region
    $region106: #{fnet_forward.1} parent=1 // pred_check
      _
    $region107: #{fnet_forward.1} parent=1 // pred_check_branch
      %98 = sbr.rel (0) target = $region109
    $region108: #{fnet_forward.1} parent=1 // pred_region
      _
    $region109: #{fnet_forward.1} parent=1 // pred_fallthru
      _
    // Predicated region
    $region110: #{fnet_forward.1} parent=1 // pred_check
      _
    $region111: #{fnet_forward.1} parent=1 // pred_check_branch
      %100 = sbr.rel (0) target = $region113
    $region112: #{fnet_forward.1} parent=1 // pred_region
      _
    $region113: #{fnet_forward.1} parent=1 // pred_fallthru
      _
    // Predicated region
    $region114: #{fnet_forward.1} parent=1 // pred_check
      _
    $region115: #{fnet_forward.1} parent=1 // pred_check_branch
      %102 = sbr.rel (0) target = $region117
    $region116: #{fnet_forward.1} parent=1 // pred_region
      %104 = dma.done [#allocation3], 256
    $region117: #{fnet_forward.1} parent=1 // pred_fallthru
      _
    %v106 = vlaneseq
    %v107 = vand.u32 %v106, 127
    %vm108 = vcmp.ge.s32.totalorder %v107, 0
    %vm109 = vcmp.lt.s32.totalorder %v107, 8
    %vm110 = vmand %vm108, %vm109
    %vm111 = vcmp.ge.s32.totalorder %v107, 8
    %vm112 = vcmp.lt.s32.totalorder %v107, 16
    %vm113 = vmand %vm111, %vm112
    %vm114 = vcmp.ge.s32.totalorder %v107, 16
    %vm115 = vcmp.lt.s32.totalorder %v107, 24
    %vm116 = vmand %vm114, %vm115
    %vm117 = vcmp.ge.s32.totalorder %v107, 24
    %vm118 = vcmp.lt.s32.totalorder %v107, 32
    %vm119 = vmand %vm117, %vm118
    %v120 = vld [vmem:[%s0] sm:$0xff]
    %v121 = vld [vmem:[%s0 + $0x8] sm:$0xff]
    %v122 = vld [vmem:[%s0 + $0x10] sm:$0xff]
    %v123 = vld [vmem:[%s0 + $0x18] sm:$0xff]
    %124 = vset.pattern.permute.xlu0 0
    %125 = vperm.xlu0 %124, %v120
    %v126 = vpop.permute.xlu0 %125
    %127 = vset.pattern.permute.xlu0 0
    %128 = vperm.xlu0 %127, %v121
    %v129 = vpop.permute.xlu0 %128
    %130 = vset.pattern.permute.xlu0 0
    %131 = vperm.xlu0 %130, %v122
    %v132 = vpop.permute.xlu0 %131
    %133 = vset.pattern.permute.xlu0 0
    %134 = vperm.xlu0 %133, %v123
    %v135 = vpop.permute.xlu0 %134
    %vm136 = vcmp.eq.s32.totalorder %v107, %v126
    %vm137 = vcmp.eq.s32.totalorder %v107, %v129
    %vm138 = vcmp.eq.s32.totalorder %v107, %v132
    %vm139 = vcmp.eq.s32.totalorder %v107, %v135
    %v140 = vsel %vm136, 1, 0
    %v141 = vsel %vm137, 1, 0
    %v142 = vsel %vm138, 1, 0
    %v143 = vsel %vm139, 1, 0
    %v144 = vcvt.s32.f32 %v140
    %v145 = vcvt.s32.f32 %v141
    %v146 = vcvt.s32.f32 %v142
    %v147 = vcvt.s32.f32 %v143
    %v148 = vld [vmem:[%s4] sm:$0xff]
    %v149 = vld [vmem:[%s4 + $0x8] sm:$0xff]
    %v150 = vld [vmem:[%s4 + $0x10] sm:$0xff]
    %v151 = vld [vmem:[%s4 + $0x18] sm:$0xff]
    %v152 = vld [vmem:[%s4 + $0x20] sm:$0xff]
    %v153 = vld [vmem:[%s4 + $0x28] sm:$0xff]
    %v154 = vld [vmem:[%s4 + $0x30] sm:$0x3]
    %v155 = vld [vmem:[%s5] sm:$0xff]
    %v156 = vld [vmem:[%s5 + $0x8] sm:$0xff]
    %v157 = vld [vmem:[%s5 + $0x10] sm:$0xff]
    %v158 = vld [vmem:[%s5 + $0x18] sm:$0xff]
    %vm159 = vcmask 408576
    %v161 = vsel %vm159, %v144, 0
    %v164 = vsel %vm159, %v145, 0
    %v167 = vsel %vm159, %v146, 0
    %v170 = vsel %vm159, %v147, 0
    %vm172 = vcmask 1041408
    %v174 = vsel %vm172, %v154, 0
    %176 = vmatpush.msra.mxu0 0.0
    %177 = vmatpush.msra.mxu0 0.0
    %178 = vmatpush.msra.mxu0 0.0
    %179 = vmatpush.msra.mxu0 0.0
    %180 = vmatpush.msra.mxu0 0.0
    %181 = vmatpush.msra.mxu0 0.0
    %182 = vmatpush.msra.mxu0 0.0
    %183 = vmatpush.msra.mxu0 0.0
    %184 = vmatpush.msra.mxu0 0.0
    %185 = vmatpush.msra.mxu0 %v174
    %186 = vmatpush.msra.mxu0 %v153
    %187 = vmatpush.msra.mxu0 %v152
    %188 = vmatpush.msra.mxu0 %v151
    %189 = vmatpush.msra.mxu0 %v150
    %190 = vmatpush.msra.mxu0 %v149
    %191 = vmatpush.msra.mxu0 %v148
    %192 = vmatmul.f32.gmra.mxu0 %v161
    %v193 = vpop.f32.mrf.mxu0
    %v194 = vadd.f32 %v155, %v193
    %195 = vmatmul.f32.gmra.mxu0 %v164
    %v196 = vpop.f32.mrf.mxu0
    %v197 = vadd.f32 %v156, %v196
    %198 = vmatmul.f32.gmra.mxu0 %v167
    %v199 = vpop.f32.mrf.mxu0
    %v200 = vadd.f32 %v157, %v199
    %201 = vmatmul.f32.gmra.mxu0 %v170
    %v202 = vpop.f32.mrf.mxu0
    %v203 = vadd.f32 %v158, %v202
    %204 = vdwg.mxu0
    %v205 = vld [vmem:[%s24] sm:$0x1]
    %v206 = vld [vmem:[%s24 + $0x1] sm:$0x1]
    %vm207 = vcmask 261120
    %v208 = vsel %vm207, %v194, 0.0
    %209 = vadd.xlane.f32.xlu0 %v208
    %v210 = vpop.xlane.xlu0 %209
    %v211 = vsel %vm207, %v197, 0.0
    %212 = vadd.xlane.f32.xlu0 %v211
    %v213 = vpop.xlane.xlu0 %212
    %v214 = vsel %vm207, %v200, 0.0
    %215 = vadd.xlane.f32.xlu0 %v214
    %v216 = vpop.xlane.xlu0 %215
    %v217 = vsel %vm207, %v203, 0.0
    %218 = vadd.xlane.f32.xlu0 %v217
    %v219 = vpop.xlane.xlu0 %218
    %v220 = vrcp.pop 32.0
    %v221 = vmul.f32 32.0, %v220
    %v222 = vsub.f32 1.0, %v221
    %v223 = vmul.f32 %v220, %v222
    %v224 = vadd.f32 %v220, %v223
    %vm225 = vweird.f32 %v220
    %v226 = vsel %vm225, %v220, %v224
    %v227 = vmul.f32 %v210, %v226
    %v228 = vmul.f32 %v213, %v226
    %v229 = vmul.f32 %v216, %v226
    %v230 = vmul.f32 %v219, %v226
    %v231 = vsub.f32 %v194, %v227
    %v232 = vsub.f32 %v197, %v228
    %v233 = vsub.f32 %v200, %v229
    %v234 = vsub.f32 %v203, %v230
    %v235 = vmul.f32 %v231, %v231
    %v236 = vmul.f32 %v232, %v232
    %v237 = vmul.f32 %v233, %v233
    %v238 = vmul.f32 %v234, %v234
    %v239 = vsel %vm207, %v235, 0.0
    %240 = vadd.xlane.f32.xlu0 %v239
    %v241 = vpop.xlane.xlu0 %240
    %v242 = vsel %vm207, %v236, 0.0
    %243 = vadd.xlane.f32.xlu0 %v242
    %v244 = vpop.xlane.xlu0 %243
    %v245 = vsel %vm207, %v237, 0.0
    %246 = vadd.xlane.f32.xlu0 %v245
    %v247 = vpop.xlane.xlu0 %246
    %v248 = vsel %vm207, %v238, 0.0
    %249 = vadd.xlane.f32.xlu0 %v248
    %v250 = vpop.xlane.xlu0 %249
    %v251 = vmul.f32 %v241, %v226
    %v252 = vmul.f32 %v244, %v226
    %v253 = vmul.f32 %v247, %v226
    %v254 = vmul.f32 %v250, %v226
    %v255 = vadd.f32 %v251, 1e-05
    %v256 = vadd.f32 %v252, 1e-05
    %v257 = vadd.f32 %v253, 1e-05
    %v258 = vadd.f32 %v254, 1e-05
    %v259 = vrsqrt.pop %v255
    %v260 = vmul.f32 %v259, %v255
    %v261 = vmul.f32 %v260, %v259
    %v262 = vmul.f32 0.5, %v261
    %v263 = vsub.f32 1.5, %v262
    %v264 = vmul.f32 %v259, %v263
    %vm265 = vweird.f32 %v255
    %vm266 = vweird.f32 %v259
    %vm267 = vmor %vm265, %vm266
    %v268 = vsel %vm267, %v259, %v264
    %v269 = vrsqrt.pop %v256
    %v270 = vmul.f32 %v269, %v256
    %v271 = vmul.f32 %v270, %v269
    %v272 = vmul.f32 0.5, %v271
    %v273 = vsub.f32 1.5, %v272
    %v274 = vmul.f32 %v269, %v273
    %vm275 = vweird.f32 %v256
    %vm276 = vweird.f32 %v269
    %vm277 = vmor %vm275, %vm276
    %v278 = vsel %vm277, %v269, %v274
    %v279 = vrsqrt.pop %v257
    %v280 = vmul.f32 %v279, %v257
    %v281 = vmul.f32 %v280, %v279
    %v282 = vmul.f32 0.5, %v281
    %v283 = vsub.f32 1.5, %v282
    %v284 = vmul.f32 %v279, %v283
    %vm285 = vweird.f32 %v257
    %vm286 = vweird.f32 %v279
    %vm287 = vmor %vm285, %vm286
    %v288 = vsel %vm287, %v279, %v284
    %v289 = vrsqrt.pop %v258
    %v290 = vmul.f32 %v289, %v258
    %v291 = vmul.f32 %v290, %v289
    %v292 = vmul.f32 0.5, %v291
    %v293 = vsub.f32 1.5, %v292
    %v294 = vmul.f32 %v289, %v293
    %vm295 = vweird.f32 %v258
    %vm296 = vweird.f32 %v289
    %vm297 = vmor %vm295, %vm296
    %v298 = vsel %vm297, %v289, %v294
    %v299 = vmul.f32 %v231, %v268
    %v300 = vmul.f32 %v232, %v278
    %v301 = vmul.f32 %v233, %v288
    %v302 = vmul.f32 %v234, %v298
    %v303 = vperm.slane %v205, 0
    %v304 = vmul.f32 %v299, %v303
    %v305 = vmul.f32 %v300, %v303
    %v306 = vmul.f32 %v301, %v303
    %v307 = vmul.f32 %v302, %v303
    %v308 = vperm.slane %v206, 0
    %v309 = vadd.f32 %v304, %v308
    %v310 = vadd.f32 %v305, %v308
    %v311 = vadd.f32 %v306, %v308
    %v312 = vadd.f32 %v307, %v308
    %v313 = vld [vmem:[%s8] sm:$0xf]
    %v314 = vld [vmem:[%s8 + $0x4] sm:$0xf]
    %v315 = vld [vmem:[%s8 + $0x8] sm:$0xf]
    %v316 = vld [vmem:[%s8 + $0xc] sm:$0xf]
    %v317 = vld [vmem:[%s9] sm:$0xf]
    %v318 = vld [vmem:[%s9 + $0x4] sm:$0xf]
    %v319 = vld [vmem:[%s9 + $0x8] sm:$0xf]
    %v320 = vld [vmem:[%s9 + $0xc] sm:$0xf]
    %v321 = vld [vmem:[%s10] sm:$0xf]
    %v322 = vld [vmem:[%s10 + $0x4] sm:$0xf]
    %v323 = vld [vmem:[%s10 + $0x8] sm:$0xf]
    %v324 = vld [vmem:[%s10 + $0xc] sm:$0xf]
    %v325 = vld [vmem:[#allocation2] sm:$0xf]
    %v326 = vld [vmem:[#allocation2 + $0x4] sm:$0xf]
    %v327 = vld [vmem:[#allocation2 + $0x8] sm:$0xf]
    %v328 = vld [vmem:[#allocation2 + $0xc] sm:$0xf]
    %v329 = vpack.c.bf16 %v310, %v309
    %v330 = vpack.c.bf16 %v312, %v311
    %v335 = vunpack.c.l.b16 %v321
    %v336 = vunpack.c.l.b16 %v322
    %v337 = vunpack.c.l.b16 %v323
    %v338 = vunpack.c.l.b16 %v324
    %v339 = vpack.c.b16 %v336, %v335
    %v340 = vpack.c.b16 %v338, %v337
    %v344 = vsel %vm207, %v329, 0
    %v347 = vsel %vm207, %v330, 0
    %349 = vmatpush.bf16.msra.mxu0 0
    %350 = vmatpush.bf16.msra.mxu0 0
    %351 = vmatpush.bf16.msra.mxu0 0
    %352 = vmatpush.bf16.msra.mxu0 0
    %353 = vmatpush.bf16.msra.mxu0 0
    %354 = vmatpush.bf16.msra.mxu0 0
    %355 = vmatpush.bf16.msra.mxu0 %v340
    %356 = vmatpush.bf16.msra.mxu0 %v339
    %357 = vmatmul.bf16.gmra.mxu0 %v344
    %v358 = vpop.f32.mrf.mxu0
    %v359 = vadd.f32 0.0, %v358
    %v360 = vpop.f32.mrf.mxu0
    %v361 = vadd.f32 0.0, %v360
    %362 = vmatmul.bf16.gmra.mxu0 %v347
    %v363 = vpop.f32.mrf.mxu0
    %v364 = vadd.f32 0.0, %v363
    %v365 = vpop.f32.mrf.mxu0
    %v366 = vadd.f32 0.0, %v365
    %367 = vdwg.mxu0
    %v372 = vunpack.c.l.b16 %v325
    %v373 = vunpack.c.l.b16 %v326
    %v374 = vunpack.c.l.b16 %v327
    %v375 = vunpack.c.l.b16 %v328
    %v376 = vpack.c.b16 %v373, %v372
    %v377 = vpack.c.b16 %v375, %v374
    %380 = vmatpush.bf16.msra.mxu0 0
    %381 = vmatpush.bf16.msra.mxu0 0
    %382 = vmatpush.bf16.msra.mxu0 0
    %383 = vmatpush.bf16.msra.mxu0 0
    %384 = vmatpush.bf16.msra.mxu0 0
    %385 = vmatpush.bf16.msra.mxu0 0
    %386 = vmatpush.bf16.msra.mxu0 %v377
    %387 = vmatpush.bf16.msra.mxu0 %v376
    %388 = vmatmul.bf16.gmra.mxu0 %v344
    %v389 = vpop.f32.mrf.mxu0
    %v390 = vadd.f32 0.0, %v389
    %v391 = vpop.f32.mrf.mxu0
    %v392 = vadd.f32 0.0, %v391
    %393 = vmatmul.bf16.gmra.mxu0 %v347
    %v394 = vpop.f32.mrf.mxu0
    %v395 = vadd.f32 0.0, %v394
    %v396 = vpop.f32.mrf.mxu0
    %v397 = vadd.f32 0.0, %v396
    %398 = vdwg.mxu0
    %v399 = vpack.c.bf16 %v361, %v359
    %v400 = vpack.c.bf16 %v366, %v364
    %v405 = vunpack.c.l.b16 %v313
    %v406 = vunpack.c.l.b16 %v314
    %v407 = vunpack.c.l.b16 %v315
    %v408 = vunpack.c.l.b16 %v316
    %v409 = vpack.c.b16 %v406, %v405
    %v410 = vpack.c.b16 %v408, %v407
    %v412 = vsel %vm207, %v409, 0
    %v415 = vsel %vm207, %v410, 0
    %417 = vmatpush.bf16.msra.mxu0 0
    %418 = vmatpush.bf16.msra.mxu0 0
    %419 = vmatpush.bf16.msra.mxu0 0
    %420 = vmatpush.bf16.msra.mxu0 0
    %421 = vmatpush.bf16.msra.mxu0 0
    %422 = vmatpush.bf16.msra.mxu0 0
    %423 = vmatpush.bf16.msra.mxu0 %v400
    %424 = vmatpush.bf16.msra.mxu0 %v399
    %425 = vmatmul.bf16.gmra.mxu0 %v412
    %v426 = vpop.f32.mrf.mxu0
    %v427 = vadd.f32 0.0, %v426
    %v428 = vpop.f32.mrf.mxu0
    %v429 = vadd.f32 0.0, %v428
    %430 = vmatmul.bf16.gmra.mxu0 %v415
    %v431 = vpop.f32.mrf.mxu0
    %v432 = vadd.f32 0.0, %v431
    %v433 = vpop.f32.mrf.mxu0
    %v434 = vadd.f32 0.0, %v433
    %435 = vdwg.mxu0
    %v436 = vpack.c.bf16 %v392, %v390
    %v437 = vpack.c.bf16 %v397, %v395
    %v442 = vunpack.c.l.b16 %v317
    %v443 = vunpack.c.l.b16 %v318
    %v444 = vunpack.c.l.b16 %v319
    %v445 = vunpack.c.l.b16 %v320
    %v446 = vpack.c.b16 %v443, %v442
    %v447 = vpack.c.b16 %v445, %v444
    %v449 = vsel %vm207, %v446, 0
    %v452 = vsel %vm207, %v447, 0
    %454 = vmatpush.bf16.msra.mxu0 0
    %455 = vmatpush.bf16.msra.mxu0 0
    %456 = vmatpush.bf16.msra.mxu0 0
    %457 = vmatpush.bf16.msra.mxu0 0
    %458 = vmatpush.bf16.msra.mxu0 0
    %459 = vmatpush.bf16.msra.mxu0 0
    %460 = vmatpush.bf16.msra.mxu0 %v437
    %461 = vmatpush.bf16.msra.mxu0 %v436
    %462 = vmatmul.bf16.gmra.mxu0 %v449
    %v463 = vpop.f32.mrf.mxu0
    %v464 = vadd.f32 0.0, %v463
    %v465 = vpop.f32.mrf.mxu0
    %v466 = vadd.f32 0.0, %v465
    %467 = vmatmul.bf16.gmra.mxu0 %v452
    %v468 = vpop.f32.mrf.mxu0
    %v469 = vadd.f32 0.0, %v468
    %v470 = vpop.f32.mrf.mxu0
    %v471 = vadd.f32 0.0, %v470
    %472 = vdwg.mxu0
    %v473 = vsub.f32 %v427, %v464
    %v474 = vsub.f32 %v429, %v466
    %v475 = vsub.f32 %v432, %v469
    %v476 = vsub.f32 %v434, %v471
    %v477 = vadd.f32 %v309, %v473
    %v478 = vadd.f32 %v310, %v474
    %v479 = vadd.f32 %v311, %v475
    %v480 = vadd.f32 %v312, %v476
    %v481 = vld [vmem:[%s24 + $0x2] sm:$0x1]
    %v482 = vld [vmem:[%s24 + $0x3] sm:$0x1]
    %v483 = vsel %vm207, %v477, 0.0
    %484 = vadd.xlane.f32.xlu0 %v483
    %v485 = vpop.xlane.xlu0 %484
    %v486 = vsel %vm207, %v478, 0.0
    %487 = vadd.xlane.f32.xlu0 %v486
    %v488 = vpop.xlane.xlu0 %487
    %v489 = vsel %vm207, %v479, 0.0
    %490 = vadd.xlane.f32.xlu0 %v489
    %v491 = vpop.xlane.xlu0 %490
    %v492 = vsel %vm207, %v480, 0.0
    %493 = vadd.xlane.f32.xlu0 %v492
    %v494 = vpop.xlane.xlu0 %493
    %v495 = vmul.f32 %v485, %v226
    %v496 = vmul.f32 %v488, %v226
    %v497 = vmul.f32 %v491, %v226
    %v498 = vmul.f32 %v494, %v226
    %v499 = vsub.f32 %v477, %v495
    %v500 = vsub.f32 %v478, %v496
    %v501 = vsub.f32 %v479, %v497
    %v502 = vsub.f32 %v480, %v498
    %v503 = vmul.f32 %v499, %v499
    %v504 = vmul.f32 %v500, %v500
    %v505 = vmul.f32 %v501, %v501
    %v506 = vmul.f32 %v502, %v502
    %v507 = vsel %vm207, %v503, 0.0
    %508 = vadd.xlane.f32.xlu0 %v507
    %v509 = vpop.xlane.xlu0 %508
    %v510 = vsel %vm207, %v504, 0.0
    %511 = vadd.xlane.f32.xlu0 %v510
    %v512 = vpop.xlane.xlu0 %511
    %v513 = vsel %vm207, %v505, 0.0
    %514 = vadd.xlane.f32.xlu0 %v513
    %v515 = vpop.xlane.xlu0 %514
    %v516 = vsel %vm207, %v506, 0.0
    %517 = vadd.xlane.f32.xlu0 %v516
    %v518 = vpop.xlane.xlu0 %517
    %v519 = vmul.f32 %v509, %v226
    %v520 = vmul.f32 %v512, %v226
    %v521 = vmul.f32 %v515, %v226
    %v522 = vmul.f32 %v518, %v226
    %v523 = vadd.f32 %v519, 1e-05
    %v524 = vadd.f32 %v520, 1e-05
    %v525 = vadd.f32 %v521, 1e-05
    %v526 = vadd.f32 %v522, 1e-05
    %v527 = vrsqrt.pop %v523
    %v528 = vmul.f32 %v527, %v523
    %v529 = vmul.f32 %v528, %v527
    %v530 = vmul.f32 0.5, %v529
    %v531 = vsub.f32 1.5, %v530
    %v532 = vmul.f32 %v527, %v531
    %vm533 = vweird.f32 %v523
    %vm534 = vweird.f32 %v527
    %vm535 = vmor %vm533, %vm534
    %v536 = vsel %vm535, %v527, %v532
    %v537 = vrsqrt.pop %v524
    %v538 = vmul.f32 %v537, %v524
    %v539 = vmul.f32 %v538, %v537
    %v540 = vmul.f32 0.5, %v539
    %v541 = vsub.f32 1.5, %v540
    %v542 = vmul.f32 %v537, %v541
    %vm543 = vweird.f32 %v524
    %vm544 = vweird.f32 %v537
    %vm545 = vmor %vm543, %vm544
    %v546 = vsel %vm545, %v537, %v542
    %v547 = vrsqrt.pop %v525
    %v548 = vmul.f32 %v547, %v525
    %v549 = vmul.f32 %v548, %v547
    %v550 = vmul.f32 0.5, %v549
    %v551 = vsub.f32 1.5, %v550
    %v552 = vmul.f32 %v547, %v551
    %vm553 = vweird.f32 %v525
    %vm554 = vweird.f32 %v547
    %vm555 = vmor %vm553, %vm554
    %v556 = vsel %vm555, %v547, %v552
    %v557 = vrsqrt.pop %v526
    %v558 = vmul.f32 %v557, %v526
    %v559 = vmul.f32 %v558, %v557
    %v560 = vmul.f32 0.5, %v559
    %v561 = vsub.f32 1.5, %v560
    %v562 = vmul.f32 %v557, %v561
    %vm563 = vweird.f32 %v526
    %vm564 = vweird.f32 %v557
    %vm565 = vmor %vm563, %vm564
    %v566 = vsel %vm565, %v557, %v562
    %v567 = vmul.f32 %v499, %v536
    %v568 = vmul.f32 %v500, %v546
    %v569 = vmul.f32 %v501, %v556
    %v570 = vmul.f32 %v502, %v566
    %v571 = vperm.slane %v481, 0
    %v572 = vmul.f32 %v567, %v571
    %v573 = vmul.f32 %v568, %v571
    %v574 = vmul.f32 %v569, %v571
    %v575 = vmul.f32 %v570, %v571
    %v576 = vperm.slane %v482, 0
    %v577 = vadd.f32 %v572, %v576
    %v578 = vadd.f32 %v573, %v576
    %v579 = vadd.f32 %v574, %v576
    %v580 = vadd.f32 %v575, %v576
    %v581 = vpack.c.bf16 %v578, %v577
    %v582 = vpack.c.bf16 %v580, %v579
    %v583 = vld [vmem:[%s12] sm:$0xf]
    %v584 = vld [vmem:[%s12 + $0x4] sm:$0xf]
    %v585 = vld [vmem:[%s12 + $0x8] sm:$0xf]
    %v586 = vld [vmem:[%s12 + $0xc] sm:$0xf]
    %v587 = vld [vmem:[%s25] sm:$0x1]
    %v588 = vperm.slane %v587, 0
    %v593 = vunpack.c.l.b16 %v583
    %v594 = vunpack.c.l.b16 %v584
    %v595 = vunpack.c.l.b16 %v585
    %v596 = vunpack.c.l.b16 %v586
    %v597 = vpack.c.b16 %v594, %v593
    %v598 = vpack.c.b16 %v596, %v595
    %v602 = vsel %vm207, %v581, 0
    %v605 = vsel %vm207, %v582, 0
    %607 = vmatpush.bf16.msra.mxu0 0
    %608 = vmatpush.bf16.msra.mxu0 0
    %609 = vmatpush.bf16.msra.mxu0 0
    %610 = vmatpush.bf16.msra.mxu0 0
    %611 = vmatpush.bf16.msra.mxu0 0
    %612 = vmatpush.bf16.msra.mxu0 0
    %613 = vmatpush.bf16.msra.mxu0 %v598
    %614 = vmatpush.bf16.msra.mxu0 %v597
    %615 = vmatmul.bf16.gmra.mxu0 %v602
    %v616 = vpop.f32.mrf.mxu0
    %v617 = vadd.f32 %v588, %v616
    %v618 = vpop.f32.mrf.mxu0
    %v619 = vadd.f32 %v588, %v618
    %620 = vmatmul.bf16.gmra.mxu0 %v605
    %v621 = vpop.f32.mrf.mxu0
    %v622 = vadd.f32 %v588, %v621
    %v623 = vpop.f32.mrf.mxu0
    %v624 = vadd.f32 %v588, %v623
    %625 = vdwg.mxu0
    %v626 = vmul.f32 %v617, %v617
    %v627 = vmul.f32 %v619, %v619
    %v628 = vmul.f32 %v622, %v622
    %v629 = vmul.f32 %v624, %v624
    %v630 = vmul.f32 %v617, %v626
    %v631 = vmul.f32 %v619, %v627
    %v632 = vmul.f32 %v622, %v628
    %v633 = vmul.f32 %v624, %v629
    %v634 = vmul.f32 %v630, 0.044715
    %v635 = vmul.f32 %v631, 0.044715
    %v636 = vmul.f32 %v632, 0.044715
    %v637 = vmul.f32 %v633, 0.044715
    %v638 = vadd.f32 %v617, %v634
    %v639 = vadd.f32 %v619, %v635
    %v640 = vadd.f32 %v622, %v636
    %v641 = vadd.f32 %v624, %v637
    %v642 = vmul.f32 %v638, 0.7978846
    %v643 = vmul.f32 %v639, 0.7978846
    %v644 = vmul.f32 %v640, 0.7978846
    %v645 = vmul.f32 %v641, 0.7978846
    %v646 = vtanh.pop %v642
    %v647 = vtanh.pop %v643
    %v648 = vtanh.pop %v644
    %v649 = vtanh.pop %v645
    %v650 = vadd.f32 %v646, 1.0
    %v651 = vadd.f32 %v647, 1.0
    %v652 = vadd.f32 %v648, 1.0
    %v653 = vadd.f32 %v649, 1.0
    %v654 = vmul.f32 %v650, 0.5
    %v655 = vmul.f32 %v651, 0.5
    %v656 = vmul.f32 %v652, 0.5
    %v657 = vmul.f32 %v653, 0.5
    %v658 = vmul.f32 %v617, %v654
    %v659 = vmul.f32 %v619, %v655
    %v660 = vmul.f32 %v622, %v656
    %v661 = vmul.f32 %v624, %v657
    %v662 = vpack.c.bf16 %v659, %v658
    %v663 = vpack.c.bf16 %v661, %v660
    %v664 = vld [vmem:[%s13] sm:$0xf]
    %v665 = vld [vmem:[%s13 + $0x4] sm:$0xf]
    %v666 = vld [vmem:[%s13 + $0x8] sm:$0xf]
    %v667 = vld [vmem:[%s13 + $0xc] sm:$0xf]
    %v668 = vld [vmem:[%s13 + $0x10] sm:$0xf]
    %v669 = vld [vmem:[%s13 + $0x14] sm:$0xf]
    %v670 = vld [vmem:[%s13 + $0x18] sm:$0xf]
    %v671 = vld [vmem:[%s13 + $0x1c] sm:$0xf]
    %v672 = vld [vmem:[%s24 + $0x4] sm:$0x1]
    %v673 = vperm.slane %v672, 0
    %v682 = vunpack.c.l.b16 %v664
    %v683 = vunpack.c.l.b16 %v665
    %v684 = vunpack.c.l.b16 %v666
    %v685 = vunpack.c.l.b16 %v667
    %v686 = vunpack.c.l.b16 %v668
    %v687 = vunpack.c.l.b16 %v669
    %v688 = vunpack.c.l.b16 %v670
    %v689 = vunpack.c.l.b16 %v671
    %v690 = vpack.c.b16 %v683, %v682
    %v691 = vpack.c.b16 %v685, %v684
    %v692 = vpack.c.b16 %v687, %v686
    %v693 = vpack.c.b16 %v689, %v688
    %vm698 = vcmask 523264
    %v700 = vsel %vm698, %v662, 0
    %v703 = vsel %vm698, %v663, 0
    %705 = vmatpush.bf16.msra.mxu0 0
    %706 = vmatpush.bf16.msra.mxu0 0
    %707 = vmatpush.bf16.msra.mxu0 0
    %708 = vmatpush.bf16.msra.mxu0 0
    %709 = vmatpush.bf16.msra.mxu0 %v693
    %710 = vmatpush.bf16.msra.mxu0 %v692
    %711 = vmatpush.bf16.msra.mxu0 %v691
    %712 = vmatpush.bf16.msra.mxu0 %v690
    %713 = vmatmul.bf16.gmra.mxu0 %v700
    %v714 = vpop.f32.mrf.mxu0
    %v715 = vadd.f32 %v673, %v714
    %v716 = vpop.f32.mrf.mxu0
    %v717 = vadd.f32 %v673, %v716
    %718 = vmatmul.bf16.gmra.mxu0 %v703
    %v719 = vpop.f32.mrf.mxu0
    %v720 = vadd.f32 %v673, %v719
    %v721 = vpop.f32.mrf.mxu0
    %v722 = vadd.f32 %v673, %v721
    %723 = vdwg.mxu0
    %v724 = vadd.f32 %v577, %v715
    %v725 = vadd.f32 %v578, %v717
    %v726 = vadd.f32 %v579, %v720
    %v727 = vadd.f32 %v580, %v722
    %v728 = vld [vmem:[%s24 + $0x5] sm:$0x1]
    %v729 = vld [vmem:[%s24 + $0x6] sm:$0x1]
    %v730 = vsel %vm207, %v724, 0.0
    %731 = vadd.xlane.f32.xlu0 %v730
    %v732 = vpop.xlane.xlu0 %731
    %v733 = vsel %vm207, %v725, 0.0
    %734 = vadd.xlane.f32.xlu0 %v733
    %v735 = vpop.xlane.xlu0 %734
    %v736 = vsel %vm207, %v726, 0.0
    %737 = vadd.xlane.f32.xlu0 %v736
    %v738 = vpop.xlane.xlu0 %737
    %v739 = vsel %vm207, %v727, 0.0
    %740 = vadd.xlane.f32.xlu0 %v739
    %v741 = vpop.xlane.xlu0 %740
    %v742 = vmul.f32 %v732, %v226
    %v743 = vmul.f32 %v735, %v226
    %v744 = vmul.f32 %v738, %v226
    %v745 = vmul.f32 %v741, %v226
    %v746 = vsub.f32 %v724, %v742
    %v747 = vsub.f32 %v725, %v743
    %v748 = vsub.f32 %v726, %v744
    %v749 = vsub.f32 %v727, %v745
    %v750 = vmul.f32 %v746, %v746
    %v751 = vmul.f32 %v747, %v747
    %v752 = vmul.f32 %v748, %v748
    %v753 = vmul.f32 %v749, %v749
    %v754 = vsel %vm207, %v750, 0.0
    %755 = vadd.xlane.f32.xlu0 %v754
    %v756 = vpop.xlane.xlu0 %755
    %v757 = vsel %vm207, %v751, 0.0
    %758 = vadd.xlane.f32.xlu0 %v757
    %v759 = vpop.xlane.xlu0 %758
    %v760 = vsel %vm207, %v752, 0.0
    %761 = vadd.xlane.f32.xlu0 %v760
    %v762 = vpop.xlane.xlu0 %761
    %v763 = vsel %vm207, %v753, 0.0
    %764 = vadd.xlane.f32.xlu0 %v763
    %v765 = vpop.xlane.xlu0 %764
    %v766 = vmul.f32 %v756, %v226
    %v767 = vmul.f32 %v759, %v226
    %v768 = vmul.f32 %v762, %v226
    %v769 = vmul.f32 %v765, %v226
    %v770 = vadd.f32 %v766, 1e-05
    %v771 = vadd.f32 %v767, 1e-05
    %v772 = vadd.f32 %v768, 1e-05
    %v773 = vadd.f32 %v769, 1e-05
    %v774 = vrsqrt.pop %v770
    %v775 = vmul.f32 %v774, %v770
    %v776 = vmul.f32 %v775, %v774
    %v777 = vmul.f32 0.5, %v776
    %v778 = vsub.f32 1.5, %v777
    %v779 = vmul.f32 %v774, %v778
    %vm780 = vweird.f32 %v770
    %vm781 = vweird.f32 %v774
    %vm782 = vmor %vm780, %vm781
    %v783 = vsel %vm782, %v774, %v779
    %v784 = vrsqrt.pop %v771
    %v785 = vmul.f32 %v784, %v771
    %v786 = vmul.f32 %v785, %v784
    %v787 = vmul.f32 0.5, %v786
    %v788 = vsub.f32 1.5, %v787
    %v789 = vmul.f32 %v784, %v788
    %vm790 = vweird.f32 %v771
    %vm791 = vweird.f32 %v784
    %vm792 = vmor %vm790, %vm791
    %v793 = vsel %vm792, %v784, %v789
    %v794 = vrsqrt.pop %v772
    %v795 = vmul.f32 %v794, %v772
    %v796 = vmul.f32 %v795, %v794
    %v797 = vmul.f32 0.5, %v796
    %v798 = vsub.f32 1.5, %v797
    %v799 = vmul.f32 %v794, %v798
    %vm800 = vweird.f32 %v772
    %vm801 = vweird.f32 %v794
    %vm802 = vmor %vm800, %vm801
    %v803 = vsel %vm802, %v794, %v799
    %v804 = vrsqrt.pop %v773
    %v805 = vmul.f32 %v804, %v773
    %v806 = vmul.f32 %v805, %v804
    %v807 = vmul.f32 0.5, %v806
    %v808 = vsub.f32 1.5, %v807
    %v809 = vmul.f32 %v804, %v808
    %vm810 = vweird.f32 %v773
    %vm811 = vweird.f32 %v804
    %vm812 = vmor %vm810, %vm811
    %v813 = vsel %vm812, %v804, %v809
    %v814 = vmul.f32 %v746, %v783
    %v815 = vmul.f32 %v747, %v793
    %v816 = vmul.f32 %v748, %v803
    %v817 = vmul.f32 %v749, %v813
    %v818 = vperm.slane %v728, 0
    %v819 = vmul.f32 %v814, %v818
    %v820 = vmul.f32 %v815, %v818
    %v821 = vmul.f32 %v816, %v818
    %v822 = vmul.f32 %v817, %v818
    %v823 = vperm.slane %v729, 0
    %v824 = vadd.f32 %v819, %v823
    %v825 = vadd.f32 %v820, %v823
    %v826 = vadd.f32 %v821, %v823
    %v827 = vadd.f32 %v822, %v823
    %v828 = vpack.c.bf16 %v825, %v824
    %v829 = vpack.c.bf16 %v827, %v826
    %v831 = vsel %vm207, %v828, 0
    %v834 = vsel %vm207, %v829, 0
    %836 = vmatpush.bf16.msra.mxu0 0
    %837 = vmatpush.bf16.msra.mxu0 0
    %838 = vmatpush.bf16.msra.mxu0 0
    %839 = vmatpush.bf16.msra.mxu0 0
    %840 = vmatpush.bf16.msra.mxu0 0
    %841 = vmatpush.bf16.msra.mxu0 0
    %842 = vmatpush.bf16.msra.mxu0 %v340
    %843 = vmatpush.bf16.msra.mxu0 %v339
    %844 = vmatmul.bf16.gmra.mxu0 %v831
    %v845 = vpop.f32.mrf.mxu0
    %v846 = vadd.f32 0.0, %v845
    %v847 = vpop.f32.mrf.mxu0
    %v848 = vadd.f32 0.0, %v847
    %849 = vmatmul.bf16.gmra.mxu0 %v834
    %v850 = vpop.f32.mrf.mxu0
    %v851 = vadd.f32 0.0, %v850
    %v852 = vpop.f32.mrf.mxu0
    %v853 = vadd.f32 0.0, %v852
    %854 = vdwg.mxu0
    %855 = vmatpush.bf16.msra.mxu0 0
    %856 = vmatpush.bf16.msra.mxu0 0
    %857 = vmatpush.bf16.msra.mxu0 0
    %858 = vmatpush.bf16.msra.mxu0 0
    %859 = vmatpush.bf16.msra.mxu0 0
    %860 = vmatpush.bf16.msra.mxu0 0
    %861 = vmatpush.bf16.msra.mxu0 %v377
    %862 = vmatpush.bf16.msra.mxu0 %v376
    %863 = vmatmul.bf16.gmra.mxu0 %v831
    %v864 = vpop.f32.mrf.mxu0
    %v865 = vadd.f32 0.0, %v864
    %v866 = vpop.f32.mrf.mxu0
    %v867 = vadd.f32 0.0, %v866
    %868 = vmatmul.bf16.gmra.mxu0 %v834
    %v869 = vpop.f32.mrf.mxu0
    %v870 = vadd.f32 0.0, %v869
    %v871 = vpop.f32.mrf.mxu0
    %v872 = vadd.f32 0.0, %v871
    %873 = vdwg.mxu0
    %v874 = vpack.c.bf16 %v848, %v846
    %v875 = vpack.c.bf16 %v853, %v851
    %876 = vmatpush.bf16.msra.mxu0 0
    %877 = vmatpush.bf16.msra.mxu0 0
    %878 = vmatpush.bf16.msra.mxu0 0
    %879 = vmatpush.bf16.msra.mxu0 0
    %880 = vmatpush.bf16.msra.mxu0 0
    %881 = vmatpush.bf16.msra.mxu0 0
    %882 = vmatpush.bf16.msra.mxu0 %v875
    %883 = vmatpush.bf16.msra.mxu0 %v874
    %884 = vmatmul.bf16.gmra.mxu0 %v412
    %v885 = vpop.f32.mrf.mxu0
    %v886 = vadd.f32 0.0, %v885
    %v887 = vpop.f32.mrf.mxu0
    %v888 = vadd.f32 0.0, %v887
    %889 = vmatmul.bf16.gmra.mxu0 %v415
    %v890 = vpop.f32.mrf.mxu0
    %v891 = vadd.f32 0.0, %v890
    %v892 = vpop.f32.mrf.mxu0
    %v893 = vadd.f32 0.0, %v892
    %894 = vdwg.mxu0
    %v895 = vpack.c.bf16 %v867, %v865
    %v896 = vpack.c.bf16 %v872, %v870
    %897 = vmatpush.bf16.msra.mxu0 0
    %898 = vmatpush.bf16.msra.mxu0 0
    %899 = vmatpush.bf16.msra.mxu0 0
    %900 = vmatpush.bf16.msra.mxu0 0
    %901 = vmatpush.bf16.msra.mxu0 0
    %902 = vmatpush.bf16.msra.mxu0 0
    %903 = vmatpush.bf16.msra.mxu0 %v896
    %904 = vmatpush.bf16.msra.mxu0 %v895
    %905 = vmatmul.bf16.gmra.mxu0 %v449
    %v906 = vpop.f32.mrf.mxu0
    %v907 = vadd.f32 0.0, %v906
    %v908 = vpop.f32.mrf.mxu0
    %v909 = vadd.f32 0.0, %v908
    %910 = vmatmul.bf16.gmra.mxu0 %v452
    %v911 = vpop.f32.mrf.mxu0
    %v912 = vadd.f32 0.0, %v911
    %v913 = vpop.f32.mrf.mxu0
    %v914 = vadd.f32 0.0, %v913
    %915 = vdwg.mxu0
    %v916 = vsub.f32 %v886, %v907
    %v917 = vsub.f32 %v888, %v909
    %v918 = vsub.f32 %v891, %v912
    %v919 = vsub.f32 %v893, %v914
    %v920 = vadd.f32 %v824, %v916
    %v921 = vadd.f32 %v825, %v917
    %v922 = vadd.f32 %v826, %v918
    %v923 = vadd.f32 %v827, %v919
    %v924 = vld [vmem:[%s24 + $0x7] sm:$0x1]
    %v925 = vld [vmem:[%s24 + $0x8] sm:$0x1]
    %v926 = vsel %vm207, %v920, 0.0
    %927 = vadd.xlane.f32.xlu0 %v926
    %v928 = vpop.xlane.xlu0 %927
    %v929 = vsel %vm207, %v921, 0.0
    %930 = vadd.xlane.f32.xlu0 %v929
    %v931 = vpop.xlane.xlu0 %930
    %v932 = vsel %vm207, %v922, 0.0
    %933 = vadd.xlane.f32.xlu0 %v932
    %v934 = vpop.xlane.xlu0 %933
    %v935 = vsel %vm207, %v923, 0.0
    %936 = vadd.xlane.f32.xlu0 %v935
    %v937 = vpop.xlane.xlu0 %936
    %v938 = vmul.f32 %v928, %v226
    %v939 = vmul.f32 %v931, %v226
    %v940 = vmul.f32 %v934, %v226
    %v941 = vmul.f32 %v937, %v226
    %v942 = vsub.f32 %v920, %v938
    %v943 = vsub.f32 %v921, %v939
    %v944 = vsub.f32 %v922, %v940
    %v945 = vsub.f32 %v923, %v941
    %v946 = vmul.f32 %v942, %v942
    %v947 = vmul.f32 %v943, %v943
    %v948 = vmul.f32 %v944, %v944
    %v949 = vmul.f32 %v945, %v945
    %v950 = vsel %vm207, %v946, 0.0
    %951 = vadd.xlane.f32.xlu0 %v950
    %v952 = vpop.xlane.xlu0 %951
    %v953 = vsel %vm207, %v947, 0.0
    %954 = vadd.xlane.f32.xlu0 %v953
    %v955 = vpop.xlane.xlu0 %954
    %v956 = vsel %vm207, %v948, 0.0
    %957 = vadd.xlane.f32.xlu0 %v956
    %v958 = vpop.xlane.xlu0 %957
    %v959 = vsel %vm207, %v949, 0.0
    %960 = vadd.xlane.f32.xlu0 %v959
    %v961 = vpop.xlane.xlu0 %960
    %v962 = vmul.f32 %v952, %v226
    %v963 = vmul.f32 %v955, %v226
    %v964 = vmul.f32 %v958, %v226
    %v965 = vmul.f32 %v961, %v226
    %v966 = vadd.f32 %v962, 1e-05
    %v967 = vadd.f32 %v963, 1e-05
    %v968 = vadd.f32 %v964, 1e-05
    %v969 = vadd.f32 %v965, 1e-05
    %v970 = vrsqrt.pop %v966
    %v971 = vmul.f32 %v970, %v966
    %v972 = vmul.f32 %v971, %v970
    %v973 = vmul.f32 0.5, %v972
    %v974 = vsub.f32 1.5, %v973
    %v975 = vmul.f32 %v970, %v974
    %vm976 = vweird.f32 %v966
    %vm977 = vweird.f32 %v970
    %vm978 = vmor %vm976, %vm977
    %v979 = vsel %vm978, %v970, %v975
    %v980 = vrsqrt.pop %v967
    %v981 = vmul.f32 %v980, %v967
    %v982 = vmul.f32 %v981, %v980
    %v983 = vmul.f32 0.5, %v982
    %v984 = vsub.f32 1.5, %v983
    %v985 = vmul.f32 %v980, %v984
    %vm986 = vweird.f32 %v967
    %vm987 = vweird.f32 %v980
    %vm988 = vmor %vm986, %vm987
    %v989 = vsel %vm988, %v980, %v985
    %v990 = vrsqrt.pop %v968
    %v991 = vmul.f32 %v990, %v968
    %v992 = vmul.f32 %v991, %v990
    %v993 = vmul.f32 0.5, %v992
    %v994 = vsub.f32 1.5, %v993
    %v995 = vmul.f32 %v990, %v994
    %vm996 = vweird.f32 %v968
    %vm997 = vweird.f32 %v990
    %vm998 = vmor %vm996, %vm997
    %v999 = vsel %vm998, %v990, %v995
    %v1000 = vrsqrt.pop %v969
    %v1001 = vmul.f32 %v1000, %v969
    %v1002 = vmul.f32 %v1001, %v1000
    %v1003 = vmul.f32 0.5, %v1002
    %v1004 = vsub.f32 1.5, %v1003
    %v1005 = vmul.f32 %v1000, %v1004
    %vm1006 = vweird.f32 %v969
    %vm1007 = vweird.f32 %v1000
    %vm1008 = vmor %vm1006, %vm1007
    %v1009 = vsel %vm1008, %v1000, %v1005
    %v1010 = vmul.f32 %v942, %v979
    %v1011 = vmul.f32 %v943, %v989
    %v1012 = vmul.f32 %v944, %v999
    %v1013 = vmul.f32 %v945, %v1009
    %v1014 = vperm.slane %v924, 0
    %v1015 = vmul.f32 %v1010, %v1014
    %v1016 = vmul.f32 %v1011, %v1014
    %v1017 = vmul.f32 %v1012, %v1014
    %v1018 = vmul.f32 %v1013, %v1014
    %v1019 = vperm.slane %v925, 0
    %v1020 = vadd.f32 %v1015, %v1019
    %v1021 = vadd.f32 %v1016, %v1019
    %v1022 = vadd.f32 %v1017, %v1019
    %v1023 = vadd.f32 %v1018, %v1019
    %v1024 = vpack.c.bf16 %v1021, %v1020
    %v1025 = vpack.c.bf16 %v1023, %v1022
    %s1026 = scalar_lea.vmem %s12, 16
    %v1027 = vld [vmem:[%s1026] sm:$0xf]
    %v1028 = vld [vmem:[%s1026 + $0x4] sm:$0xf]
    %v1029 = vld [vmem:[%s1026 + $0x8] sm:$0xf]
    %v1030 = vld [vmem:[%s1026 + $0xc] sm:$0xf]
    %v1031 = vld [vmem:[%s25 + $0x1] sm:$0x1]
    %v1032 = vperm.slane %v1031, 0
    %v1037 = vunpack.c.l.b16 %v1027
    %v1038 = vunpack.c.l.b16 %v1028
    %v1039 = vunpack.c.l.b16 %v1029
    %v1040 = vunpack.c.l.b16 %v1030
    %v1041 = vpack.c.b16 %v1038, %v1037
    %v1042 = vpack.c.b16 %v1040, %v1039
    %v1046 = vsel %vm207, %v1024, 0
    %v1049 = vsel %vm207, %v1025, 0
    %1051 = vmatpush.bf16.msra.mxu0 0
    %1052 = vmatpush.bf16.msra.mxu0 0
    %1053 = vmatpush.bf16.msra.mxu0 0
    %1054 = vmatpush.bf16.msra.mxu0 0
    %1055 = vmatpush.bf16.msra.mxu0 0
    %1056 = vmatpush.bf16.msra.mxu0 0
    %1057 = vmatpush.bf16.msra.mxu0 %v1042
    %1058 = vmatpush.bf16.msra.mxu0 %v1041
    %1059 = vmatmul.bf16.gmra.mxu0 %v1046
    %v1060 = vpop.f32.mrf.mxu0
    %v1061 = vadd.f32 %v1032, %v1060
    %v1062 = vpop.f32.mrf.mxu0
    %v1063 = vadd.f32 %v1032, %v1062
    %1064 = vmatmul.bf16.gmra.mxu0 %v1049
    %v1065 = vpop.f32.mrf.mxu0
    %v1066 = vadd.f32 %v1032, %v1065
    %v1067 = vpop.f32.mrf.mxu0
    %v1068 = vadd.f32 %v1032, %v1067
    %1069 = vdwg.mxu0
    %v1070 = vmul.f32 %v1061, %v1061
    %v1071 = vmul.f32 %v1063, %v1063
    %v1072 = vmul.f32 %v1066, %v1066
    %v1073 = vmul.f32 %v1068, %v1068
    %v1074 = vmul.f32 %v1061, %v1070
    %v1075 = vmul.f32 %v1063, %v1071
    %v1076 = vmul.f32 %v1066, %v1072
    %v1077 = vmul.f32 %v1068, %v1073
    %v1078 = vmul.f32 %v1074, 0.044715
    %v1079 = vmul.f32 %v1075, 0.044715
    %v1080 = vmul.f32 %v1076, 0.044715
    %v1081 = vmul.f32 %v1077, 0.044715
    %v1082 = vadd.f32 %v1061, %v1078
    %v1083 = vadd.f32 %v1063, %v1079
    %v1084 = vadd.f32 %v1066, %v1080
    %v1085 = vadd.f32 %v1068, %v1081
    %v1086 = vmul.f32 %v1082, 0.7978846
    %v1087 = vmul.f32 %v1083, 0.7978846
    %v1088 = vmul.f32 %v1084, 0.7978846
    %v1089 = vmul.f32 %v1085, 0.7978846
    %v1090 = vtanh.pop %v1086
    %v1091 = vtanh.pop %v1087
    %v1092 = vtanh.pop %v1088
    %v1093 = vtanh.pop %v1089
    %v1094 = vadd.f32 %v1090, 1.0
    %v1095 = vadd.f32 %v1091, 1.0
    %v1096 = vadd.f32 %v1092, 1.0
    %v1097 = vadd.f32 %v1093, 1.0
    %v1098 = vmul.f32 %v1094, 0.5
    %v1099 = vmul.f32 %v1095, 0.5
    %v1100 = vmul.f32 %v1096, 0.5
    %v1101 = vmul.f32 %v1097, 0.5
    %v1102 = vmul.f32 %v1061, %v1098
    %v1103 = vmul.f32 %v1063, %v1099
    %v1104 = vmul.f32 %v1066, %v1100
    %v1105 = vmul.f32 %v1068, %v1101
    %v1106 = vpack.c.bf16 %v1103, %v1102
    %v1107 = vpack.c.bf16 %v1105, %v1104
    %s1108 = scalar_lea.vmem %s13, 32
    %v1109 = vld [vmem:[%s1108] sm:$0xf]
    %v1110 = vld [vmem:[%s1108 + $0x4] sm:$0xf]
    %v1111 = vld [vmem:[%s1108 + $0x8] sm:$0xf]
    %v1112 = vld [vmem:[%s1108 + $0xc] sm:$0xf]
    %v1113 = vld [vmem:[%s1108 + $0x10] sm:$0xf]
    %v1114 = vld [vmem:[%s1108 + $0x14] sm:$0xf]
    %v1115 = vld [vmem:[%s1108 + $0x18] sm:$0xf]
    %v1116 = vld [vmem:[%s1108 + $0x1c] sm:$0xf]
    %v1117 = vld [vmem:[%s24 + $0x9] sm:$0x1]
    %v1118 = vperm.slane %v1117, 0
    %v1127 = vunpack.c.l.b16 %v1109
    %v1128 = vunpack.c.l.b16 %v1110
    %v1129 = vunpack.c.l.b16 %v1111
    %v1130 = vunpack.c.l.b16 %v1112
    %v1131 = vunpack.c.l.b16 %v1113
    %v1132 = vunpack.c.l.b16 %v1114
    %v1133 = vunpack.c.l.b16 %v1115
    %v1134 = vunpack.c.l.b16 %v1116
    %v1135 = vpack.c.b16 %v1128, %v1127
    %v1136 = vpack.c.b16 %v1130, %v1129
    %v1137 = vpack.c.b16 %v1132, %v1131
    %v1138 = vpack.c.b16 %v1134, %v1133
    %v1144 = vsel %vm698, %v1106, 0
    %v1147 = vsel %vm698, %v1107, 0
    %1149 = vmatpush.bf16.msra.mxu0 0
    %1150 = vmatpush.bf16.msra.mxu0 0
    %1151 = vmatpush.bf16.msra.mxu0 0
    %1152 = vmatpush.bf16.msra.mxu0 0
    %1153 = vmatpush.bf16.msra.mxu0 %v1138
    %1154 = vmatpush.bf16.msra.mxu0 %v1137
    %1155 = vmatpush.bf16.msra.mxu0 %v1136
    %1156 = vmatpush.bf16.msra.mxu0 %v1135
    %1157 = vmatmul.bf16.gmra.mxu0 %v1144
    %v1158 = vpop.f32.mrf.mxu0
    %v1159 = vadd.f32 %v1118, %v1158
    %v1160 = vpop.f32.mrf.mxu0
    %v1161 = vadd.f32 %v1118, %v1160
    %1162 = vmatmul.bf16.gmra.mxu0 %v1147
    %v1163 = vpop.f32.mrf.mxu0
    %v1164 = vadd.f32 %v1118, %v1163
    %v1165 = vpop.f32.mrf.mxu0
    %v1166 = vadd.f32 %v1118, %v1165
    %1167 = vdwg.mxu0
    %v1168 = vadd.f32 %v1020, %v1159
    %v1169 = vadd.f32 %v1021, %v1161
    %v1170 = vadd.f32 %v1022, %v1164
    %v1171 = vadd.f32 %v1023, %v1166
    %v1172 = vld [vmem:[%s24 + $0xa] sm:$0x1]
    %v1173 = vld [vmem:[%s24 + $0xb] sm:$0x1]
    %v1174 = vsel %vm207, %v1168, 0.0
    %1175 = vadd.xlane.f32.xlu0 %v1174
    %v1176 = vpop.xlane.xlu0 %1175
    %v1177 = vsel %vm207, %v1169, 0.0
    %1178 = vadd.xlane.f32.xlu0 %v1177
    %v1179 = vpop.xlane.xlu0 %1178
    %v1180 = vsel %vm207, %v1170, 0.0
    %1181 = vadd.xlane.f32.xlu0 %v1180
    %v1182 = vpop.xlane.xlu0 %1181
    %v1183 = vsel %vm207, %v1171, 0.0
    %1184 = vadd.xlane.f32.xlu0 %v1183
    %v1185 = vpop.xlane.xlu0 %1184
    %v1186 = vmul.f32 %v1176, %v226
    %v1187 = vmul.f32 %v1179, %v226
    %v1188 = vmul.f32 %v1182, %v226
    %v1189 = vmul.f32 %v1185, %v226
    %v1190 = vsub.f32 %v1168, %v1186
    %v1191 = vsub.f32 %v1169, %v1187
    %v1192 = vsub.f32 %v1170, %v1188
    %v1193 = vsub.f32 %v1171, %v1189
    %v1194 = vmul.f32 %v1190, %v1190
    %v1195 = vmul.f32 %v1191, %v1191
    %v1196 = vmul.f32 %v1192, %v1192
    %v1197 = vmul.f32 %v1193, %v1193
    %v1198 = vsel %vm207, %v1194, 0.0
    %1199 = vadd.xlane.f32.xlu0 %v1198
    %v1200 = vpop.xlane.xlu0 %1199
    %v1201 = vsel %vm207, %v1195, 0.0
    %1202 = vadd.xlane.f32.xlu0 %v1201
    %v1203 = vpop.xlane.xlu0 %1202
    %v1204 = vsel %vm207, %v1196, 0.0
    %1205 = vadd.xlane.f32.xlu0 %v1204
    %v1206 = vpop.xlane.xlu0 %1205
    %v1207 = vsel %vm207, %v1197, 0.0
    %1208 = vadd.xlane.f32.xlu0 %v1207
    %v1209 = vpop.xlane.xlu0 %1208
    %v1210 = vmul.f32 %v1200, %v226
    %v1211 = vmul.f32 %v1203, %v226
    %v1212 = vmul.f32 %v1206, %v226
    %v1213 = vmul.f32 %v1209, %v226
    %v1214 = vadd.f32 %v1210, 1e-05
    %v1215 = vadd.f32 %v1211, 1e-05
    %v1216 = vadd.f32 %v1212, 1e-05
    %v1217 = vadd.f32 %v1213, 1e-05
    %v1218 = vrsqrt.pop %v1214
    %v1219 = vmul.f32 %v1218, %v1214
    %v1220 = vmul.f32 %v1219, %v1218
    %v1221 = vmul.f32 0.5, %v1220
    %v1222 = vsub.f32 1.5, %v1221
    %v1223 = vmul.f32 %v1218, %v1222
    %vm1224 = vweird.f32 %v1214
    %vm1225 = vweird.f32 %v1218
    %vm1226 = vmor %vm1224, %vm1225
    %v1227 = vsel %vm1226, %v1218, %v1223
    %v1228 = vrsqrt.pop %v1215
    %v1229 = vmul.f32 %v1228, %v1215
    %v1230 = vmul.f32 %v1229, %v1228
    %v1231 = vmul.f32 0.5, %v1230
    %v1232 = vsub.f32 1.5, %v1231
    %v1233 = vmul.f32 %v1228, %v1232
    %vm1234 = vweird.f32 %v1215
    %vm1235 = vweird.f32 %v1228
    %vm1236 = vmor %vm1234, %vm1235
    %v1237 = vsel %vm1236, %v1228, %v1233
    %v1238 = vrsqrt.pop %v1216
    %v1239 = vmul.f32 %v1238, %v1216
    %v1240 = vmul.f32 %v1239, %v1238
    %v1241 = vmul.f32 0.5, %v1240
    %v1242 = vsub.f32 1.5, %v1241
    %v1243 = vmul.f32 %v1238, %v1242
    %vm1244 = vweird.f32 %v1216
    %vm1245 = vweird.f32 %v1238
    %vm1246 = vmor %vm1244, %vm1245
    %v1247 = vsel %vm1246, %v1238, %v1243
    %v1248 = vrsqrt.pop %v1217
    %v1249 = vmul.f32 %v1248, %v1217
    %v1250 = vmul.f32 %v1249, %v1248
    %v1251 = vmul.f32 0.5, %v1250
    %v1252 = vsub.f32 1.5, %v1251
    %v1253 = vmul.f32 %v1248, %v1252
    %vm1254 = vweird.f32 %v1217
    %vm1255 = vweird.f32 %v1248
    %vm1256 = vmor %vm1254, %vm1255
    %v1257 = vsel %vm1256, %v1248, %v1253
    %v1258 = vmul.f32 %v1190, %v1227
    %v1259 = vmul.f32 %v1191, %v1237
    %v1260 = vmul.f32 %v1192, %v1247
    %v1261 = vmul.f32 %v1193, %v1257
    %v1262 = vperm.slane %v1172, 0
    %v1263 = vmul.f32 %v1258, %v1262
    %v1264 = vmul.f32 %v1259, %v1262
    %v1265 = vmul.f32 %v1260, %v1262
    %v1266 = vmul.f32 %v1261, %v1262
    %v1267 = vperm.slane %v1173, 0
    %v1268 = vadd.f32 %v1263, %v1267
    %v1269 = vadd.f32 %v1264, %v1267
    %v1270 = vadd.f32 %v1265, %v1267
    %v1271 = vadd.f32 %v1266, %v1267
    %v1272 = vpack.c.bf16 %v1269, %v1268
    %v1273 = vpack.c.bf16 %v1271, %v1270
    %v1274 = vld [vmem:[%s1] sm:$0xff]
    %v1275 = vld [vmem:[%s1 + $0x8] sm:$0xff]
    %1276 = vset.pattern.permute.xlu0 0
    %1277 = vperm.xlu0 %1276, %v1274
    %v1278 = vpop.permute.xlu0 %1277
    %1279 = vset.pattern.permute.xlu0 0
    %1280 = vperm.xlu0 %1279, %v1275
    %v1281 = vpop.permute.xlu0 %1280
    %vm1282 = vcmp.eq.s32.totalorder %v107, %v1278
    %vm1283 = vcmp.eq.s32.totalorder %v107, %v1281
    %v1284 = vsel %vm1282, 1, 0
    %v1285 = vsel %vm1283, 1, 0
    %v1286 = vcvt.s32.f32 %v1284
    %v1287 = vcvt.s32.f32 %v1285
    %v1288 = vld [vmem:[%s6] sm:$0xff]
    %v1289 = vld [vmem:[%s6 + $0x8] sm:$0xff]
    %v1290 = vld [vmem:[%s6 + $0x10] sm:$0xff]
    %v1291 = vld [vmem:[%s6 + $0x18] sm:$0xff]
    %v1292 = vld [vmem:[%s6 + $0x20] sm:$0xff]
    %v1293 = vld [vmem:[%s7] sm:$0xff]
    %v1294 = vld [vmem:[%s7 + $0x8] sm:$0xff]
    %vm1295 = vcmask 326656
    %v1297 = vsel %vm1295, %v1286, 0
    %v1300 = vsel %vm1295, %v1287, 0
    %1302 = vmatpush.msra.mxu0 0.0
    %1303 = vmatpush.msra.mxu0 0.0
    %1304 = vmatpush.msra.mxu0 0.0
    %1305 = vmatpush.msra.mxu0 0.0
    %1306 = vmatpush.msra.mxu0 0.0
    %1307 = vmatpush.msra.mxu0 0.0
    %1308 = vmatpush.msra.mxu0 0.0
    %1309 = vmatpush.msra.mxu0 0.0
    %1310 = vmatpush.msra.mxu0 0.0
    %1311 = vmatpush.msra.mxu0 0.0
    %1312 = vmatpush.msra.mxu0 0.0
    %1313 = vmatpush.msra.mxu0 %v1292
    %1314 = vmatpush.msra.mxu0 %v1291
    %1315 = vmatpush.msra.mxu0 %v1290
    %1316 = vmatpush.msra.mxu0 %v1289
    %1317 = vmatpush.msra.mxu0 %v1288
    %1318 = vmatmul.f32.gmra.mxu0 %v1297
    %v1319 = vpop.f32.mrf.mxu0
    %v1320 = vadd.f32 %v1293, %v1319
    %1321 = vmatmul.f32.gmra.mxu0 %v1300
    %v1322 = vpop.f32.mrf.mxu0
    %v1323 = vadd.f32 %v1294, %v1322
    %1324 = vdwg.mxu0
    %v1325 = vld [vmem:[%s24 + $0xc] sm:$0x1]
    %v1326 = vld [vmem:[%s24 + $0xd] sm:$0x1]
    %v1327 = vsel %vm207, %v1320, 0.0
    %1328 = vadd.xlane.f32.xlu0 %v1327
    %v1329 = vpop.xlane.xlu0 %1328
    %v1330 = vsel %vm207, %v1323, 0.0
    %1331 = vadd.xlane.f32.xlu0 %v1330
    %v1332 = vpop.xlane.xlu0 %1331
    %v1333 = vmul.f32 %v1329, %v226
    %v1334 = vmul.f32 %v1332, %v226
    %v1335 = vsub.f32 %v1320, %v1333
    %v1336 = vsub.f32 %v1323, %v1334
    %v1337 = vmul.f32 %v1335, %v1335
    %v1338 = vmul.f32 %v1336, %v1336
    %v1339 = vsel %vm207, %v1337, 0.0
    %1340 = vadd.xlane.f32.xlu0 %v1339
    %v1341 = vpop.xlane.xlu0 %1340
    %v1342 = vsel %vm207, %v1338, 0.0
    %1343 = vadd.xlane.f32.xlu0 %v1342
    %v1344 = vpop.xlane.xlu0 %1343
    %v1345 = vmul.f32 %v1341, %v226
    %v1346 = vmul.f32 %v1344, %v226
    %v1347 = vadd.f32 %v1345, 1e-05
    %v1348 = vadd.f32 %v1346, 1e-05
    %v1349 = vrsqrt.pop %v1347
    %v1350 = vmul.f32 %v1349, %v1347
    %v1351 = vmul.f32 %v1350, %v1349
    %v1352 = vmul.f32 0.5, %v1351
    %v1353 = vsub.f32 1.5, %v1352
    %v1354 = vmul.f32 %v1349, %v1353
    %vm1355 = vweird.f32 %v1347
    %vm1356 = vweird.f32 %v1349
    %vm1357 = vmor %vm1355, %vm1356
    %v1358 = vsel %vm1357, %v1349, %v1354
    %v1359 = vrsqrt.pop %v1348
    %v1360 = vmul.f32 %v1359, %v1348
    %v1361 = vmul.f32 %v1360, %v1359
    %v1362 = vmul.f32 0.5, %v1361
    %v1363 = vsub.f32 1.5, %v1362
    %v1364 = vmul.f32 %v1359, %v1363
    %vm1365 = vweird.f32 %v1348
    %vm1366 = vweird.f32 %v1359
    %vm1367 = vmor %vm1365, %vm1366
    %v1368 = vsel %vm1367, %v1359, %v1364
    %v1369 = vmul.f32 %v1335, %v1358
    %v1370 = vmul.f32 %v1336, %v1368
    %v1371 = vperm.slane %v1325, 0
    %v1372 = vmul.f32 %v1369, %v1371
    %v1373 = vmul.f32 %v1370, %v1371
    %v1374 = vperm.slane %v1326, 0
    %v1375 = vadd.f32 %v1372, %v1374
    %v1376 = vadd.f32 %v1373, %v1374
    %v1377 = vld [vmem:[%s2] sm:$0xff]
    %v1378 = vld [vmem:[%s2 + $0x8] sm:$0xff]
    %v1379 = vld [vmem:[%s3] sm:$0xff]
    %v1380 = vld [vmem:[%s3 + $0x8] sm:$0xff]
    %v1381 = vpack.c.bf16 %v1376, %v1375
    %v1382 = vld [vmem:[%s14] sm:$0xf]
    %v1383 = vld [vmem:[%s14 + $0x4] sm:$0xf]
    %v1384 = vld [vmem:[%s14 + $0x8] sm:$0xf]
    %v1385 = vld [vmem:[%s14 + $0xc] sm:$0xf]
    %v1386 = vld [vmem:[%s24 + $0xe] sm:$0x1]
    %v1387 = vperm.slane %v1386, 0
    %v1392 = vunpack.c.l.b16 %v1382
    %v1393 = vunpack.c.l.b16 %v1383
    %v1394 = vunpack.c.l.b16 %v1384
    %v1395 = vunpack.c.l.b16 %v1385
    %v1396 = vpack.c.b16 %v1393, %v1392
    %v1397 = vpack.c.b16 %v1395, %v1394
    %v1401 = vsel %vm207, %v1381, 0
    %1403 = vmatpush.bf16.msra.mxu0 0
    %1404 = vmatpush.bf16.msra.mxu0 0
    %1405 = vmatpush.bf16.msra.mxu0 0
    %1406 = vmatpush.bf16.msra.mxu0 0
    %1407 = vmatpush.bf16.msra.mxu0 0
    %1408 = vmatpush.bf16.msra.mxu0 0
    %1409 = vmatpush.bf16.msra.mxu0 %v1397
    %1410 = vmatpush.bf16.msra.mxu0 %v1396
    %1411 = vmatmul.bf16.gmra.mxu0 %v1401
    %v1412 = vpop.f32.mrf.mxu0
    %v1413 = vadd.f32 %v1387, %v1412
    %v1414 = vpop.f32.mrf.mxu0
    %v1415 = vadd.f32 %v1387, %v1414
    %1416 = vdwg.mxu0
    %v1417 = vld [vmem:[%s15] sm:$0xf]
    %v1418 = vld [vmem:[%s15 + $0x4] sm:$0xf]
    %v1419 = vld [vmem:[%s15 + $0x8] sm:$0xf]
    %v1420 = vld [vmem:[%s15 + $0xc] sm:$0xf]
    %v1421 = vld [vmem:[%s24 + $0xf] sm:$0x1]
    %v1422 = vperm.slane %v1421, 0
    %v1427 = vunpack.c.l.b16 %v1417
    %v1428 = vunpack.c.l.b16 %v1418
    %v1429 = vunpack.c.l.b16 %v1419
    %v1430 = vunpack.c.l.b16 %v1420
    %v1431 = vpack.c.b16 %v1428, %v1427
    %v1432 = vpack.c.b16 %v1430, %v1429
    %1435 = vmatpush.bf16.msra.mxu0 0
    %1436 = vmatpush.bf16.msra.mxu0 0
    %1437 = vmatpush.bf16.msra.mxu0 0
    %1438 = vmatpush.bf16.msra.mxu0 0
    %1439 = vmatpush.bf16.msra.mxu0 0
    %1440 = vmatpush.bf16.msra.mxu0 0
    %1441 = vmatpush.bf16.msra.mxu0 %v1432
    %1442 = vmatpush.bf16.msra.mxu0 %v1431
    %1443 = vmatmul.bf16.gmra.mxu0 %v1401
    %v1444 = vpop.f32.mrf.mxu0
    %v1445 = vadd.f32 %v1422, %v1444
    %v1446 = vpop.f32.mrf.mxu0
    %v1447 = vadd.f32 %v1422, %v1446
    %1448 = vdwg.mxu0
    %v1449 = vld [vmem:[%s16] sm:$0xf]
    %v1450 = vld [vmem:[%s16 + $0x4] sm:$0xf]
    %v1451 = vld [vmem:[%s16 + $0x8] sm:$0xf]
    %v1452 = vld [vmem:[%s16 + $0xc] sm:$0xf]
    %v1453 = vld [vmem:[%s24 + $0x10] sm:$0x1]
    %v1454 = vperm.slane %v1453, 0
    %v1459 = vunpack.c.l.b16 %v1449
    %v1460 = vunpack.c.l.b16 %v1450
    %v1461 = vunpack.c.l.b16 %v1451
    %v1462 = vunpack.c.l.b16 %v1452
    %v1463 = vpack.c.b16 %v1460, %v1459
    %v1464 = vpack.c.b16 %v1462, %v1461
    %1467 = vmatpush.bf16.msra.mxu0 0
    %1468 = vmatpush.bf16.msra.mxu0 0
    %1469 = vmatpush.bf16.msra.mxu0 0
    %1470 = vmatpush.bf16.msra.mxu0 0
    %1471 = vmatpush.bf16.msra.mxu0 0
    %1472 = vmatpush.bf16.msra.mxu0 0
    %1473 = vmatpush.bf16.msra.mxu0 %v1464
    %1474 = vmatpush.bf16.msra.mxu0 %v1463
    %1475 = vmatmul.bf16.gmra.mxu0 %v1401
    %v1476 = vpop.f32.mrf.mxu0
    %v1477 = vadd.f32 %v1454, %v1476
    %v1478 = vpop.f32.mrf.mxu0
    %v1479 = vadd.f32 %v1454, %v1478
    %1480 = vdwg.mxu0
    %v1481 = vpack.c.bf16 %v1447, %v1445
    %v1482 = vsel %vm110, 1, 0
    %vm1483 = vcmp.eq.s32.totalorder %v1482, 1
    %v1484 = vsel %vm1483, %v1413, 0.0
    %v1485 = vsel %vm1483, %v1415, 0.0
    %v1486 = vsel %vm113, 1, 0
    %vm1487 = vcmp.eq.s32.totalorder %v1486, 1
    %v1488 = vsel %vm1487, %v1413, 0.0
    %v1489 = vsel %vm1487, %v1415, 0.0
    %v1490 = vsel %vm116, 1, 0
    %vm1491 = vcmp.eq.s32.totalorder %v1490, 1
    %v1492 = vsel %vm1491, %v1413, 0.0
    %v1493 = vsel %vm1491, %v1415, 0.0
    %v1494 = vsel %vm119, 1, 0
    %vm1495 = vcmp.eq.s32.totalorder %v1494, 1
    %v1496 = vsel %vm1495, %v1413, 0.0
    %v1497 = vsel %vm1495, %v1415, 0.0
    %v1498 = vpack.c.bf16 %v1485, %v1484
    %v1499 = vpack.c.bf16 %v1489, %v1488
    %v1500 = vpack.c.bf16 %v1493, %v1492
    %v1501 = vpack.c.bf16 %v1497, %v1496
    %v1503 = vsel %vm207, %v1498, 0
    %v1506 = vsel %vm207, %v1499, 0
    %v1509 = vsel %vm207, %v1500, 0
    %v1512 = vsel %vm207, %v1501, 0
    %v1515 = vsel %vm207, %v1481, 0
    %1517 = vmatpush.bf16.xpose.msra.mxu0 0
    %1518 = vmatpush.bf16.xpose.msra.mxu0 0
    %1519 = vmatpush.bf16.xpose.msra.mxu0 0
    %1520 = vmatpush.bf16.xpose.msra.mxu0 0
    %1521 = vmatpush.bf16.xpose.msra.mxu0 0
    %1522 = vmatpush.bf16.xpose.msra.mxu0 0
    %1523 = vmatpush.bf16.xpose.msra.mxu0 0
    %1524 = vmatpush.bf16.xpose.msra.mxu0 %v1515
    %1525 = vmatmul.bf16.gmra.mxu0 %v1503
    %v1526 = vpop.f32.mrf.mxu0
    %v1527 = vadd.f32 0.0, %v1526
    %v1528 = vpop.f32.mrf.mxu0
    %v1529 = vadd.f32 0.0, %v1528
    %1530 = vmatmul.bf16.gmra.mxu0 %v1506
    %v1531 = vpop.f32.mrf.mxu0
    %v1532 = vadd.f32 0.0, %v1531
    %v1533 = vpop.f32.mrf.mxu0
    %v1534 = vadd.f32 0.0, %v1533
    %1535 = vmatmul.bf16.gmra.mxu0 %v1509
    %v1536 = vpop.f32.mrf.mxu0
    %v1537 = vadd.f32 0.0, %v1536
    %v1538 = vpop.f32.mrf.mxu0
    %v1539 = vadd.f32 0.0, %v1538
    %1540 = vmatmul.bf16.gmra.mxu0 %v1512
    %v1541 = vpop.f32.mrf.mxu0
    %v1542 = vadd.f32 0.0, %v1541
    %v1543 = vpop.f32.mrf.mxu0
    %v1544 = vadd.f32 0.0, %v1543
    %1545 = vdwg.mxu0
    %v1546 = vmul.f32 %v1527, 0.35355338
    %v1547 = vmul.f32 %v1529, 0.35355338
    %v1548 = vmul.f32 %v1532, 0.35355338
    %v1549 = vmul.f32 %v1534, 0.35355338
    %v1550 = vmul.f32 %v1537, 0.35355338
    %v1551 = vmul.f32 %v1539, 0.35355338
    %v1552 = vmul.f32 %v1542, 0.35355338
    %v1553 = vmul.f32 %v1544, 0.35355338
    %v1554 = vadd.f32 %v1546, %v1377
    %v1555 = vadd.f32 %v1547, %v1378
    %v1556 = vadd.f32 %v1548, %v1377
    %v1557 = vadd.f32 %v1549, %v1378
    %v1558 = vadd.f32 %v1550, %v1377
    %v1559 = vadd.f32 %v1551, %v1378
    %v1560 = vadd.f32 %v1552, %v1377
    %v1561 = vadd.f32 %v1553, %v1378
    %vm1562 = vcmask 130048
    %v1563 = vsel %vm1562, %v1554, -inf
    %1564 = vmax.xlane.f32.xlu0 %v1563
    %v1565 = vpop.xlane.xlu0 %1564
    %v1566 = vsel %vm1562, %v1555, -inf
    %1567 = vmax.xlane.f32.xlu0 %v1566
    %v1568 = vpop.xlane.xlu0 %1567
    %v1569 = vsel %vm1562, %v1556, -inf
    %1570 = vmax.xlane.f32.xlu0 %v1569
    %v1571 = vpop.xlane.xlu0 %1570
    %v1572 = vsel %vm1562, %v1557, -inf
    %1573 = vmax.xlane.f32.xlu0 %v1572
    %v1574 = vpop.xlane.xlu0 %1573
    %v1575 = vsel %vm1562, %v1558, -inf
    %1576 = vmax.xlane.f32.xlu0 %v1575
    %v1577 = vpop.xlane.xlu0 %1576
    %v1578 = vsel %vm1562, %v1559, -inf
    %1579 = vmax.xlane.f32.xlu0 %v1578
    %v1580 = vpop.xlane.xlu0 %1579
    %v1581 = vsel %vm1562, %v1560, -inf
    %1582 = vmax.xlane.f32.xlu0 %v1581
    %v1583 = vpop.xlane.xlu0 %1582
    %v1584 = vsel %vm1562, %v1561, -inf
    %1585 = vmax.xlane.f32.xlu0 %v1584
    %v1586 = vpop.xlane.xlu0 %1585
    %v1587 = vsub.f32 %v1554, %v1565
    %v1588 = vsub.f32 %v1555, %v1568
    %v1589 = vsub.f32 %v1556, %v1571
    %v1590 = vsub.f32 %v1557, %v1574
    %v1591 = vsub.f32 %v1558, %v1577
    %v1592 = vsub.f32 %v1559, %v1580
    %v1593 = vsub.f32 %v1560, %v1583
    %v1594 = vsub.f32 %v1561, %v1586
    %v1595 = vmul.f32 %v1587, 1.442695
    %v1596 = vpow.pop %v1595
    %v1597 = vmul.f32 %v1588, 1.442695
    %v1598 = vpow.pop %v1597
    %v1599 = vmul.f32 %v1589, 1.442695
    %v1600 = vpow.pop %v1599
    %v1601 = vmul.f32 %v1590, 1.442695
    %v1602 = vpow.pop %v1601
    %v1603 = vmul.f32 %v1591, 1.442695
    %v1604 = vpow.pop %v1603
    %v1605 = vmul.f32 %v1592, 1.442695
    %v1606 = vpow.pop %v1605
    %v1607 = vmul.f32 %v1593, 1.442695
    %v1608 = vpow.pop %v1607
    %v1609 = vmul.f32 %v1594, 1.442695
    %v1610 = vpow.pop %v1609
    %v1611 = vsel %vm1562, %v1596, 0.0
    %1612 = vadd.xlane.f32.xlu0 %v1611
    %v1613 = vpop.xlane.xlu0 %1612
    %v1614 = vsel %vm1562, %v1598, 0.0
    %1615 = vadd.xlane.f32.xlu0 %v1614
    %v1616 = vpop.xlane.xlu0 %1615
    %v1617 = vsel %vm1562, %v1600, 0.0
    %1618 = vadd.xlane.f32.xlu0 %v1617
    %v1619 = vpop.xlane.xlu0 %1618
    %v1620 = vsel %vm1562, %v1602, 0.0
    %1621 = vadd.xlane.f32.xlu0 %v1620
    %v1622 = vpop.xlane.xlu0 %1621
    %v1623 = vsel %vm1562, %v1604, 0.0
    %1624 = vadd.xlane.f32.xlu0 %v1623
    %v1625 = vpop.xlane.xlu0 %1624
    %v1626 = vsel %vm1562, %v1606, 0.0
    %1627 = vadd.xlane.f32.xlu0 %v1626
    %v1628 = vpop.xlane.xlu0 %1627
    %v1629 = vsel %vm1562, %v1608, 0.0
    %1630 = vadd.xlane.f32.xlu0 %v1629
    %v1631 = vpop.xlane.xlu0 %1630
    %v1632 = vsel %vm1562, %v1610, 0.0
    %1633 = vadd.xlane.f32.xlu0 %v1632
    %v1634 = vpop.xlane.xlu0 %1633
    %v1635 = vrcp.pop %v1613
    %v1636 = vrcp.pop %v1616
    %v1637 = vrcp.pop %v1619
    %v1638 = vrcp.pop %v1622
    %v1639 = vrcp.pop %v1625
    %v1640 = vrcp.pop %v1628
    %v1641 = vrcp.pop %v1631
    %v1642 = vrcp.pop %v1634
    %v1643 = vmul.f32 %v1596, %v1635
    %v1644 = vmul.f32 %v1598, %v1636
    %v1645 = vmul.f32 %v1600, %v1637
    %v1646 = vmul.f32 %v1602, %v1638
    %v1647 = vmul.f32 %v1604, %v1639
    %v1648 = vmul.f32 %v1606, %v1640
    %v1649 = vmul.f32 %v1608, %v1641
    %v1650 = vmul.f32 %v1610, %v1642
    %v1651 = vpack.c.bf16 %v1644, %v1643
    %v1652 = vpack.c.bf16 %v1646, %v1645
    %v1653 = vpack.c.bf16 %v1648, %v1647
    %v1654 = vpack.c.bf16 %v1650, %v1649
    %v1655 = vpack.c.bf16 %v1479, %v1477
    %v1657 = vsel %vm1562, %v1651, 0
    %v1660 = vsel %vm1562, %v1652, 0
    %v1663 = vsel %vm1562, %v1653, 0
    %v1666 = vsel %vm1562, %v1654, 0
    %1668 = vmatpush.bf16.msra.mxu0 0
    %1669 = vmatpush.bf16.msra.mxu0 0
    %1670 = vmatpush.bf16.msra.mxu0 0
    %1671 = vmatpush.bf16.msra.mxu0 0
    %1672 = vmatpush.bf16.msra.mxu0 0
    %1673 = vmatpush.bf16.msra.mxu0 0
    %1674 = vmatpush.bf16.msra.mxu0 0
    %1675 = vmatpush.bf16.msra.mxu0 %v1655
    %1676 = vmatmul.bf16.gmra.mxu0 %v1657
    %v1677 = vpop.f32.mrf.mxu0
    %v1678 = vadd.f32 0.0, %v1677
    %v1679 = vpop.f32.mrf.mxu0
    %v1680 = vadd.f32 0.0, %v1679
    %1681 = vmatmul.bf16.gmra.mxu0 %v1660
    %v1682 = vpop.f32.mrf.mxu0
    %v1683 = vadd.f32 0.0, %v1682
    %v1684 = vpop.f32.mrf.mxu0
    %v1685 = vadd.f32 0.0, %v1684
    %1686 = vmatmul.bf16.gmra.mxu0 %v1663
    %v1687 = vpop.f32.mrf.mxu0
    %v1688 = vadd.f32 0.0, %v1687
    %v1689 = vpop.f32.mrf.mxu0
    %v1690 = vadd.f32 0.0, %v1689
    %1691 = vmatmul.bf16.gmra.mxu0 %v1666
    %v1692 = vpop.f32.mrf.mxu0
    %v1693 = vadd.f32 0.0, %v1692
    %v1694 = vpop.f32.mrf.mxu0
    %v1695 = vadd.f32 0.0, %v1694
    %1696 = vdwg.mxu0
    %v1697 = vsel %vm1483, %v1678, 0.0
    %v1698 = vsel %vm1483, %v1680, 0.0
    %v1699 = vadd.f32 %v1697, 0.0
    %v1700 = vadd.f32 %v1698, 0.0
    %v1701 = vsel %vm1487, %v1683, 0.0
    %v1702 = vsel %vm1487, %v1685, 0.0
    %v1703 = vadd.f32 %v1699, %v1701
    %v1704 = vadd.f32 %v1700, %v1702
    %v1705 = vsel %vm1491, %v1688, 0.0
    %v1706 = vsel %vm1491, %v1690, 0.0
    %v1707 = vadd.f32 %v1703, %v1705
    %v1708 = vadd.f32 %v1704, %v1706
    %v1709 = vsel %vm1495, %v1693, 0.0
    %v1710 = vsel %vm1495, %v1695, 0.0
    %v1711 = vadd.f32 %v1707, %v1709
    %v1712 = vadd.f32 %v1708, %v1710
    %v1713 = vpack.c.bf16 %v1712, %v1711
    %v1714 = vld [vmem:[%s17] sm:$0xf]
    %v1715 = vld [vmem:[%s17 + $0x4] sm:$0xf]
    %v1716 = vld [vmem:[%s17 + $0x8] sm:$0xf]
    %v1717 = vld [vmem:[%s17 + $0xc] sm:$0xf]
    %v1718 = vld [vmem:[%s24 + $0x11] sm:$0x1]
    %v1719 = vperm.slane %v1718, 0
    %v1724 = vunpack.c.l.b16 %v1714
    %v1725 = vunpack.c.l.b16 %v1715
    %v1726 = vunpack.c.l.b16 %v1716
    %v1727 = vunpack.c.l.b16 %v1717
    %v1728 = vpack.c.b16 %v1725, %v1724
    %v1729 = vpack.c.b16 %v1727, %v1726
    %v1733 = vsel %vm207, %v1713, 0
    %1735 = vmatpush.bf16.msra.mxu0 0
    %1736 = vmatpush.bf16.msra.mxu0 0
    %1737 = vmatpush.bf16.msra.mxu0 0
    %1738 = vmatpush.bf16.msra.mxu0 0
    %1739 = vmatpush.bf16.msra.mxu0 0
    %1740 = vmatpush.bf16.msra.mxu0 0
    %1741 = vmatpush.bf16.msra.mxu0 %v1729
    %1742 = vmatpush.bf16.msra.mxu0 %v1728
    %1743 = vmatmul.bf16.gmra.mxu0 %v1733
    %v1744 = vpop.f32.mrf.mxu0
    %v1745 = vadd.f32 %v1719, %v1744
    %v1746 = vpop.f32.mrf.mxu0
    %v1747 = vadd.f32 %v1719, %v1746
    %1748 = vdwg.mxu0
    %v1749 = vadd.f32 %v1375, %v1745
    %v1750 = vadd.f32 %v1376, %v1747
    %v1751 = vld [vmem:[%s24 + $0x12] sm:$0x1]
    %v1752 = vld [vmem:[%s24 + $0x13] sm:$0x1]
    %v1753 = vsel %vm207, %v1749, 0.0
    %1754 = vadd.xlane.f32.xlu0 %v1753
    %v1755 = vpop.xlane.xlu0 %1754
    %v1756 = vsel %vm207, %v1750, 0.0
    %1757 = vadd.xlane.f32.xlu0 %v1756
    %v1758 = vpop.xlane.xlu0 %1757
    %v1759 = vmul.f32 %v1755, %v226
    %v1760 = vmul.f32 %v1758, %v226
    %v1761 = vsub.f32 %v1749, %v1759
    %v1762 = vsub.f32 %v1750, %v1760
    %v1763 = vmul.f32 %v1761, %v1761
    %v1764 = vmul.f32 %v1762, %v1762
    %v1765 = vsel %vm207, %v1763, 0.0
    %1766 = vadd.xlane.f32.xlu0 %v1765
    %v1767 = vpop.xlane.xlu0 %1766
    %v1768 = vsel %vm207, %v1764, 0.0
    %1769 = vadd.xlane.f32.xlu0 %v1768
    %v1770 = vpop.xlane.xlu0 %1769
    %v1771 = vmul.f32 %v1767, %v226
    %v1772 = vmul.f32 %v1770, %v226
    %v1773 = vadd.f32 %v1771, 1e-05
    %v1774 = vadd.f32 %v1772, 1e-05
    %v1775 = vrsqrt.pop %v1773
    %v1776 = vmul.f32 %v1775, %v1773
    %v1777 = vmul.f32 %v1776, %v1775
    %v1778 = vmul.f32 0.5, %v1777
    %v1779 = vsub.f32 1.5, %v1778
    %v1780 = vmul.f32 %v1775, %v1779
    %vm1781 = vweird.f32 %v1773
    %vm1782 = vweird.f32 %v1775
    %vm1783 = vmor %vm1781, %vm1782
    %v1784 = vsel %vm1783, %v1775, %v1780
    %v1785 = vrsqrt.pop %v1774
    %v1786 = vmul.f32 %v1785, %v1774
    %v1787 = vmul.f32 %v1786, %v1785
    %v1788 = vmul.f32 0.5, %v1787
    %v1789 = vsub.f32 1.5, %v1788
    %v1790 = vmul.f32 %v1785, %v1789
    %vm1791 = vweird.f32 %v1774
    %vm1792 = vweird.f32 %v1785
    %vm1793 = vmor %vm1791, %vm1792
    %v1794 = vsel %vm1793, %v1785, %v1790
    %v1795 = vmul.f32 %v1761, %v1784
    %v1796 = vmul.f32 %v1762, %v1794
    %v1797 = vperm.slane %v1751, 0
    %v1798 = vmul.f32 %v1795, %v1797
    %v1799 = vmul.f32 %v1796, %v1797
    %v1800 = vperm.slane %v1752, 0
    %v1801 = vadd.f32 %v1798, %v1800
    %v1802 = vadd.f32 %v1799, %v1800
    %v1803 = vpack.c.bf16 %v1802, %v1801
    %v1804 = vld [vmem:[%s18] sm:$0xf]
    %v1805 = vld [vmem:[%s18 + $0x4] sm:$0xf]
    %v1806 = vld [vmem:[%s18 + $0x8] sm:$0xf]
    %v1807 = vld [vmem:[%s18 + $0xc] sm:$0xf]
    %v1808 = vld [vmem:[%s24 + $0x14] sm:$0x1]
    %v1809 = vperm.slane %v1808, 0
    %v1814 = vunpack.c.l.b16 %v1804
    %v1815 = vunpack.c.l.b16 %v1805
    %v1816 = vunpack.c.l.b16 %v1806
    %v1817 = vunpack.c.l.b16 %v1807
    %v1818 = vpack.c.b16 %v1815, %v1814
    %v1819 = vpack.c.b16 %v1817, %v1816
    %v1823 = vsel %vm207, %v1803, 0
    %1825 = vmatpush.bf16.msra.mxu0 0
    %1826 = vmatpush.bf16.msra.mxu0 0
    %1827 = vmatpush.bf16.msra.mxu0 0
    %1828 = vmatpush.bf16.msra.mxu0 0
    %1829 = vmatpush.bf16.msra.mxu0 0
    %1830 = vmatpush.bf16.msra.mxu0 0
    %1831 = vmatpush.bf16.msra.mxu0 %v1819
    %1832 = vmatpush.bf16.msra.mxu0 %v1818
    %1833 = vmatmul.bf16.gmra.mxu0 %v1823
    %v1834 = vpop.f32.mrf.mxu0
    %v1835 = vadd.f32 %v1809, %v1834
    %v1836 = vpop.f32.mrf.mxu0
    %v1837 = vadd.f32 %v1809, %v1836
    %1838 = vdwg.mxu0
    %v1839 = vld [vmem:[%s19] sm:$0xf]
    %v1840 = vld [vmem:[%s19 + $0x4] sm:$0xf]
    %v1841 = vld [vmem:[%s19 + $0x8] sm:$0xf]
    %v1842 = vld [vmem:[%s19 + $0xc] sm:$0xf]
    %v1843 = vld [vmem:[%s24 + $0x15] sm:$0x1]
    %v1844 = vperm.slane %v1843, 0
    %v1849 = vunpack.c.l.b16 %v1839
    %v1850 = vunpack.c.l.b16 %v1840
    %v1851 = vunpack.c.l.b16 %v1841
    %v1852 = vunpack.c.l.b16 %v1842
    %v1853 = vpack.c.b16 %v1850, %v1849
    %v1854 = vpack.c.b16 %v1852, %v1851
    %v1858 = vsel %vm207, %v1272, 0
    %v1861 = vsel %vm207, %v1273, 0
    %1863 = vmatpush.bf16.msra.mxu0 0
    %1864 = vmatpush.bf16.msra.mxu0 0
    %1865 = vmatpush.bf16.msra.mxu0 0
    %1866 = vmatpush.bf16.msra.mxu0 0
    %1867 = vmatpush.bf16.msra.mxu0 0
    %1868 = vmatpush.bf16.msra.mxu0 0
    %1869 = vmatpush.bf16.msra.mxu0 %v1854
    %1870 = vmatpush.bf16.msra.mxu0 %v1853
    %1871 = vmatmul.bf16.gmra.mxu0 %v1858
    %v1872 = vpop.f32.mrf.mxu0
    %v1873 = vadd.f32 %v1844, %v1872
    %v1874 = vpop.f32.mrf.mxu0
    %v1875 = vadd.f32 %v1844, %v1874
    %1876 = vmatmul.bf16.gmra.mxu0 %v1861
    %v1877 = vpop.f32.mrf.mxu0
    %v1878 = vadd.f32 %v1844, %v1877
    %v1879 = vpop.f32.mrf.mxu0
    %v1880 = vadd.f32 %v1844, %v1879
    %1881 = vdwg.mxu0
    %v1882 = vld [vmem:[%s20] sm:$0xf]
    %v1883 = vld [vmem:[%s20 + $0x4] sm:$0xf]
    %v1884 = vld [vmem:[%s20 + $0x8] sm:$0xf]
    %v1885 = vld [vmem:[%s20 + $0xc] sm:$0xf]
    %v1886 = vld [vmem:[%s24 + $0x16] sm:$0x1]
    %v1887 = vperm.slane %v1886, 0
    %v1892 = vunpack.c.l.b16 %v1882
    %v1893 = vunpack.c.l.b16 %v1883
    %v1894 = vunpack.c.l.b16 %v1884
    %v1895 = vunpack.c.l.b16 %v1885
    %v1896 = vpack.c.b16 %v1893, %v1892
    %v1897 = vpack.c.b16 %v1895, %v1894
    %1900 = vmatpush.bf16.msra.mxu0 0
    %1901 = vmatpush.bf16.msra.mxu0 0
    %1902 = vmatpush.bf16.msra.mxu0 0
    %1903 = vmatpush.bf16.msra.mxu0 0
    %1904 = vmatpush.bf16.msra.mxu0 0
    %1905 = vmatpush.bf16.msra.mxu0 0
    %1906 = vmatpush.bf16.msra.mxu0 %v1897
    %1907 = vmatpush.bf16.msra.mxu0 %v1896
    %1908 = vmatmul.bf16.gmra.mxu0 %v1858
    %v1909 = vpop.f32.mrf.mxu0
    %v1910 = vadd.f32 %v1887, %v1909
    %v1911 = vpop.f32.mrf.mxu0
    %v1912 = vadd.f32 %v1887, %v1911
    %1913 = vmatmul.bf16.gmra.mxu0 %v1861
    %v1914 = vpop.f32.mrf.mxu0
    %v1915 = vadd.f32 %v1887, %v1914
    %v1916 = vpop.f32.mrf.mxu0
    %v1917 = vadd.f32 %v1887, %v1916
    %1918 = vdwg.mxu0
    %v1919 = vpack.c.bf16 %v1875, %v1873
    %v1920 = vpack.c.bf16 %v1880, %v1878
    %v1921 = vsel %vm1483, %v1835, 0.0
    %v1922 = vsel %vm1483, %v1837, 0.0
    %v1923 = vsel %vm1487, %v1835, 0.0
    %v1924 = vsel %vm1487, %v1837, 0.0
    %v1925 = vsel %vm1491, %v1835, 0.0
    %v1926 = vsel %vm1491, %v1837, 0.0
    %v1927 = vsel %vm1495, %v1835, 0.0
    %v1928 = vsel %vm1495, %v1837, 0.0
    %v1929 = vpack.c.bf16 %v1922, %v1921
    %v1930 = vpack.c.bf16 %v1924, %v1923
    %v1931 = vpack.c.bf16 %v1926, %v1925
    %v1932 = vpack.c.bf16 %v1928, %v1927
    %v1934 = vsel %vm207, %v1929, 0
    %v1937 = vsel %vm207, %v1930, 0
    %v1940 = vsel %vm207, %v1931, 0
    %v1943 = vsel %vm207, %v1932, 0
    %v1946 = vsel %vm207, %v1919, 0
    %v1949 = vsel %vm207, %v1920, 0
    %1951 = vmatpush.bf16.xpose.msra.mxu0 0
    %1952 = vmatpush.bf16.xpose.msra.mxu0 0
    %1953 = vmatpush.bf16.xpose.msra.mxu0 0
    %1954 = vmatpush.bf16.xpose.msra.mxu0 0
    %1955 = vmatpush.bf16.xpose.msra.mxu0 0
    %1956 = vmatpush.bf16.xpose.msra.mxu0 0
    %1957 = vmatpush.bf16.xpose.msra.mxu0 %v1949
    %1958 = vmatpush.bf16.xpose.msra.mxu0 %v1946
    %1959 = vmatmul.bf16.gmra.mxu0 %v1934
    %v1960 = vpop.f32.mrf.mxu0
    %v1961 = vadd.f32 0.0, %v1960
    %v1962 = vpop.f32.mrf.mxu0
    %v1963 = vadd.f32 0.0, %v1962
    %1964 = vmatmul.bf16.gmra.mxu0 %v1937
    %v1965 = vpop.f32.mrf.mxu0
    %v1966 = vadd.f32 0.0, %v1965
    %v1967 = vpop.f32.mrf.mxu0
    %v1968 = vadd.f32 0.0, %v1967
    %1969 = vmatmul.bf16.gmra.mxu0 %v1940
    %v1970 = vpop.f32.mrf.mxu0
    %v1971 = vadd.f32 0.0, %v1970
    %v1972 = vpop.f32.mrf.mxu0
    %v1973 = vadd.f32 0.0, %v1972
    %1974 = vmatmul.bf16.gmra.mxu0 %v1943
    %v1975 = vpop.f32.mrf.mxu0
    %v1976 = vadd.f32 0.0, %v1975
    %v1977 = vpop.f32.mrf.mxu0
    %v1978 = vadd.f32 0.0, %v1977
    %1979 = vdwg.mxu0
    %v1980 = vmul.f32 %v1961, 0.35355338
    %v1981 = vmul.f32 %v1963, 0.35355338
    %v1982 = vmul.f32 %v1966, 0.35355338
    %v1983 = vmul.f32 %v1968, 0.35355338
    %v1984 = vmul.f32 %v1971, 0.35355338
    %v1985 = vmul.f32 %v1973, 0.35355338
    %v1986 = vmul.f32 %v1976, 0.35355338
    %v1987 = vmul.f32 %v1978, 0.35355338
    %v1988 = vadd.f32 %v1980, %v1379
    %v1989 = vadd.f32 %v1981, %v1380
    %v1990 = vadd.f32 %v1982, %v1379
    %v1991 = vadd.f32 %v1983, %v1380
    %v1992 = vadd.f32 %v1984, %v1379
    %v1993 = vadd.f32 %v1985, %v1380
    %v1994 = vadd.f32 %v1986, %v1379
    %v1995 = vadd.f32 %v1987, %v1380
    %v1996 = vsel %vm207, %v1988, -inf
    %1997 = vmax.xlane.f32.xlu0 %v1996
    %v1998 = vpop.xlane.xlu0 %1997
    %v1999 = vsel %vm207, %v1989, -inf
    %2000 = vmax.xlane.f32.xlu0 %v1999
    %v2001 = vpop.xlane.xlu0 %2000
    %v2002 = vsel %vm207, %v1990, -inf
    %2003 = vmax.xlane.f32.xlu0 %v2002
    %v2004 = vpop.xlane.xlu0 %2003
    %v2005 = vsel %vm207, %v1991, -inf
    %2006 = vmax.xlane.f32.xlu0 %v2005
    %v2007 = vpop.xlane.xlu0 %2006
    %v2008 = vsel %vm207, %v1992, -inf
    %2009 = vmax.xlane.f32.xlu0 %v2008
    %v2010 = vpop.xlane.xlu0 %2009
    %v2011 = vsel %vm207, %v1993, -inf
    %2012 = vmax.xlane.f32.xlu0 %v2011
    %v2013 = vpop.xlane.xlu0 %2012
    %v2014 = vsel %vm207, %v1994, -inf
    %2015 = vmax.xlane.f32.xlu0 %v2014
    %v2016 = vpop.xlane.xlu0 %2015
    %v2017 = vsel %vm207, %v1995, -inf
    %2018 = vmax.xlane.f32.xlu0 %v2017
    %v2019 = vpop.xlane.xlu0 %2018
    %v2020 = vsub.f32 %v1988, %v1998
    %v2021 = vsub.f32 %v1989, %v2001
    %v2022 = vsub.f32 %v1990, %v2004
    %v2023 = vsub.f32 %v1991, %v2007
    %v2024 = vsub.f32 %v1992, %v2010
    %v2025 = vsub.f32 %v1993, %v2013
    %v2026 = vsub.f32 %v1994, %v2016
    %v2027 = vsub.f32 %v1995, %v2019
    %v2028 = vmul.f32 %v2020, 1.442695
    %v2029 = vpow.pop %v2028
    %v2030 = vmul.f32 %v2021, 1.442695
    %v2031 = vpow.pop %v2030
    %v2032 = vmul.f32 %v2022, 1.442695
    %v2033 = vpow.pop %v2032
    %v2034 = vmul.f32 %v2023, 1.442695
    %v2035 = vpow.pop %v2034
    %v2036 = vmul.f32 %v2024, 1.442695
    %v2037 = vpow.pop %v2036
    %v2038 = vmul.f32 %v2025, 1.442695
    %v2039 = vpow.pop %v2038
    %v2040 = vmul.f32 %v2026, 1.442695
    %v2041 = vpow.pop %v2040
    %v2042 = vmul.f32 %v2027, 1.442695
    %v2043 = vpow.pop %v2042
    %v2044 = vsel %vm207, %v2029, 0.0
    %2045 = vadd.xlane.f32.xlu0 %v2044
    %v2046 = vpop.xlane.xlu0 %2045
    %v2047 = vsel %vm207, %v2031, 0.0
    %2048 = vadd.xlane.f32.xlu0 %v2047
    %v2049 = vpop.xlane.xlu0 %2048
    %v2050 = vsel %vm207, %v2033, 0.0
    %2051 = vadd.xlane.f32.xlu0 %v2050
    %v2052 = vpop.xlane.xlu0 %2051
    %v2053 = vsel %vm207, %v2035, 0.0
    %2054 = vadd.xlane.f32.xlu0 %v2053
    %v2055 = vpop.xlane.xlu0 %2054
    %v2056 = vsel %vm207, %v2037, 0.0
    %2057 = vadd.xlane.f32.xlu0 %v2056
    %v2058 = vpop.xlane.xlu0 %2057
    %v2059 = vsel %vm207, %v2039, 0.0
    %2060 = vadd.xlane.f32.xlu0 %v2059
    %v2061 = vpop.xlane.xlu0 %2060
    %v2062 = vsel %vm207, %v2041, 0.0
    %2063 = vadd.xlane.f32.xlu0 %v2062
    %v2064 = vpop.xlane.xlu0 %2063
    %v2065 = vsel %vm207, %v2043, 0.0
    %2066 = vadd.xlane.f32.xlu0 %v2065
    %v2067 = vpop.xlane.xlu0 %2066
    %v2068 = vrcp.pop %v2046
    %v2069 = vrcp.pop %v2049
    %v2070 = vrcp.pop %v2052
    %v2071 = vrcp.pop %v2055
    %v2072 = vrcp.pop %v2058
    %v2073 = vrcp.pop %v2061
    %v2074 = vrcp.pop %v2064
    %v2075 = vrcp.pop %v2067
    %v2076 = vmul.f32 %v2029, %v2068
    %v2077 = vmul.f32 %v2031, %v2069
    %v2078 = vmul.f32 %v2033, %v2070
    %v2079 = vmul.f32 %v2035, %v2071
    %v2080 = vmul.f32 %v2037, %v2072
    %v2081 = vmul.f32 %v2039, %v2073
    %v2082 = vmul.f32 %v2041, %v2074
    %v2083 = vmul.f32 %v2043, %v2075
    %v2084 = vpack.c.bf16 %v2077, %v2076
    %v2085 = vpack.c.bf16 %v2079, %v2078
    %v2086 = vpack.c.bf16 %v2081, %v2080
    %v2087 = vpack.c.bf16 %v2083, %v2082
    %v2088 = vpack.c.bf16 %v1912, %v1910
    %v2089 = vpack.c.bf16 %v1917, %v1915
    %v2091 = vsel %vm207, %v2084, 0
    %v2094 = vsel %vm207, %v2085, 0
    %v2097 = vsel %vm207, %v2086, 0
    %v2100 = vsel %vm207, %v2087, 0
    %2102 = vmatpush.bf16.msra.mxu0 0
    %2103 = vmatpush.bf16.msra.mxu0 0
    %2104 = vmatpush.bf16.msra.mxu0 0
    %2105 = vmatpush.bf16.msra.mxu0 0
    %2106 = vmatpush.bf16.msra.mxu0 0
    %2107 = vmatpush.bf16.msra.mxu0 0
    %2108 = vmatpush.bf16.msra.mxu0 %v2089
    %2109 = vmatpush.bf16.msra.mxu0 %v2088
    %2110 = vmatmul.bf16.gmra.mxu0 %v2091
    %v2111 = vpop.f32.mrf.mxu0
    %v2112 = vadd.f32 0.0, %v2111
    %v2113 = vpop.f32.mrf.mxu0
    %v2114 = vadd.f32 0.0, %v2113
    %2115 = vmatmul.bf16.gmra.mxu0 %v2094
    %v2116 = vpop.f32.mrf.mxu0
    %v2117 = vadd.f32 0.0, %v2116
    %v2118 = vpop.f32.mrf.mxu0
    %v2119 = vadd.f32 0.0, %v2118
    %2120 = vmatmul.bf16.gmra.mxu0 %v2097
    %v2121 = vpop.f32.mrf.mxu0
    %v2122 = vadd.f32 0.0, %v2121
    %v2123 = vpop.f32.mrf.mxu0
    %v2124 = vadd.f32 0.0, %v2123
    %2125 = vmatmul.bf16.gmra.mxu0 %v2100
    %v2126 = vpop.f32.mrf.mxu0
    %v2127 = vadd.f32 0.0, %v2126
    %v2128 = vpop.f32.mrf.mxu0
    %v2129 = vadd.f32 0.0, %v2128
    %2130 = vdwg.mxu0
    %v2131 = vsel %vm1483, %v2112, 0.0
    %v2132 = vsel %vm1483, %v2114, 0.0
    %v2133 = vadd.f32 %v2131, 0.0
    %v2134 = vadd.f32 %v2132, 0.0
    %v2135 = vsel %vm1487, %v2117, 0.0
    %v2136 = vsel %vm1487, %v2119, 0.0
    %v2137 = vadd.f32 %v2133, %v2135
    %v2138 = vadd.f32 %v2134, %v2136
    %v2139 = vsel %vm1491, %v2122, 0.0
    %v2140 = vsel %vm1491, %v2124, 0.0
    %v2141 = vadd.f32 %v2137, %v2139
    %v2142 = vadd.f32 %v2138, %v2140
    %v2143 = vsel %vm1495, %v2127, 0.0
    %v2144 = vsel %vm1495, %v2129, 0.0
    %v2145 = vadd.f32 %v2141, %v2143
    %v2146 = vadd.f32 %v2142, %v2144
    %v2147 = vpack.c.bf16 %v2146, %v2145
    %v2148 = vld [vmem:[%s21] sm:$0xf]
    %v2149 = vld [vmem:[%s21 + $0x4] sm:$0xf]
    %v2150 = vld [vmem:[%s21 + $0x8] sm:$0xf]
    %v2151 = vld [vmem:[%s21 + $0xc] sm:$0xf]
    %v2152 = vld [vmem:[%s24 + $0x17] sm:$0x1]
    %v2153 = vperm.slane %v2152, 0
    %v2158 = vunpack.c.l.b16 %v2148
    %v2159 = vunpack.c.l.b16 %v2149
    %v2160 = vunpack.c.l.b16 %v2150
    %v2161 = vunpack.c.l.b16 %v2151
    %v2162 = vpack.c.b16 %v2159, %v2158
    %v2163 = vpack.c.b16 %v2161, %v2160
    %v2167 = vsel %vm207, %v2147, 0
    %2169 = vmatpush.bf16.msra.mxu0 0
    %2170 = vmatpush.bf16.msra.mxu0 0
    %2171 = vmatpush.bf16.msra.mxu0 0
    %2172 = vmatpush.bf16.msra.mxu0 0
    %2173 = vmatpush.bf16.msra.mxu0 0
    %2174 = vmatpush.bf16.msra.mxu0 0
    %2175 = vmatpush.bf16.msra.mxu0 %v2163
    %2176 = vmatpush.bf16.msra.mxu0 %v2162
    %2177 = vmatmul.bf16.gmra.mxu0 %v2167
    %v2178 = vpop.f32.mrf.mxu0
    %v2179 = vadd.f32 %v2153, %v2178
    %v2180 = vpop.f32.mrf.mxu0
    %v2181 = vadd.f32 %v2153, %v2180
    %2182 = vdwg.mxu0
    %v2183 = vadd.f32 %v1801, %v2179
    %v2184 = vadd.f32 %v1802, %v2181
    %v2185 = vld [vmem:[%s24 + $0x18] sm:$0x1]
    %v2186 = vld [vmem:[%s24 + $0x19] sm:$0x1]
    %v2187 = vsel %vm207, %v2183, 0.0
    %2188 = vadd.xlane.f32.xlu0 %v2187
    %v2189 = vpop.xlane.xlu0 %2188
    %v2190 = vsel %vm207, %v2184, 0.0
    %2191 = vadd.xlane.f32.xlu0 %v2190
    %v2192 = vpop.xlane.xlu0 %2191
    %v2193 = vmul.f32 %v2189, %v226
    %v2194 = vmul.f32 %v2192, %v226
    %v2195 = vsub.f32 %v2183, %v2193
    %v2196 = vsub.f32 %v2184, %v2194
    %v2197 = vmul.f32 %v2195, %v2195
    %v2198 = vmul.f32 %v2196, %v2196
    %v2199 = vsel %vm207, %v2197, 0.0
    %2200 = vadd.xlane.f32.xlu0 %v2199
    %v2201 = vpop.xlane.xlu0 %2200
    %v2202 = vsel %vm207, %v2198, 0.0
    %2203 = vadd.xlane.f32.xlu0 %v2202
    %v2204 = vpop.xlane.xlu0 %2203
    %v2205 = vmul.f32 %v2201, %v226
    %v2206 = vmul.f32 %v2204, %v226
    %v2207 = vadd.f32 %v2205, 1e-05
    %v2208 = vadd.f32 %v2206, 1e-05
    %v2209 = vrsqrt.pop %v2207
    %v2210 = vmul.f32 %v2209, %v2207
    %v2211 = vmul.f32 %v2210, %v2209
    %v2212 = vmul.f32 0.5, %v2211
    %v2213 = vsub.f32 1.5, %v2212
    %v2214 = vmul.f32 %v2209, %v2213
    %vm2215 = vweird.f32 %v2207
    %vm2216 = vweird.f32 %v2209
    %vm2217 = vmor %vm2215, %vm2216
    %v2218 = vsel %vm2217, %v2209, %v2214
    %v2219 = vrsqrt.pop %v2208
    %v2220 = vmul.f32 %v2219, %v2208
    %v2221 = vmul.f32 %v2220, %v2219
    %v2222 = vmul.f32 0.5, %v2221
    %v2223 = vsub.f32 1.5, %v2222
    %v2224 = vmul.f32 %v2219, %v2223
    %vm2225 = vweird.f32 %v2208
    %vm2226 = vweird.f32 %v2219
    %vm2227 = vmor %vm2225, %vm2226
    %v2228 = vsel %vm2227, %v2219, %v2224
    %v2229 = vmul.f32 %v2195, %v2218
    %v2230 = vmul.f32 %v2196, %v2228
    %v2231 = vperm.slane %v2185, 0
    %v2232 = vmul.f32 %v2229, %v2231
    %v2233 = vmul.f32 %v2230, %v2231
    %v2234 = vperm.slane %v2186, 0
    %v2235 = vadd.f32 %v2232, %v2234
    %v2236 = vadd.f32 %v2233, %v2234
    %v2237 = vpack.c.bf16 %v2236, %v2235
    %v2238 = vld [vmem:[%s22] sm:$0xf]
    %v2239 = vld [vmem:[%s22 + $0x4] sm:$0xf]
    %v2240 = vld [vmem:[%s22 + $0x8] sm:$0xf]
    %v2241 = vld [vmem:[%s22 + $0xc] sm:$0xf]
    %v2242 = vld [vmem:[%s25 + $0x2] sm:$0x1]
    %v2243 = vperm.slane %v2242, 0
    %v2248 = vunpack.c.l.b16 %v2238
    %v2249 = vunpack.c.l.b16 %v2239
    %v2250 = vunpack.c.l.b16 %v2240
    %v2251 = vunpack.c.l.b16 %v2241
    %v2252 = vpack.c.b16 %v2249, %v2248
    %v2253 = vpack.c.b16 %v2251, %v2250
    %v2257 = vsel %vm207, %v2237, 0
    %2259 = vmatpush.bf16.msra.mxu0 0
    %2260 = vmatpush.bf16.msra.mxu0 0
    %2261 = vmatpush.bf16.msra.mxu0 0
    %2262 = vmatpush.bf16.msra.mxu0 0
    %2263 = vmatpush.bf16.msra.mxu0 0
    %2264 = vmatpush.bf16.msra.mxu0 0
    %2265 = vmatpush.bf16.msra.mxu0 %v2253
    %2266 = vmatpush.bf16.msra.mxu0 %v2252
    %2267 = vmatmul.bf16.gmra.mxu0 %v2257
    %v2268 = vpop.f32.mrf.mxu0
    %v2269 = vadd.f32 %v2243, %v2268
    %v2270 = vpop.f32.mrf.mxu0
    %v2271 = vadd.f32 %v2243, %v2270
    %2272 = vdwg.mxu0
    %v2273 = vmax.f32 %v2269, 0.0
    %v2274 = vmax.f32 %v2271, 0.0
    %v2275 = vpack.c.bf16 %v2274, %v2273
    %v2276 = vld [vmem:[%s23] sm:$0xf]
    %v2277 = vld [vmem:[%s23 + $0x4] sm:$0xf]
    %v2278 = vld [vmem:[%s23 + $0x8] sm:$0xf]
    %v2279 = vld [vmem:[%s23 + $0xc] sm:$0xf]
    %v2280 = vld [vmem:[%s23 + $0x10] sm:$0xf]
    %v2281 = vld [vmem:[%s23 + $0x14] sm:$0xf]
    %v2282 = vld [vmem:[%s23 + $0x18] sm:$0xf]
    %v2283 = vld [vmem:[%s23 + $0x1c] sm:$0xf]
    %v2284 = vld [vmem:[%s24 + $0x1a] sm:$0x1]
    %v2285 = vperm.slane %v2284, 0
    %v2294 = vunpack.c.l.b16 %v2276
    %v2295 = vunpack.c.l.b16 %v2277
    %v2296 = vunpack.c.l.b16 %v2278
    %v2297 = vunpack.c.l.b16 %v2279
    %v2298 = vunpack.c.l.b16 %v2280
    %v2299 = vunpack.c.l.b16 %v2281
    %v2300 = vunpack.c.l.b16 %v2282
    %v2301 = vunpack.c.l.b16 %v2283
    %v2302 = vpack.c.b16 %v2295, %v2294
    %v2303 = vpack.c.b16 %v2297, %v2296
    %v2304 = vpack.c.b16 %v2299, %v2298
    %v2305 = vpack.c.b16 %v2301, %v2300
    %v2311 = vsel %vm698, %v2275, 0
    %2313 = vmatpush.bf16.msra.mxu0 0
    %2314 = vmatpush.bf16.msra.mxu0 0
    %2315 = vmatpush.bf16.msra.mxu0 0
    %2316 = vmatpush.bf16.msra.mxu0 0
    %2317 = vmatpush.bf16.msra.mxu0 %v2305
    %2318 = vmatpush.bf16.msra.mxu0 %v2304
    %2319 = vmatpush.bf16.msra.mxu0 %v2303
    %2320 = vmatpush.bf16.msra.mxu0 %v2302
    %2321 = vmatmul.bf16.gmra.mxu0 %v2311
    %v2322 = vpop.f32.mrf.mxu0
    %v2323 = vadd.f32 %v2285, %v2322
    %v2324 = vpop.f32.mrf.mxu0
    %v2325 = vadd.f32 %v2285, %v2324
    %2326 = vdwg.mxu0
    %v2327 = vadd.f32 %v2235, %v2323
    %v2328 = vadd.f32 %v2236, %v2325
    %v2329 = vld [vmem:[%s24 + $0x1b] sm:$0x1]
    %v2330 = vld [vmem:[%s24 + $0x1c] sm:$0x1]
    %v2331 = vsel %vm207, %v2327, 0.0
    %2332 = vadd.xlane.f32.xlu0 %v2331
    %v2333 = vpop.xlane.xlu0 %2332
    %v2334 = vsel %vm207, %v2328, 0.0
    %2335 = vadd.xlane.f32.xlu0 %v2334
    %v2336 = vpop.xlane.xlu0 %2335
    %v2337 = vmul.f32 %v2333, %v226
    %v2338 = vmul.f32 %v2336, %v226
    %v2339 = vsub.f32 %v2327, %v2337
    %v2340 = vsub.f32 %v2328, %v2338
    %v2341 = vmul.f32 %v2339, %v2339
    %v2342 = vmul.f32 %v2340, %v2340
    %v2343 = vsel %vm207, %v2341, 0.0
    %2344 = vadd.xlane.f32.xlu0 %v2343
    %v2345 = vpop.xlane.xlu0 %2344
    %v2346 = vsel %vm207, %v2342, 0.0
    %2347 = vadd.xlane.f32.xlu0 %v2346
    %v2348 = vpop.xlane.xlu0 %2347
    %v2349 = vmul.f32 %v2345, %v226
    %v2350 = vmul.f32 %v2348, %v226
    %v2351 = vadd.f32 %v2349, 1e-05
    %v2352 = vadd.f32 %v2350, 1e-05
    %v2353 = vrsqrt.pop %v2351
    %v2354 = vmul.f32 %v2353, %v2351
    %v2355 = vmul.f32 %v2354, %v2353
    %v2356 = vmul.f32 0.5, %v2355
    %v2357 = vsub.f32 1.5, %v2356
    %v2358 = vmul.f32 %v2353, %v2357
    %vm2359 = vweird.f32 %v2351
    %vm2360 = vweird.f32 %v2353
    %vm2361 = vmor %vm2359, %vm2360
    %v2362 = vsel %vm2361, %v2353, %v2358
    %v2363 = vrsqrt.pop %v2352
    %v2364 = vmul.f32 %v2363, %v2352
    %v2365 = vmul.f32 %v2364, %v2363
    %v2366 = vmul.f32 0.5, %v2365
    %v2367 = vsub.f32 1.5, %v2366
    %v2368 = vmul.f32 %v2363, %v2367
    %vm2369 = vweird.f32 %v2352
    %vm2370 = vweird.f32 %v2363
    %vm2371 = vmor %vm2369, %vm2370
    %v2372 = vsel %vm2371, %v2363, %v2368
    %v2373 = vmul.f32 %v2339, %v2362
    %v2374 = vmul.f32 %v2340, %v2372
    %v2375 = vperm.slane %v2329, 0
    %v2376 = vmul.f32 %v2373, %v2375
    %v2377 = vmul.f32 %v2374, %v2375
    %v2378 = vperm.slane %v2330, 0
    %v2379 = vadd.f32 %v2376, %v2378
    %v2380 = vadd.f32 %v2377, %v2378
    %v2381 = vpack.c.bf16 %v2380, %v2379
    %s2382 = scalar_lea.vmem %s14, 16
    %v2383 = vld [vmem:[%s2382] sm:$0xf]
    %v2384 = vld [vmem:[%s2382 + $0x4] sm:$0xf]
    %v2385 = vld [vmem:[%s2382 + $0x8] sm:$0xf]
    %v2386 = vld [vmem:[%s2382 + $0xc] sm:$0xf]
    %v2387 = vld [vmem:[%s24 + $0x1d] sm:$0x1]
    %v2388 = vperm.slane %v2387, 0
    %v2393 = vunpack.c.l.b16 %v2383
    %v2394 = vunpack.c.l.b16 %v2384
    %v2395 = vunpack.c.l.b16 %v2385
    %v2396 = vunpack.c.l.b16 %v2386
    %v2397 = vpack.c.b16 %v2394, %v2393
    %v2398 = vpack.c.b16 %v2396, %v2395
    %v2402 = vsel %vm207, %v2381, 0
    %2404 = vmatpush.bf16.msra.mxu0 0
    %2405 = vmatpush.bf16.msra.mxu0 0
    %2406 = vmatpush.bf16.msra.mxu0 0
    %2407 = vmatpush.bf16.msra.mxu0 0
    %2408 = vmatpush.bf16.msra.mxu0 0
    %2409 = vmatpush.bf16.msra.mxu0 0
    %2410 = vmatpush.bf16.msra.mxu0 %v2398
    %2411 = vmatpush.bf16.msra.mxu0 %v2397
    %2412 = vmatmul.bf16.gmra.mxu0 %v2402
    %v2413 = vpop.f32.mrf.mxu0
    %v2414 = vadd.f32 %v2388, %v2413
    %v2415 = vpop.f32.mrf.mxu0
    %v2416 = vadd.f32 %v2388, %v2415
    %2417 = vdwg.mxu0
    %s2418 = scalar_lea.vmem %s15, 16
    %v2419 = vld [vmem:[%s2418] sm:$0xf]
    %v2420 = vld [vmem:[%s2418 + $0x4] sm:$0xf]
    %v2421 = vld [vmem:[%s2418 + $0x8] sm:$0xf]
    %v2422 = vld [vmem:[%s2418 + $0xc] sm:$0xf]
    %v2423 = vld [vmem:[%s24 + $0x1e] sm:$0x1]
    %v2424 = vperm.slane %v2423, 0
    %v2429 = vunpack.c.l.b16 %v2419
    %v2430 = vunpack.c.l.b16 %v2420
    %v2431 = vunpack.c.l.b16 %v2421
    %v2432 = vunpack.c.l.b16 %v2422
    %v2433 = vpack.c.b16 %v2430, %v2429
    %v2434 = vpack.c.b16 %v2432, %v2431
    %2437 = vmatpush.bf16.msra.mxu0 0
    %2438 = vmatpush.bf16.msra.mxu0 0
    %2439 = vmatpush.bf16.msra.mxu0 0
    %2440 = vmatpush.bf16.msra.mxu0 0
    %2441 = vmatpush.bf16.msra.mxu0 0
    %2442 = vmatpush.bf16.msra.mxu0 0
    %2443 = vmatpush.bf16.msra.mxu0 %v2434
    %2444 = vmatpush.bf16.msra.mxu0 %v2433
    %2445 = vmatmul.bf16.gmra.mxu0 %v2402
    %v2446 = vpop.f32.mrf.mxu0
    %v2447 = vadd.f32 %v2424, %v2446
    %v2448 = vpop.f32.mrf.mxu0
    %v2449 = vadd.f32 %v2424, %v2448
    %2450 = vdwg.mxu0
    %s2451 = scalar_lea.vmem %s16, 16
    %v2452 = vld [vmem:[%s2451] sm:$0xf]
    %v2453 = vld [vmem:[%s2451 + $0x4] sm:$0xf]
    %v2454 = vld [vmem:[%s2451 + $0x8] sm:$0xf]
    %v2455 = vld [vmem:[%s2451 + $0xc] sm:$0xf]
    %v2456 = vld [vmem:[%s24 + $0x1f] sm:$0x1]
    %v2457 = vperm.slane %v2456, 0
    %v2462 = vunpack.c.l.b16 %v2452
    %v2463 = vunpack.c.l.b16 %v2453
    %v2464 = vunpack.c.l.b16 %v2454
    %v2465 = vunpack.c.l.b16 %v2455
    %v2466 = vpack.c.b16 %v2463, %v2462
    %v2467 = vpack.c.b16 %v2465, %v2464
    %2470 = vmatpush.bf16.msra.mxu0 0
    %2471 = vmatpush.bf16.msra.mxu0 0
    %2472 = vmatpush.bf16.msra.mxu0 0
    %2473 = vmatpush.bf16.msra.mxu0 0
    %2474 = vmatpush.bf16.msra.mxu0 0
    %2475 = vmatpush.bf16.msra.mxu0 0
    %2476 = vmatpush.bf16.msra.mxu0 %v2467
    %2477 = vmatpush.bf16.msra.mxu0 %v2466
    %2478 = vmatmul.bf16.gmra.mxu0 %v2402
    %v2479 = vpop.f32.mrf.mxu0
    %v2480 = vadd.f32 %v2457, %v2479
    %v2481 = vpop.f32.mrf.mxu0
    %v2482 = vadd.f32 %v2457, %v2481
    %2483 = vdwg.mxu0
    %v2484 = vpack.c.bf16 %v2449, %v2447
    %v2485 = vsel %vm1483, %v2414, 0.0
    %v2486 = vsel %vm1483, %v2416, 0.0
    %v2487 = vsel %vm1487, %v2414, 0.0
    %v2488 = vsel %vm1487, %v2416, 0.0
    %v2489 = vsel %vm1491, %v2414, 0.0
    %v2490 = vsel %vm1491, %v2416, 0.0
    %v2491 = vsel %vm1495, %v2414, 0.0
    %v2492 = vsel %vm1495, %v2416, 0.0
    %v2493 = vpack.c.bf16 %v2486, %v2485
    %v2494 = vpack.c.bf16 %v2488, %v2487
    %v2495 = vpack.c.bf16 %v2490, %v2489
    %v2496 = vpack.c.bf16 %v2492, %v2491
    %v2498 = vsel %vm207, %v2493, 0
    %v2501 = vsel %vm207, %v2494, 0
    %v2504 = vsel %vm207, %v2495, 0
    %v2507 = vsel %vm207, %v2496, 0
    %v2510 = vsel %vm207, %v2484, 0
    %2512 = vmatpush.bf16.xpose.msra.mxu0 0
    %2513 = vmatpush.bf16.xpose.msra.mxu0 0
    %2514 = vmatpush.bf16.xpose.msra.mxu0 0
    %2515 = vmatpush.bf16.xpose.msra.mxu0 0
    %2516 = vmatpush.bf16.xpose.msra.mxu0 0
    %2517 = vmatpush.bf16.xpose.msra.mxu0 0
    %2518 = vmatpush.bf16.xpose.msra.mxu0 0
    %2519 = vmatpush.bf16.xpose.msra.mxu0 %v2510
    %2520 = vmatmul.bf16.gmra.mxu0 %v2498
    %v2521 = vpop.f32.mrf.mxu0
    %v2522 = vadd.f32 0.0, %v2521
    %v2523 = vpop.f32.mrf.mxu0
    %v2524 = vadd.f32 0.0, %v2523
    %2525 = vmatmul.bf16.gmra.mxu0 %v2501
    %v2526 = vpop.f32.mrf.mxu0
    %v2527 = vadd.f32 0.0, %v2526
    %v2528 = vpop.f32.mrf.mxu0
    %v2529 = vadd.f32 0.0, %v2528
    %2530 = vmatmul.bf16.gmra.mxu0 %v2504
    %v2531 = vpop.f32.mrf.mxu0
    %v2532 = vadd.f32 0.0, %v2531
    %v2533 = vpop.f32.mrf.mxu0
    %v2534 = vadd.f32 0.0, %v2533
    %2535 = vmatmul.bf16.gmra.mxu0 %v2507
    %v2536 = vpop.f32.mrf.mxu0
    %v2537 = vadd.f32 0.0, %v2536
    %v2538 = vpop.f32.mrf.mxu0
    %v2539 = vadd.f32 0.0, %v2538
    %2540 = vdwg.mxu0
    %v2541 = vmul.f32 %v2522, 0.35355338
    %v2542 = vmul.f32 %v2524, 0.35355338
    %v2543 = vmul.f32 %v2527, 0.35355338
    %v2544 = vmul.f32 %v2529, 0.35355338
    %v2545 = vmul.f32 %v2532, 0.35355338
    %v2546 = vmul.f32 %v2534, 0.35355338
    %v2547 = vmul.f32 %v2537, 0.35355338
    %v2548 = vmul.f32 %v2539, 0.35355338
    %v2549 = vadd.f32 %v2541, %v1377
    %v2550 = vadd.f32 %v2542, %v1378
    %v2551 = vadd.f32 %v2543, %v1377
    %v2552 = vadd.f32 %v2544, %v1378
    %v2553 = vadd.f32 %v2545, %v1377
    %v2554 = vadd.f32 %v2546, %v1378
    %v2555 = vadd.f32 %v2547, %v1377
    %v2556 = vadd.f32 %v2548, %v1378
    %v2557 = vsel %vm1562, %v2549, -inf
    %2558 = vmax.xlane.f32.xlu0 %v2557
    %v2559 = vpop.xlane.xlu0 %2558
    %v2560 = vsel %vm1562, %v2550, -inf
    %2561 = vmax.xlane.f32.xlu0 %v2560
    %v2562 = vpop.xlane.xlu0 %2561
    %v2563 = vsel %vm1562, %v2551, -inf
    %2564 = vmax.xlane.f32.xlu0 %v2563
    %v2565 = vpop.xlane.xlu0 %2564
    %v2566 = vsel %vm1562, %v2552, -inf
    %2567 = vmax.xlane.f32.xlu0 %v2566
    %v2568 = vpop.xlane.xlu0 %2567
    %v2569 = vsel %vm1562, %v2553, -inf
    %2570 = vmax.xlane.f32.xlu0 %v2569
    %v2571 = vpop.xlane.xlu0 %2570
    %v2572 = vsel %vm1562, %v2554, -inf
    %2573 = vmax.xlane.f32.xlu0 %v2572
    %v2574 = vpop.xlane.xlu0 %2573
    %v2575 = vsel %vm1562, %v2555, -inf
    %2576 = vmax.xlane.f32.xlu0 %v2575
    %v2577 = vpop.xlane.xlu0 %2576
    %v2578 = vsel %vm1562, %v2556, -inf
    %2579 = vmax.xlane.f32.xlu0 %v2578
    %v2580 = vpop.xlane.xlu0 %2579
    %v2581 = vsub.f32 %v2549, %v2559
    %v2582 = vsub.f32 %v2550, %v2562
    %v2583 = vsub.f32 %v2551, %v2565
    %v2584 = vsub.f32 %v2552, %v2568
    %v2585 = vsub.f32 %v2553, %v2571
    %v2586 = vsub.f32 %v2554, %v2574
    %v2587 = vsub.f32 %v2555, %v2577
    %v2588 = vsub.f32 %v2556, %v2580
    %v2589 = vmul.f32 %v2581, 1.442695
    %v2590 = vpow.pop %v2589
    %v2591 = vmul.f32 %v2582, 1.442695
    %v2592 = vpow.pop %v2591
    %v2593 = vmul.f32 %v2583, 1.442695
    %v2594 = vpow.pop %v2593
    %v2595 = vmul.f32 %v2584, 1.442695
    %v2596 = vpow.pop %v2595
    %v2597 = vmul.f32 %v2585, 1.442695
    %v2598 = vpow.pop %v2597
    %v2599 = vmul.f32 %v2586, 1.442695
    %v2600 = vpow.pop %v2599
    %v2601 = vmul.f32 %v2587, 1.442695
    %v2602 = vpow.pop %v2601
    %v2603 = vmul.f32 %v2588, 1.442695
    %v2604 = vpow.pop %v2603
    %v2605 = vsel %vm1562, %v2590, 0.0
    %2606 = vadd.xlane.f32.xlu0 %v2605
    %v2607 = vpop.xlane.xlu0 %2606
    %v2608 = vsel %vm1562, %v2592, 0.0
    %2609 = vadd.xlane.f32.xlu0 %v2608
    %v2610 = vpop.xlane.xlu0 %2609
    %v2611 = vsel %vm1562, %v2594, 0.0
    %2612 = vadd.xlane.f32.xlu0 %v2611
    %v2613 = vpop.xlane.xlu0 %2612
    %v2614 = vsel %vm1562, %v2596, 0.0
    %2615 = vadd.xlane.f32.xlu0 %v2614
    %v2616 = vpop.xlane.xlu0 %2615
    %v2617 = vsel %vm1562, %v2598, 0.0
    %2618 = vadd.xlane.f32.xlu0 %v2617
    %v2619 = vpop.xlane.xlu0 %2618
    %v2620 = vsel %vm1562, %v2600, 0.0
    %2621 = vadd.xlane.f32.xlu0 %v2620
    %v2622 = vpop.xlane.xlu0 %2621
    %v2623 = vsel %vm1562, %v2602, 0.0
    %2624 = vadd.xlane.f32.xlu0 %v2623
    %v2625 = vpop.xlane.xlu0 %2624
    %v2626 = vsel %vm1562, %v2604, 0.0
    %2627 = vadd.xlane.f32.xlu0 %v2626
    %v2628 = vpop.xlane.xlu0 %2627
    %v2629 = vrcp.pop %v2607
    %v2630 = vrcp.pop %v2610
    %v2631 = vrcp.pop %v2613
    %v2632 = vrcp.pop %v2616
    %v2633 = vrcp.pop %v2619
    %v2634 = vrcp.pop %v2622
    %v2635 = vrcp.pop %v2625
    %v2636 = vrcp.pop %v2628
    %v2637 = vmul.f32 %v2590, %v2629
    %v2638 = vmul.f32 %v2592, %v2630
    %v2639 = vmul.f32 %v2594, %v2631
    %v2640 = vmul.f32 %v2596, %v2632
    %v2641 = vmul.f32 %v2598, %v2633
    %v2642 = vmul.f32 %v2600, %v2634
    %v2643 = vmul.f32 %v2602, %v2635
    %v2644 = vmul.f32 %v2604, %v2636
    %v2645 = vpack.c.bf16 %v2638, %v2637
    %v2646 = vpack.c.bf16 %v2640, %v2639
    %v2647 = vpack.c.bf16 %v2642, %v2641
    %v2648 = vpack.c.bf16 %v2644, %v2643
    %v2649 = vpack.c.bf16 %v2482, %v2480
    %v2651 = vsel %vm1562, %v2645, 0
    %v2654 = vsel %vm1562, %v2646, 0
    %v2657 = vsel %vm1562, %v2647, 0
    %v2660 = vsel %vm1562, %v2648, 0
    %2662 = vmatpush.bf16.msra.mxu0 0
    %2663 = vmatpush.bf16.msra.mxu0 0
    %2664 = vmatpush.bf16.msra.mxu0 0
    %2665 = vmatpush.bf16.msra.mxu0 0
    %2666 = vmatpush.bf16.msra.mxu0 0
    %2667 = vmatpush.bf16.msra.mxu0 0
    %2668 = vmatpush.bf16.msra.mxu0 0
    %2669 = vmatpush.bf16.msra.mxu0 %v2649
    %2670 = vmatmul.bf16.gmra.mxu0 %v2651
    %v2671 = vpop.f32.mrf.mxu0
    %v2672 = vadd.f32 0.0, %v2671
    %v2673 = vpop.f32.mrf.mxu0
    %v2674 = vadd.f32 0.0, %v2673
    %2675 = vmatmul.bf16.gmra.mxu0 %v2654
    %v2676 = vpop.f32.mrf.mxu0
    %v2677 = vadd.f32 0.0, %v2676
    %v2678 = vpop.f32.mrf.mxu0
    %v2679 = vadd.f32 0.0, %v2678
    %2680 = vmatmul.bf16.gmra.mxu0 %v2657
    %v2681 = vpop.f32.mrf.mxu0
    %v2682 = vadd.f32 0.0, %v2681
    %v2683 = vpop.f32.mrf.mxu0
    %v2684 = vadd.f32 0.0, %v2683
    %2685 = vmatmul.bf16.gmra.mxu0 %v2660
    %v2686 = vpop.f32.mrf.mxu0
    %v2687 = vadd.f32 0.0, %v2686
    %v2688 = vpop.f32.mrf.mxu0
    %v2689 = vadd.f32 0.0, %v2688
    %2690 = vdwg.mxu0
    %v2691 = vsel %vm1483, %v2672, 0.0
    %v2692 = vsel %vm1483, %v2674, 0.0
    %v2693 = vadd.f32 %v2691, 0.0
    %v2694 = vadd.f32 %v2692, 0.0
    %v2695 = vsel %vm1487, %v2677, 0.0
    %v2696 = vsel %vm1487, %v2679, 0.0
    %v2697 = vadd.f32 %v2693, %v2695
    %v2698 = vadd.f32 %v2694, %v2696
    %v2699 = vsel %vm1491, %v2682, 0.0
    %v2700 = vsel %vm1491, %v2684, 0.0
    %v2701 = vadd.f32 %v2697, %v2699
    %v2702 = vadd.f32 %v2698, %v2700
    %v2703 = vsel %vm1495, %v2687, 0.0
    %v2704 = vsel %vm1495, %v2689, 0.0
    %v2705 = vadd.f32 %v2701, %v2703
    %v2706 = vadd.f32 %v2702, %v2704
    %v2707 = vpack.c.bf16 %v2706, %v2705
    %s2708 = scalar_lea.vmem %s17, 16
    %v2709 = vld [vmem:[%s2708] sm:$0xf]
    %v2710 = vld [vmem:[%s2708 + $0x4] sm:$0xf]
    %v2711 = vld [vmem:[%s2708 + $0x8] sm:$0xf]
    %v2712 = vld [vmem:[%s2708 + $0xc] sm:$0xf]
    %v2713 = vld [vmem:[%s24 + $0x20] sm:$0x1]
    %v2714 = vperm.slane %v2713, 0
    %v2719 = vunpack.c.l.b16 %v2709
    %v2720 = vunpack.c.l.b16 %v2710
    %v2721 = vunpack.c.l.b16 %v2711
    %v2722 = vunpack.c.l.b16 %v2712
    %v2723 = vpack.c.b16 %v2720, %v2719
    %v2724 = vpack.c.b16 %v2722, %v2721
    %v2728 = vsel %vm207, %v2707, 0
    %2730 = vmatpush.bf16.msra.mxu0 0
    %2731 = vmatpush.bf16.msra.mxu0 0
    %2732 = vmatpush.bf16.msra.mxu0 0
    %2733 = vmatpush.bf16.msra.mxu0 0
    %2734 = vmatpush.bf16.msra.mxu0 0
    %2735 = vmatpush.bf16.msra.mxu0 0
    %2736 = vmatpush.bf16.msra.mxu0 %v2724
    %2737 = vmatpush.bf16.msra.mxu0 %v2723
    %2738 = vmatmul.bf16.gmra.mxu0 %v2728
    %v2739 = vpop.f32.mrf.mxu0
    %v2740 = vadd.f32 %v2714, %v2739
    %v2741 = vpop.f32.mrf.mxu0
    %v2742 = vadd.f32 %v2714, %v2741
    %2743 = vdwg.mxu0
    %v2744 = vadd.f32 %v2379, %v2740
    %v2745 = vadd.f32 %v2380, %v2742
    %v2746 = vld [vmem:[%s24 + $0x21] sm:$0x1]
    %v2747 = vld [vmem:[%s24 + $0x22] sm:$0x1]
    %v2748 = vsel %vm207, %v2744, 0.0
    %2749 = vadd.xlane.f32.xlu0 %v2748
    %v2750 = vpop.xlane.xlu0 %2749
    %v2751 = vsel %vm207, %v2745, 0.0
    %2752 = vadd.xlane.f32.xlu0 %v2751
    %v2753 = vpop.xlane.xlu0 %2752
    %v2754 = vmul.f32 %v2750, %v226
    %v2755 = vmul.f32 %v2753, %v226
    %v2756 = vsub.f32 %v2744, %v2754
    %v2757 = vsub.f32 %v2745, %v2755
    %v2758 = vmul.f32 %v2756, %v2756
    %v2759 = vmul.f32 %v2757, %v2757
    %v2760 = vsel %vm207, %v2758, 0.0
    %2761 = vadd.xlane.f32.xlu0 %v2760
    %v2762 = vpop.xlane.xlu0 %2761
    %v2763 = vsel %vm207, %v2759, 0.0
    %2764 = vadd.xlane.f32.xlu0 %v2763
    %v2765 = vpop.xlane.xlu0 %2764
    %v2766 = vmul.f32 %v2762, %v226
    %v2767 = vmul.f32 %v2765, %v226
    %v2768 = vadd.f32 %v2766, 1e-05
    %v2769 = vadd.f32 %v2767, 1e-05
    %v2770 = vrsqrt.pop %v2768
    %v2771 = vmul.f32 %v2770, %v2768
    %v2772 = vmul.f32 %v2771, %v2770
    %v2773 = vmul.f32 0.5, %v2772
    %v2774 = vsub.f32 1.5, %v2773
    %v2775 = vmul.f32 %v2770, %v2774
    %vm2776 = vweird.f32 %v2768
    %vm2777 = vweird.f32 %v2770
    %vm2778 = vmor %vm2776, %vm2777
    %v2779 = vsel %vm2778, %v2770, %v2775
    %v2780 = vrsqrt.pop %v2769
    %v2781 = vmul.f32 %v2780, %v2769
    %v2782 = vmul.f32 %v2781, %v2780
    %v2783 = vmul.f32 0.5, %v2782
    %v2784 = vsub.f32 1.5, %v2783
    %v2785 = vmul.f32 %v2780, %v2784
    %vm2786 = vweird.f32 %v2769
    %vm2787 = vweird.f32 %v2780
    %vm2788 = vmor %vm2786, %vm2787
    %v2789 = vsel %vm2788, %v2780, %v2785
    %v2790 = vmul.f32 %v2756, %v2779
    %v2791 = vmul.f32 %v2757, %v2789
    %v2792 = vperm.slane %v2746, 0
    %v2793 = vmul.f32 %v2790, %v2792
    %v2794 = vmul.f32 %v2791, %v2792
    %v2795 = vperm.slane %v2747, 0
    %v2796 = vadd.f32 %v2793, %v2795
    %v2797 = vadd.f32 %v2794, %v2795
    %v2798 = vpack.c.bf16 %v2797, %v2796
    %s2799 = scalar_lea.vmem %s18, 16
    %v2800 = vld [vmem:[%s2799] sm:$0xf]
    %v2801 = vld [vmem:[%s2799 + $0x4] sm:$0xf]
    %v2802 = vld [vmem:[%s2799 + $0x8] sm:$0xf]
    %v2803 = vld [vmem:[%s2799 + $0xc] sm:$0xf]
    %v2804 = vld [vmem:[%s24 + $0x23] sm:$0x1]
    %v2805 = vperm.slane %v2804, 0
    %v2810 = vunpack.c.l.b16 %v2800
    %v2811 = vunpack.c.l.b16 %v2801
    %v2812 = vunpack.c.l.b16 %v2802
    %v2813 = vunpack.c.l.b16 %v2803
    %v2814 = vpack.c.b16 %v2811, %v2810
    %v2815 = vpack.c.b16 %v2813, %v2812
    %v2819 = vsel %vm207, %v2798, 0
    %2821 = vmatpush.bf16.msra.mxu0 0
    %2822 = vmatpush.bf16.msra.mxu0 0
    %2823 = vmatpush.bf16.msra.mxu0 0
    %2824 = vmatpush.bf16.msra.mxu0 0
    %2825 = vmatpush.bf16.msra.mxu0 0
    %2826 = vmatpush.bf16.msra.mxu0 0
    %2827 = vmatpush.bf16.msra.mxu0 %v2815
    %2828 = vmatpush.bf16.msra.mxu0 %v2814
    %2829 = vmatmul.bf16.gmra.mxu0 %v2819
    %v2830 = vpop.f32.mrf.mxu0
    %v2831 = vadd.f32 %v2805, %v2830
    %v2832 = vpop.f32.mrf.mxu0
    %v2833 = vadd.f32 %v2805, %v2832
    %2834 = vdwg.mxu0
    %s2835 = scalar_lea.vmem %s19, 16
    %v2836 = vld [vmem:[%s2835] sm:$0xf]
    %v2837 = vld [vmem:[%s2835 + $0x4] sm:$0xf]
    %v2838 = vld [vmem:[%s2835 + $0x8] sm:$0xf]
    %v2839 = vld [vmem:[%s2835 + $0xc] sm:$0xf]
    %v2840 = vld [vmem:[%s24 + $0x24] sm:$0x1]
    %v2841 = vperm.slane %v2840, 0
    %v2846 = vunpack.c.l.b16 %v2836
    %v2847 = vunpack.c.l.b16 %v2837
    %v2848 = vunpack.c.l.b16 %v2838
    %v2849 = vunpack.c.l.b16 %v2839
    %v2850 = vpack.c.b16 %v2847, %v2846
    %v2851 = vpack.c.b16 %v2849, %v2848
    %2854 = vmatpush.bf16.msra.mxu0 0
    %2855 = vmatpush.bf16.msra.mxu0 0
    %2856 = vmatpush.bf16.msra.mxu0 0
    %2857 = vmatpush.bf16.msra.mxu0 0
    %2858 = vmatpush.bf16.msra.mxu0 0
    %2859 = vmatpush.bf16.msra.mxu0 0
    %2860 = vmatpush.bf16.msra.mxu0 %v2851
    %2861 = vmatpush.bf16.msra.mxu0 %v2850
    %2862 = vmatmul.bf16.gmra.mxu0 %v1858
    %v2863 = vpop.f32.mrf.mxu0
    %v2864 = vadd.f32 %v2841, %v2863
    %v2865 = vpop.f32.mrf.mxu0
    %v2866 = vadd.f32 %v2841, %v2865
    %2867 = vmatmul.bf16.gmra.mxu0 %v1861
    %v2868 = vpop.f32.mrf.mxu0
    %v2869 = vadd.f32 %v2841, %v2868
    %v2870 = vpop.f32.mrf.mxu0
    %v2871 = vadd.f32 %v2841, %v2870
    %2872 = vdwg.mxu0
    %s2873 = scalar_lea.vmem %s20, 16
    %v2874 = vld [vmem:[%s2873] sm:$0xf]
    %v2875 = vld [vmem:[%s2873 + $0x4] sm:$0xf]
    %v2876 = vld [vmem:[%s2873 + $0x8] sm:$0xf]
    %v2877 = vld [vmem:[%s2873 + $0xc] sm:$0xf]
    %v2878 = vld [vmem:[%s24 + $0x25] sm:$0x1]
    %v2879 = vperm.slane %v2878, 0
    %v2884 = vunpack.c.l.b16 %v2874
    %v2885 = vunpack.c.l.b16 %v2875
    %v2886 = vunpack.c.l.b16 %v2876
    %v2887 = vunpack.c.l.b16 %v2877
    %v2888 = vpack.c.b16 %v2885, %v2884
    %v2889 = vpack.c.b16 %v2887, %v2886
    %2892 = vmatpush.bf16.msra.mxu0 0
    %2893 = vmatpush.bf16.msra.mxu0 0
    %2894 = vmatpush.bf16.msra.mxu0 0
    %2895 = vmatpush.bf16.msra.mxu0 0
    %2896 = vmatpush.bf16.msra.mxu0 0
    %2897 = vmatpush.bf16.msra.mxu0 0
    %2898 = vmatpush.bf16.msra.mxu0 %v2889
    %2899 = vmatpush.bf16.msra.mxu0 %v2888
    %2900 = vmatmul.bf16.gmra.mxu0 %v1858
    %v2901 = vpop.f32.mrf.mxu0
    %v2902 = vadd.f32 %v2879, %v2901
    %v2903 = vpop.f32.mrf.mxu0
    %v2904 = vadd.f32 %v2879, %v2903
    %2905 = vmatmul.bf16.gmra.mxu0 %v1861
    %v2906 = vpop.f32.mrf.mxu0
    %v2907 = vadd.f32 %v2879, %v2906
    %v2908 = vpop.f32.mrf.mxu0
    %v2909 = vadd.f32 %v2879, %v2908
    %2910 = vdwg.mxu0
    %v2911 = vpack.c.bf16 %v2866, %v2864
    %v2912 = vpack.c.bf16 %v2871, %v2869
    %v2913 = vsel %vm1483, %v2831, 0.0
    %v2914 = vsel %vm1483, %v2833, 0.0
    %v2915 = vsel %vm1487, %v2831, 0.0
    %v2916 = vsel %vm1487, %v2833, 0.0
    %v2917 = vsel %vm1491, %v2831, 0.0
    %v2918 = vsel %vm1491, %v2833, 0.0
    %v2919 = vsel %vm1495, %v2831, 0.0
    %v2920 = vsel %vm1495, %v2833, 0.0
    %v2921 = vpack.c.bf16 %v2914, %v2913
    %v2922 = vpack.c.bf16 %v2916, %v2915
    %v2923 = vpack.c.bf16 %v2918, %v2917
    %v2924 = vpack.c.bf16 %v2920, %v2919
    %v2926 = vsel %vm207, %v2921, 0
    %v2929 = vsel %vm207, %v2922, 0
    %v2932 = vsel %vm207, %v2923, 0
    %v2935 = vsel %vm207, %v2924, 0
    %v2938 = vsel %vm207, %v2911, 0
    %v2941 = vsel %vm207, %v2912, 0
    %2943 = vmatpush.bf16.xpose.msra.mxu0 0
    %2944 = vmatpush.bf16.xpose.msra.mxu0 0
    %2945 = vmatpush.bf16.xpose.msra.mxu0 0
    %2946 = vmatpush.bf16.xpose.msra.mxu0 0
    %2947 = vmatpush.bf16.xpose.msra.mxu0 0
    %2948 = vmatpush.bf16.xpose.msra.mxu0 0
    %2949 = vmatpush.bf16.xpose.msra.mxu0 %v2941
    %2950 = vmatpush.bf16.xpose.msra.mxu0 %v2938
    %2951 = vmatmul.bf16.gmra.mxu0 %v2926
    %v2952 = vpop.f32.mrf.mxu0
    %v2953 = vadd.f32 0.0, %v2952
    %v2954 = vpop.f32.mrf.mxu0
    %v2955 = vadd.f32 0.0, %v2954
    %2956 = vmatmul.bf16.gmra.mxu0 %v2929
    %v2957 = vpop.f32.mrf.mxu0
    %v2958 = vadd.f32 0.0, %v2957
    %v2959 = vpop.f32.mrf.mxu0
    %v2960 = vadd.f32 0.0, %v2959
    %2961 = vmatmul.bf16.gmra.mxu0 %v2932
    %v2962 = vpop.f32.mrf.mxu0
    %v2963 = vadd.f32 0.0, %v2962
    %v2964 = vpop.f32.mrf.mxu0
    %v2965 = vadd.f32 0.0, %v2964
    %2966 = vmatmul.bf16.gmra.mxu0 %v2935
    %v2967 = vpop.f32.mrf.mxu0
    %v2968 = vadd.f32 0.0, %v2967
    %v2969 = vpop.f32.mrf.mxu0
    %v2970 = vadd.f32 0.0, %v2969
    %2971 = vdwg.mxu0
    %v2972 = vmul.f32 %v2953, 0.35355338
    %v2973 = vmul.f32 %v2955, 0.35355338
    %v2974 = vmul.f32 %v2958, 0.35355338
    %v2975 = vmul.f32 %v2960, 0.35355338
    %v2976 = vmul.f32 %v2963, 0.35355338
    %v2977 = vmul.f32 %v2965, 0.35355338
    %v2978 = vmul.f32 %v2968, 0.35355338
    %v2979 = vmul.f32 %v2970, 0.35355338
    %v2980 = vadd.f32 %v2972, %v1379
    %v2981 = vadd.f32 %v2973, %v1380
    %v2982 = vadd.f32 %v2974, %v1379
    %v2983 = vadd.f32 %v2975, %v1380
    %v2984 = vadd.f32 %v2976, %v1379
    %v2985 = vadd.f32 %v2977, %v1380
    %v2986 = vadd.f32 %v2978, %v1379
    %v2987 = vadd.f32 %v2979, %v1380
    %v2988 = vsel %vm207, %v2980, -inf
    %2989 = vmax.xlane.f32.xlu0 %v2988
    %v2990 = vpop.xlane.xlu0 %2989
    %v2991 = vsel %vm207, %v2981, -inf
    %2992 = vmax.xlane.f32.xlu0 %v2991
    %v2993 = vpop.xlane.xlu0 %2992
    %v2994 = vsel %vm207, %v2982, -inf
    %2995 = vmax.xlane.f32.xlu0 %v2994
    %v2996 = vpop.xlane.xlu0 %2995
    %v2997 = vsel %vm207, %v2983, -inf
    %2998 = vmax.xlane.f32.xlu0 %v2997
    %v2999 = vpop.xlane.xlu0 %2998
    %v3000 = vsel %vm207, %v2984, -inf
    %3001 = vmax.xlane.f32.xlu0 %v3000
    %v3002 = vpop.xlane.xlu0 %3001
    %v3003 = vsel %vm207, %v2985, -inf
    %3004 = vmax.xlane.f32.xlu0 %v3003
    %v3005 = vpop.xlane.xlu0 %3004
    %v3006 = vsel %vm207, %v2986, -inf
    %3007 = vmax.xlane.f32.xlu0 %v3006
    %v3008 = vpop.xlane.xlu0 %3007
    %v3009 = vsel %vm207, %v2987, -inf
    %3010 = vmax.xlane.f32.xlu0 %v3009
    %v3011 = vpop.xlane.xlu0 %3010
    %v3012 = vsub.f32 %v2980, %v2990
    %v3013 = vsub.f32 %v2981, %v2993
    %v3014 = vsub.f32 %v2982, %v2996
    %v3015 = vsub.f32 %v2983, %v2999
    %v3016 = vsub.f32 %v2984, %v3002
    %v3017 = vsub.f32 %v2985, %v3005
    %v3018 = vsub.f32 %v2986, %v3008
    %v3019 = vsub.f32 %v2987, %v3011
    %v3020 = vmul.f32 %v3012, 1.442695
    %v3021 = vpow.pop %v3020
    %v3022 = vmul.f32 %v3013, 1.442695
    %v3023 = vpow.pop %v3022
    %v3024 = vmul.f32 %v3014, 1.442695
    %v3025 = vpow.pop %v3024
    %v3026 = vmul.f32 %v3015, 1.442695
    %v3027 = vpow.pop %v3026
    %v3028 = vmul.f32 %v3016, 1.442695
    %v3029 = vpow.pop %v3028
    %v3030 = vmul.f32 %v3017, 1.442695
    %v3031 = vpow.pop %v3030
    %v3032 = vmul.f32 %v3018, 1.442695
    %v3033 = vpow.pop %v3032
    %v3034 = vmul.f32 %v3019, 1.442695
    %v3035 = vpow.pop %v3034
    %v3036 = vsel %vm207, %v3021, 0.0
    %3037 = vadd.xlane.f32.xlu0 %v3036
    %v3038 = vpop.xlane.xlu0 %3037
    %v3039 = vsel %vm207, %v3023, 0.0
    %3040 = vadd.xlane.f32.xlu0 %v3039
    %v3041 = vpop.xlane.xlu0 %3040
    %v3042 = vsel %vm207, %v3025, 0.0
    %3043 = vadd.xlane.f32.xlu0 %v3042
    %v3044 = vpop.xlane.xlu0 %3043
    %v3045 = vsel %vm207, %v3027, 0.0
    %3046 = vadd.xlane.f32.xlu0 %v3045
    %v3047 = vpop.xlane.xlu0 %3046
    %v3048 = vsel %vm207, %v3029, 0.0
    %3049 = vadd.xlane.f32.xlu0 %v3048
    %v3050 = vpop.xlane.xlu0 %3049
    %v3051 = vsel %vm207, %v3031, 0.0
    %3052 = vadd.xlane.f32.xlu0 %v3051
    %v3053 = vpop.xlane.xlu0 %3052
    %v3054 = vsel %vm207, %v3033, 0.0
    %3055 = vadd.xlane.f32.xlu0 %v3054
    %v3056 = vpop.xlane.xlu0 %3055
    %v3057 = vsel %vm207, %v3035, 0.0
    %3058 = vadd.xlane.f32.xlu0 %v3057
    %v3059 = vpop.xlane.xlu0 %3058
    %v3060 = vrcp.pop %v3038
    %v3061 = vrcp.pop %v3041
    %v3062 = vrcp.pop %v3044
    %v3063 = vrcp.pop %v3047
    %v3064 = vrcp.pop %v3050
    %v3065 = vrcp.pop %v3053
    %v3066 = vrcp.pop %v3056
    %v3067 = vrcp.pop %v3059
    %v3068 = vmul.f32 %v3021, %v3060
    %v3069 = vmul.f32 %v3023, %v3061
    %v3070 = vmul.f32 %v3025, %v3062
    %v3071 = vmul.f32 %v3027, %v3063
    %v3072 = vmul.f32 %v3029, %v3064
    %v3073 = vmul.f32 %v3031, %v3065
    %v3074 = vmul.f32 %v3033, %v3066
    %v3075 = vmul.f32 %v3035, %v3067
    %v3076 = vpack.c.bf16 %v3069, %v3068
    %v3077 = vpack.c.bf16 %v3071, %v3070
    %v3078 = vpack.c.bf16 %v3073, %v3072
    %v3079 = vpack.c.bf16 %v3075, %v3074
    %v3080 = vpack.c.bf16 %v2904, %v2902
    %v3081 = vpack.c.bf16 %v2909, %v2907
    %v3083 = vsel %vm207, %v3076, 0
    %v3086 = vsel %vm207, %v3077, 0
    %v3089 = vsel %vm207, %v3078, 0
    %v3092 = vsel %vm207, %v3079, 0
    %3094 = vmatpush.bf16.msra.mxu0 0
    %3095 = vmatpush.bf16.msra.mxu0 0
    %3096 = vmatpush.bf16.msra.mxu0 0
    %3097 = vmatpush.bf16.msra.mxu0 0
    %3098 = vmatpush.bf16.msra.mxu0 0
    %3099 = vmatpush.bf16.msra.mxu0 0
    %3100 = vmatpush.bf16.msra.mxu0 %v3081
    %3101 = vmatpush.bf16.msra.mxu0 %v3080
    %3102 = vmatmul.bf16.gmra.mxu0 %v3083
    %v3103 = vpop.f32.mrf.mxu0
    %v3104 = vadd.f32 0.0, %v3103
    %v3105 = vpop.f32.mrf.mxu0
    %v3106 = vadd.f32 0.0, %v3105
    %3107 = vmatmul.bf16.gmra.mxu0 %v3086
    %v3108 = vpop.f32.mrf.mxu0
    %v3109 = vadd.f32 0.0, %v3108
    %v3110 = vpop.f32.mrf.mxu0
    %v3111 = vadd.f32 0.0, %v3110
    %3112 = vmatmul.bf16.gmra.mxu0 %v3089
    %v3113 = vpop.f32.mrf.mxu0
    %v3114 = vadd.f32 0.0, %v3113
    %v3115 = vpop.f32.mrf.mxu0
    %v3116 = vadd.f32 0.0, %v3115
    %3117 = vmatmul.bf16.gmra.mxu0 %v3092
    %v3118 = vpop.f32.mrf.mxu0
    %v3119 = vadd.f32 0.0, %v3118
    %v3120 = vpop.f32.mrf.mxu0
    %v3121 = vadd.f32 0.0, %v3120
    %3122 = vdwg.mxu0
    %v3123 = vsel %vm1483, %v3104, 0.0
    %v3124 = vsel %vm1483, %v3106, 0.0
    %v3125 = vadd.f32 %v3123, 0.0
    %v3126 = vadd.f32 %v3124, 0.0
    %v3127 = vsel %vm1487, %v3109, 0.0
    %v3128 = vsel %vm1487, %v3111, 0.0
    %v3129 = vadd.f32 %v3125, %v3127
    %v3130 = vadd.f32 %v3126, %v3128
    %v3131 = vsel %vm1491, %v3114, 0.0
    %v3132 = vsel %vm1491, %v3116, 0.0
    %v3133 = vadd.f32 %v3129, %v3131
    %v3134 = vadd.f32 %v3130, %v3132
    %v3135 = vsel %vm1495, %v3119, 0.0
    %v3136 = vsel %vm1495, %v3121, 0.0
    %v3137 = vadd.f32 %v3133, %v3135
    %v3138 = vadd.f32 %v3134, %v3136
    %v3139 = vpack.c.bf16 %v3138, %v3137
    %s3140 = scalar_lea.vmem %s21, 16
    %v3141 = vld [vmem:[%s3140] sm:$0xf]
    %v3142 = vld [vmem:[%s3140 + $0x4] sm:$0xf]
    %v3143 = vld [vmem:[%s3140 + $0x8] sm:$0xf]
    %v3144 = vld [vmem:[%s3140 + $0xc] sm:$0xf]
    %v3145 = vld [vmem:[%s24 + $0x26] sm:$0x1]
    %v3146 = vperm.slane %v3145, 0
    %v3151 = vunpack.c.l.b16 %v3141
    %v3152 = vunpack.c.l.b16 %v3142
    %v3153 = vunpack.c.l.b16 %v3143
    %v3154 = vunpack.c.l.b16 %v3144
    %v3155 = vpack.c.b16 %v3152, %v3151
    %v3156 = vpack.c.b16 %v3154, %v3153
    %v3160 = vsel %vm207, %v3139, 0
    %3162 = vmatpush.bf16.msra.mxu0 0
    %3163 = vmatpush.bf16.msra.mxu0 0
    %3164 = vmatpush.bf16.msra.mxu0 0
    %3165 = vmatpush.bf16.msra.mxu0 0
    %3166 = vmatpush.bf16.msra.mxu0 0
    %3167 = vmatpush.bf16.msra.mxu0 0
    %3168 = vmatpush.bf16.msra.mxu0 %v3156
    %3169 = vmatpush.bf16.msra.mxu0 %v3155
    %3170 = vmatmul.bf16.gmra.mxu0 %v3160
    %v3171 = vpop.f32.mrf.mxu0
    %v3172 = vadd.f32 %v3146, %v3171
    %v3173 = vpop.f32.mrf.mxu0
    %v3174 = vadd.f32 %v3146, %v3173
    %3175 = vdwg.mxu0
    %v3176 = vadd.f32 %v2796, %v3172
    %v3177 = vadd.f32 %v2797, %v3174
    %v3178 = vld [vmem:[%s24 + $0x27] sm:$0x1]
    %v3179 = vld [vmem:[%s24 + $0x28] sm:$0x1]
    %v3180 = vsel %vm207, %v3176, 0.0
    %3181 = vadd.xlane.f32.xlu0 %v3180
    %v3182 = vpop.xlane.xlu0 %3181
    %v3183 = vsel %vm207, %v3177, 0.0
    %3184 = vadd.xlane.f32.xlu0 %v3183
    %v3185 = vpop.xlane.xlu0 %3184
    %v3186 = vmul.f32 %v3182, %v226
    %v3187 = vmul.f32 %v3185, %v226
    %v3188 = vsub.f32 %v3176, %v3186
    %v3189 = vsub.f32 %v3177, %v3187
    %v3190 = vmul.f32 %v3188, %v3188
    %v3191 = vmul.f32 %v3189, %v3189
    %v3192 = vsel %vm207, %v3190, 0.0
    %3193 = vadd.xlane.f32.xlu0 %v3192
    %v3194 = vpop.xlane.xlu0 %3193
    %v3195 = vsel %vm207, %v3191, 0.0
    %3196 = vadd.xlane.f32.xlu0 %v3195
    %v3197 = vpop.xlane.xlu0 %3196
    %v3198 = vmul.f32 %v3194, %v226
    %v3199 = vmul.f32 %v3197, %v226
    %v3200 = vadd.f32 %v3198, 1e-05
    %v3201 = vadd.f32 %v3199, 1e-05
    %v3202 = vrsqrt.pop %v3200
    %v3203 = vmul.f32 %v3202, %v3200
    %v3204 = vmul.f32 %v3203, %v3202
    %v3205 = vmul.f32 0.5, %v3204
    %v3206 = vsub.f32 1.5, %v3205
    %v3207 = vmul.f32 %v3202, %v3206
    %vm3208 = vweird.f32 %v3200
    %vm3209 = vweird.f32 %v3202
    %vm3210 = vmor %vm3208, %vm3209
    %v3211 = vsel %vm3210, %v3202, %v3207
    %v3212 = vrsqrt.pop %v3201
    %v3213 = vmul.f32 %v3212, %v3201
    %v3214 = vmul.f32 %v3213, %v3212
    %v3215 = vmul.f32 0.5, %v3214
    %v3216 = vsub.f32 1.5, %v3215
    %v3217 = vmul.f32 %v3212, %v3216
    %vm3218 = vweird.f32 %v3201
    %vm3219 = vweird.f32 %v3212
    %vm3220 = vmor %vm3218, %vm3219
    %v3221 = vsel %vm3220, %v3212, %v3217
    %v3222 = vmul.f32 %v3188, %v3211
    %v3223 = vmul.f32 %v3189, %v3221
    %v3224 = vperm.slane %v3178, 0
    %v3225 = vmul.f32 %v3222, %v3224
    %v3226 = vmul.f32 %v3223, %v3224
    %v3227 = vperm.slane %v3179, 0
    %v3228 = vadd.f32 %v3225, %v3227
    %v3229 = vadd.f32 %v3226, %v3227
    %v3230 = vpack.c.bf16 %v3229, %v3228
    %s3231 = scalar_lea.vmem %s22, 16
    %v3232 = vld [vmem:[%s3231] sm:$0xf]
    %v3233 = vld [vmem:[%s3231 + $0x4] sm:$0xf]
    %v3234 = vld [vmem:[%s3231 + $0x8] sm:$0xf]
    %v3235 = vld [vmem:[%s3231 + $0xc] sm:$0xf]
    %v3236 = vld [vmem:[%s25 + $0x3] sm:$0x1]
    %v3237 = vperm.slane %v3236, 0
    %v3242 = vunpack.c.l.b16 %v3232
    %v3243 = vunpack.c.l.b16 %v3233
    %v3244 = vunpack.c.l.b16 %v3234
    %v3245 = vunpack.c.l.b16 %v3235
    %v3246 = vpack.c.b16 %v3243, %v3242
    %v3247 = vpack.c.b16 %v3245, %v3244
    %v3251 = vsel %vm207, %v3230, 0
    %3253 = vmatpush.bf16.msra.mxu0 0
    %3254 = vmatpush.bf16.msra.mxu0 0
    %3255 = vmatpush.bf16.msra.mxu0 0
    %3256 = vmatpush.bf16.msra.mxu0 0
    %3257 = vmatpush.bf16.msra.mxu0 0
    %3258 = vmatpush.bf16.msra.mxu0 0
    %3259 = vmatpush.bf16.msra.mxu0 %v3247
    %3260 = vmatpush.bf16.msra.mxu0 %v3246
    %3261 = vmatmul.bf16.gmra.mxu0 %v3251
    %v3262 = vpop.f32.mrf.mxu0
    %v3263 = vadd.f32 %v3237, %v3262
    %v3264 = vpop.f32.mrf.mxu0
    %v3265 = vadd.f32 %v3237, %v3264
    %3266 = vdwg.mxu0
    %v3267 = vmax.f32 %v3263, 0.0
    %v3268 = vmax.f32 %v3265, 0.0
    %v3269 = vpack.c.bf16 %v3268, %v3267
    %s3270 = scalar_lea.vmem %s23, 32
    %v3271 = vld [vmem:[%s3270] sm:$0xf]
    %v3272 = vld [vmem:[%s3270 + $0x4] sm:$0xf]
    %v3273 = vld [vmem:[%s3270 + $0x8] sm:$0xf]
    %v3274 = vld [vmem:[%s3270 + $0xc] sm:$0xf]
    %v3275 = vld [vmem:[%s3270 + $0x10] sm:$0xf]
    %v3276 = vld [vmem:[%s3270 + $0x14] sm:$0xf]
    %v3277 = vld [vmem:[%s3270 + $0x18] sm:$0xf]
    %v3278 = vld [vmem:[%s3270 + $0x1c] sm:$0xf]
    %v3279 = vld [vmem:[%s24 + $0x29] sm:$0x1]
    %v3280 = vperm.slane %v3279, 0
    %v3289 = vunpack.c.l.b16 %v3271
    %v3290 = vunpack.c.l.b16 %v3272
    %v3291 = vunpack.c.l.b16 %v3273
    %v3292 = vunpack.c.l.b16 %v3274
    %v3293 = vunpack.c.l.b16 %v3275
    %v3294 = vunpack.c.l.b16 %v3276
    %v3295 = vunpack.c.l.b16 %v3277
    %v3296 = vunpack.c.l.b16 %v3278
    %v3297 = vpack.c.b16 %v3290, %v3289
    %v3298 = vpack.c.b16 %v3292, %v3291
    %v3299 = vpack.c.b16 %v3294, %v3293
    %v3300 = vpack.c.b16 %v3296, %v3295
    %v3306 = vsel %vm698, %v3269, 0
    %3308 = vmatpush.bf16.msra.mxu0 0
    %3309 = vmatpush.bf16.msra.mxu0 0
    %3310 = vmatpush.bf16.msra.mxu0 0
    %3311 = vmatpush.bf16.msra.mxu0 0
    %3312 = vmatpush.bf16.msra.mxu0 %v3300
    %3313 = vmatpush.bf16.msra.mxu0 %v3299
    %3314 = vmatpush.bf16.msra.mxu0 %v3298
    %3315 = vmatpush.bf16.msra.mxu0 %v3297
    %3316 = vmatmul.bf16.gmra.mxu0 %v3306
    %v3317 = vpop.f32.mrf.mxu0
    %v3318 = vadd.f32 %v3280, %v3317
    %v3319 = vpop.f32.mrf.mxu0
    %v3320 = vadd.f32 %v3280, %v3319
    %3321 = vdwg.mxu0
    %v3322 = vadd.f32 %v3228, %v3318
    %v3323 = vadd.f32 %v3229, %v3320
    %v3324 = vld [vmem:[%s24 + $0x2a] sm:$0x1]
    %v3325 = vld [vmem:[%s24 + $0x2b] sm:$0x1]
    %v3326 = vsel %vm207, %v3322, 0.0
    %3327 = vadd.xlane.f32.xlu0 %v3326
    %v3328 = vpop.xlane.xlu0 %3327
    %v3329 = vsel %vm207, %v3323, 0.0
    %3330 = vadd.xlane.f32.xlu0 %v3329
    %v3331 = vpop.xlane.xlu0 %3330
    %v3332 = vmul.f32 %v3328, %v226
    %v3333 = vmul.f32 %v3331, %v226
    %v3334 = vsub.f32 %v3322, %v3332
    %v3335 = vsub.f32 %v3323, %v3333
    %v3336 = vmul.f32 %v3334, %v3334
    %v3337 = vmul.f32 %v3335, %v3335
    %v3338 = vsel %vm207, %v3336, 0.0
    %3339 = vadd.xlane.f32.xlu0 %v3338
    %v3340 = vpop.xlane.xlu0 %3339
    %v3341 = vsel %vm207, %v3337, 0.0
    %3342 = vadd.xlane.f32.xlu0 %v3341
    %v3343 = vpop.xlane.xlu0 %3342
    %v3344 = vmul.f32 %v3340, %v226
    %v3345 = vmul.f32 %v3343, %v226
    %v3346 = vadd.f32 %v3344, 1e-05
    %v3347 = vadd.f32 %v3345, 1e-05
    %v3348 = vrsqrt.pop %v3346
    %v3349 = vmul.f32 %v3348, %v3346
    %v3350 = vmul.f32 %v3349, %v3348
    %v3351 = vmul.f32 0.5, %v3350
    %v3352 = vsub.f32 1.5, %v3351
    %v3353 = vmul.f32 %v3348, %v3352
    %vm3354 = vweird.f32 %v3346
    %vm3355 = vweird.f32 %v3348
    %vm3356 = vmor %vm3354, %vm3355
    %v3357 = vsel %vm3356, %v3348, %v3353
    %v3358 = vrsqrt.pop %v3347
    %v3359 = vmul.f32 %v3358, %v3347
    %v3360 = vmul.f32 %v3359, %v3358
    %v3361 = vmul.f32 0.5, %v3360
    %v3362 = vsub.f32 1.5, %v3361
    %v3363 = vmul.f32 %v3358, %v3362
    %vm3364 = vweird.f32 %v3347
    %vm3365 = vweird.f32 %v3358
    %vm3366 = vmor %vm3364, %vm3365
    %v3367 = vsel %vm3366, %v3358, %v3363
    %v3368 = vmul.f32 %v3334, %v3357
    %v3369 = vmul.f32 %v3335, %v3367
    %v3370 = vperm.slane %v3324, 0
    %v3371 = vmul.f32 %v3368, %v3370
    %v3372 = vmul.f32 %v3369, %v3370
    %v3373 = vperm.slane %v3325, 0
    %v3374 = vadd.f32 %v3371, %v3373
    %v3375 = vadd.f32 %v3372, %v3373
    %v3376 = vpack.c.bf16 %v3375, %v3374
    %v3377 = vld [vmem:[%s26] sm:$0xf]
    %v3378 = vld [vmem:[%s26 + $0x4] sm:$0xf]
    %v3379 = vld [vmem:[%s26 + $0x8] sm:$0xf]
    %v3380 = vld [vmem:[%s26 + $0xc] sm:$0xf]
    %v3381 = vld [vmem:[%s27] sm:$0x1]
    %v3383 = vperm.slane %v3381, 0
    %v3389 = vunpack.c.l.b16 %v3377
    %v3390 = vunpack.c.l.b16 %v3378
    %v3391 = vunpack.c.l.b16 %v3379
    %v3392 = vunpack.c.l.b16 %v3380
    %v3393 = vpack.c.b16 %v3390, %v3389
    %v3394 = vpack.c.b16 %v3392, %v3391
    %v3398 = vsel %vm207, %v3376, 0
    %3400 = vmatpush.bf16.msra.mxu0 0
    %3401 = vmatpush.bf16.msra.mxu0 0
    %3402 = vmatpush.bf16.msra.mxu0 0
    %3403 = vmatpush.bf16.msra.mxu0 0
    %3404 = vmatpush.bf16.msra.mxu0 0
    %3405 = vmatpush.bf16.msra.mxu0 0
    %3406 = vmatpush.bf16.msra.mxu0 %v3394
    %3407 = vmatpush.bf16.msra.mxu0 %v3393
    %3408 = vmatmul.bf16.gmra.mxu0 %v3398
    %v3409 = vpop.f32.mrf.mxu0
    %v3410 = vadd.f32 %v3383, %v3409
    %v3411 = vpop.f32.mrf.mxu0
    %v3412 = vadd.f32 %v3383, %v3411
    %3413 = vdwg.mxu0
    %3414 = vst [vmem:[%s28] sm:$0xff] %v3410
    %3415 = vst [vmem:[%s28 + $0x8] sm:$0xff] %v3412
    // Predicated region
    $region118: #{fnet_forward.1} parent=1 // pred_check
      _
    $region119: #{fnet_forward.1} parent=1 // pred_check_branch
      %3417 = sbr.rel (0) target = $region121
    $region120: #{fnet_forward.1} parent=1 // pred_region
      _
    $region121: #{fnet_forward.1} parent=1 // pred_fallthru
      _
    // Predicated region
    $region122: #{fnet_forward.1} parent=1 // pred_check
      _
    $region123: #{fnet_forward.1} parent=1 // pred_check_branch
      %3419 = sbr.rel (0) target = $region125
    $region124: #{fnet_forward.1} parent=1 // pred_region
      _
    $region125: #{fnet_forward.1} parent=1 // pred_fallthru
      _
    %3420 = vsyncpa [#allocation3], 1

</llo_original>
